<compile_context>
chip_gen: v7x
topology: tpu7x:2x2x1
jax: 0.10.0
libtpu: 0.0.40
codegen_flags: <defaults>
</compile_context>

<pallas_src>
import functools
import numpy as np

import jax
import jax.numpy as jnp
from jax import lax
from jax.experimental import pallas as pl
from jax.experimental.pallas import tpu as pltpu

EPS = 1e-5


# ----------------------------------------------------------------------------
# small helpers
# ----------------------------------------------------------------------------
def _hardtanh(x):
    # the module's "ReLU" subclass is Hardtanh(0, 20)
    return jnp.clip(x, 0.0, 20.0)


def _full_spec(arr):
    # whole (small) array resident every grid step: weights / folded biases / masks
    shape = arr.shape
    zeros = (0,) * len(shape)
    return pl.BlockSpec(shape, lambda n, _z=zeros: _z)


def _vmem_limit_bytes():
    # v5e/v6e have 128 MiB physical VMEM, v7x only 64 MiB -> scale the scoped limit.
    try:
        phys = int(pltpu.get_tpu_info().vmem_capacity_bytes)
    except Exception:                  # info unavailable -> conservative (v7x-sized) default
        phys = 64 * 1024 * 1024
    return int(min(phys * 3 // 4, 96 * 1024 * 1024))


def _choose_batch_tile(n, c_in, c_out, width, scale, hw, act_dtype):
    """Images per grid step: big enough to amortize per-step overhead, small enough to fit
    the fused kernel's live set in VMEM, and >= 2 grid steps so v7x megacore stays busy."""
    bpe = jnp.dtype(act_dtype).itemsize
    per_img = hw * (bpe * (c_in + c_out)
                    + 4 * (scale * width        # head activations (f32)
                           + 2 * width          # sp + ds
                           + 3 * width          # one dy-group of im2col taps
                           + scale * width      # branch-output concat
                           + c_out))            # tail accumulator / residual
    budget = 20 * 1024 * 1024                   # conservative; well under v7x 64 MiB
    b = max(1, min(n, budget // max(per_img, 1)))
    while b > 1 and (n + b - 1) // b < 2:       # prefer >= 2 grid steps (2 TensorCores)
        b -= 1
    while n % b:                                # keep every batch tile full (no ragged tail)
        b -= 1
    return b


def bn_fold(bn_params, conv_bias=None):
    """(scale[C,1], bias[C,1]) of the affine a BatchNorm (eval mode) applies after a conv."""
    gamma, beta, mean, var = bn_params
    s = gamma / jnp.sqrt(var + EPS)
    b = beta - mean * s
    if conv_bias is not None:
        b = b + conv_bias * s
    return s[:, None], b[:, None]


def _tap_valid_masks(H, W):
    """[9, 1, HW] masks: tap t=(dy*3+dx) is valid where (h+dy-1, w+dx-1) is inside the image."""
    hh, ww = np.meshgrid(np.arange(H), np.arange(W), indexing="ij")
    masks = []
    for dy in range(3):
        for dx in range(3):
            ok = ((hh + dy - 1 >= 0) & (hh + dy - 1 < H) &
                  (ww + dx - 1 >= 0) & (ww + dx - 1 < W))
            masks.append(ok.reshape(1, H * W))
    return jnp.asarray(np.stack(masks).astype(np.float32))


# ----------------------------------------------------------------------------
# fused kernel: head + (AFF -> 3x3) branch chain + tail for B_TILE images per grid step
# ----------------------------------------------------------------------------
def _fused_block_kernel(*refs, width, scale, H, W, has_sc):
    it = iter(refs)
    xs_ref = next(it)                   # [B, Cin, HW]  (act dtype)
    valid_ref = next(it)                # [9, 1, HW]    f32 border masks
    w1_ref, b1_ref = next(it), next(it)                       # conv1 (BN folded), bias
    w3_refs, b3_refs = [], []
    for _ in range(scale):
        w3_refs.append(next(it))        # [3, width, 3*width]  dy-grouped, BN folded
        b3_refs.append(next(it))        # [width, 1]
    aff_refs = [tuple(next(it) for _ in range(5)) for _ in range(scale - 1)]
    w3c_ref, b3c_ref = next(it), next(it)                     # conv3 (BN folded), bias
    if has_sc:
        wsc_ref, bsc_ref = next(it), next(it)                 # shortcut conv (BN folded)
    o_ref = next(it)                    # [B, Cout, HW]

    hw = H * W
    mxu_dt = w1_ref.dtype               # MXU / storage dtype; epilogues stay f32

    def conv3x3(sp, w3_ref):             # sp: [width, HW] f32
        # stride-1 / pad-1 3x3 conv as roll+mask im2col, split into 3 dy-groups so only
        # ~4x the activation is live at once (v7x VMEM/vreg friendly).
        acc = None
        for dy in range(3):
            taps = []
            for dx in range(3):
                off = (dy - 1) * W + (dx - 1)
                if off == 0:
                    taps.append(sp)                               # center tap: always valid
                else:
                    taps.append(pltpu.roll(sp, shift=(-off) % hw, axis=1)
                                * valid_ref[dy * 3 + dx])
            grp = jnp.concatenate(taps, axis=0).astype(mxu_dt)    # [3*width, HW]
            part = jnp.dot(w3_ref[dy], grp, preferred_element_type=jnp.float32)
            acc = part if acc is None else acc + part
        return acc

    # static loop over the images of this batch tile (amortizes per-grid-step overhead)
    for b in range(xs_ref.shape[0]):
        x = xs_ref[b]                                             # [Cin, HW] act dtype
        # head: conv1 (BN1 scale pre-folded into w1) + bias + Hardtanh(0, 20)
        head = _hardtanh(jnp.dot(w1_ref[...], x, preferred_element_type=jnp.float32)
                         + b1_ref[...])                           # [scale*width, HW] f32

        sp = None
        branch_outs = []
        for i in range(scale):
            ds = head[i * width:(i + 1) * width, :]
            if i == 0:
                sp = ds
            else:
                # AFF: conv1x1(cat(sp, ds)) == wa1x @ sp + wa1d @ ds  (BN + conv bias folded)
                wa1x_ref, wa1d_ref, ba1_ref, wa2_ref, ba2_ref = aff_refs[i - 1]
                h = (jnp.dot(wa1x_ref[...], sp.astype(mxu_dt),
                             preferred_element_type=jnp.float32)
                     + jnp.dot(wa1d_ref[...], ds.astype(mxu_dt),
                               preferred_element_type=jnp.float32)
                     + ba1_ref[...])
                h = h * jax.nn.sigmoid(h)                         # SiLU
                z = jnp.dot(wa2_ref[...], h.astype(mxu_dt),
                            preferred_element_type=jnp.float32) + ba2_ref[...]
                att = 1.0 + jnp.tanh(z)
                sp = sp * att + ds * (2.0 - att)                  # attentional mix
            sp = _hardtanh(conv3x3(sp, w3_refs[i]) + b3_refs[i][...])
            branch_outs.append(sp)

        # tail: ONE matmul with K = scale*width over the concatenated branch outputs,
        # + shortcut (1x1 conv+BN or identity) + residual add + Hardtanh
        cat = jnp.concatenate(branch_outs, axis=0).astype(mxu_dt)  # [scale*width, HW]
        y = jnp.dot(w3c_ref[...], cat, preferred_element_type=jnp.float32) + b3c_ref[...]
        if has_sc:
            r = jnp.dot(wsc_ref[...], x, preferred_element_type=jnp.float32) + bsc_ref[...]
        else:
            r = x.astype(jnp.float32)
        o_ref[b] = _hardtanh(y + r).astype(o_ref.dtype)


# ----------------------------------------------------------------------------
# wrapper: BN folding into weights, batch tiling, one pallas_call for the whole block
# ----------------------------------------------------------------------------
def eres2net_block_forward(x_nchw, p, *, stride=1, width=8, scale=2,
                           act_dtype=jnp.float32, batch_tile=None):
    x = x_nchw.astype(jnp.float32)
    # the 1x1 convs (conv1 / shortcut) carry the block's stride; the 3x3 convs are always
    # kernel=3, stride=1, padding=1 in this module (assumed by the roll/mask im2col).
    xs = x[:, :, ::stride, ::stride]
    N, Cin, H, W = xs.shape
    HW = H * W
    c_out = p["conv3"].shape[0]
    inter = p["aff_w1"][0].shape[0] if scale > 1 else 0
    has_sc = (stride != 1) or (Cin != c_out)

    xs_flat = xs.reshape(N, Cin, HW).astype(act_dtype)     # contiguous NCHW, lane dim = HW
    valid = _tap_valid_masks(H, W)                          # [9, 1, HW] f32

    # ---- fold BN scale INTO the conv weights; only a bias survives into the kernel ----
    s1, b1 = bn_fold(p["bn1"])
    w1f = (p["conv1"] * s1).astype(act_dtype)               # [scale*width, Cin]

    w3f, b3 = [], []
    for i in range(scale):
        s3, b3i = bn_fold(p["bns"][i])
        wm = p["convs"][i].transpose(0, 2, 3, 1).reshape(width, 9 * width) * s3
        # dy-grouped layout: [3, width, 3*width] (group g holds taps dy=g, dx=0..2)
        w3f.append(wm.reshape(width, 3, 3 * width).transpose(1, 0, 2).astype(act_dtype))
        b3.append(b3i)

    aff = []
    for j in range(scale - 1):
        sa1, ba1 = bn_fold(p["aff_bn1"][j], p["aff_b1"][j])
        sa2, ba2 = bn_fold(p["aff_bn2"][j], p["aff_b2"][j])
        wa1 = (p["aff_w1"][j] * sa1).astype(act_dtype)
        wa2 = (p["aff_w2"][j] * sa2).astype(act_dtype)
        aff.append((wa1[:, :width], wa1[:, width:], ba1, wa2, ba2))

    sc3, bc3 = bn_fold(p["bn3"])
    w3cf = (p["conv3"] * sc3).astype(act_dtype)              # [Cout, scale*width]
    if has_sc:
        ssc, bsc = bn_fold(p["bn_sc"])
        wscf = (p["conv_sc"] * ssc).astype(act_dtype)        # [Cout, Cin]

    # ---- argument list / specs ----
    args = [xs_flat, valid, w1f, b1]
    for i in range(scale):
        args += [w3f[i], b3[i]]
    for j in range(scale - 1):
        args += list(aff[j])
    args += [w3cf, bc3]
    if has_sc:
        args += [wscf, bsc]

    if batch_tile is None:
        batch_tile = _choose_batch_tile(N, Cin, c_out, width, scale, HW, act_dtype)
    grid = (N // batch_tile,)

    in_specs = ([pl.BlockSpec((batch_tile, Cin, HW), lambda n: (n, 0, 0))]
                + [_full_spec(a) for a in args[1:]])
    out_specs = pl.BlockSpec((batch_tile, c_out, HW), lambda n: (n, 0, 0))

    # advisory cost estimate (weights / biases / masks included this time)
    matmul_terms = (Cin * scale * width + scale * 9 * width * width
                    + (scale - 1) * (2 * width * inter + inter * width)
                    + scale * width * c_out + (Cin * c_out if has_sc else 0))
    flops = 2 * N * HW * matmul_terms
    trans = N * HW * (scale - 1) * (inter + width)           # sigmoid + tanh
    bytes_acc = (int(xs_flat.size) * xs_flat.dtype.itemsize
                 + N * c_out * HW * jnp.dtype(act_dtype).itemsize
                 + sum(int(a.size) * a.dtype.itemsize for a in args[1:]))

    kernel = functools.partial(_fused_block_kernel, width=width, scale=scale,
                               H=H, W=W, has_sc=has_sc)
    out = pl.pallas_call(
        kernel,
        grid=grid,
        out_shape=jax.ShapeDtypeStruct((N, c_out, HW), act_dtype),
        in_specs=in_specs,
        out_specs=out_specs,
        compiler_params=pltpu.CompilerParams(
            dimension_semantics=("parallel",),                # batch axis -> v7x megacore
            vmem_limit_bytes=_vmem_limit_bytes()),
        cost_estimate=pl.CostEstimate(flops=int(flops), transcendentals=int(trans),
                                      bytes_accessed=int(bytes_acc)),
    )(*args)
    return out.reshape(N, c_out, H, W)                        # already NCHW


# ----------------------------------------------------------------------------
# parameter init + pure-JAX reference (same math, no Pallas) for validation
# ----------------------------------------------------------------------------
def init_params(key, *, in_planes, planes, expansion, width, scale):
    inter = width // 4
    c_out = planes * expansion
    keys = iter(jax.random.split(key, 64))

    def w(shape, fan_in):
        return jax.random.normal(next(keys), shape, jnp.float32) / np.sqrt(fan_in)

    def bn(c):
        g = 0.5 + jax.random.uniform(next(keys), (c,), jnp.float32)
        b = 0.1 * jax.random.normal(next(keys), (c,), jnp.float32)
        m = 0.1 * jax.random.normal(next(keys), (c,), jnp.float32)
        v = 0.5 + jax.random.uniform(next(keys), (c,), jnp.float32)
        return (g, b, m, v)

    p = {}
    p["conv1"] = w((width * scale, in_planes), in_planes)            # [Cout, Cin], bias=False
    p["bn1"] = bn(width * scale)
    p["convs"] = [w((width, width, 3, 3), 9 * width) for _ in range(scale)]   # OIHW
    p["bns"] = [bn(width) for _ in range(scale)]
    # AFF (nn.Conv2d default bias=True for both 1x1 convs)
    p["aff_w1"] = [w((inter, 2 * width), 2 * width) for _ in range(scale - 1)]
    p["aff_b1"] = [0.1 * jax.random.normal(next(keys), (inter,), jnp.float32)
                   for _ in range(scale - 1)]
    p["aff_bn1"] = [bn(inter) for _ in range(scale - 1)]
    p["aff_w2"] = [w((width, inter), inter) for _ in range(scale - 1)]
    p["aff_b2"] = [0.1 * jax.random.normal(next(keys), (width,), jnp.float32)
                   for _ in range(scale - 1)]
    p["aff_bn2"] = [bn(width) for _ in range(scale - 1)]
    p["conv3"] = w((c_out, width * scale), width * scale)            # [Cout, Cin], bias=False
    p["bn3"] = bn(c_out)
    p["conv_sc"] = w((c_out, in_planes), in_planes)                  # shortcut, bias=False
    p["bn_sc"] = bn(c_out)
    return p


def reference_forward(x_nchw, p, *, stride=1, width=8, scale=2):
    x = x_nchw.astype(jnp.float32)

    def bn(y, prm):
        g, b, m, v = (t[None, :, None, None] for t in prm)
        return (y - m) / jnp.sqrt(v + EPS) * g + b

    def c1(y, w, bias=None, stride_=1):
        o = jnp.einsum("nchw,dc->ndhw", y[:, :, ::stride_, ::stride_], w)
        return o if bias is None else o + bias[None, :, None, None]

    def c3(y, w):
        return lax.conv_general_dilated(y, w, (1, 1), "SAME",
                                        dimension_numbers=("NCHW", "OIHW", "NCHW"))

    ht = lambda z: jnp.clip(z, 0.0, 20.0)
    out = ht(bn(c1(x, p["conv1"], stride_=stride), p["bn1"]))
    sps = [out[:, i * width:(i + 1) * width] for i in range(scale)]
    branch_outs = []
    sp = None
    for i in range(scale):
        if i == 0:
            sp = sps[0]
        else:
            xa = jnp.concatenate([sp, sps[i]], axis=1)
            h = bn(c1(xa, p["aff_w1"][i - 1], p["aff_b1"][i - 1]), p["aff_bn1"][i - 1])
            h = h * jax.nn.sigmoid(h)
            z = bn(c1(h, p["aff_w2"][i - 1], p["aff_b2"][i - 1]), p["aff_bn2"][i - 1])
            att = 1.0 + jnp.tanh(z)
            sp = sp * att + sps[i] * (2.0 - att)
        sp = ht(bn(c3(sp, p["convs"][i]), p["bns"][i]))
        branch_outs.append(sp)
    out = bn(c1(jnp.concatenate(branch_outs, axis=1), p["conv3"]), p["bn3"])
    cin, cout = x.shape[1], p["conv3"].shape[0]
    if stride != 1 or cin != cout:
        res = bn(c1(x, p["conv_sc"], stride_=stride), p["bn_sc"])
    else:
        res = x[:, :, ::stride, ::stride]
    return ht(out + res)


if __name__ == "__main__":
    # Config consistent with the module: expansion=2, in_planes=8, planes=8, stride=1,
    # base_width=64 -> width = floor(8*64/64) = 8, scale=2 (AFF inter_channels = 2).
    # N=4 exercises batch tiling (2 images per grid step, 2 grid steps).
    N, in_planes, H, W = 4, 8, 16, 16
    planes, expansion, width, scale_, stride = 8, 2, 8, 2, 1

    key = jax.random.PRNGKey(0)
    kx, kp = jax.random.split(key)
    x = jax.random.normal(kx, (N, in_planes, H, W), jnp.float32)     # PyTorch NCHW input
    params = init_params(kp, in_planes=in_planes, planes=planes,
                         expansion=expansion, width=width, scale=scale_)

    ref = np.asarray(reference_forward(x, params, stride=stride, width=width, scale=scale_))

    # f32 path (tight numerical check)
    fwd_f32 = jax.jit(functools.partial(eres2net_block_forward, stride=stride,
                                        width=width, scale=scale_,
                                        act_dtype=jnp.float32))
    out_f32 = jax.block_until_ready(fwd_f32(x, params))
    assert out_f32.shape == (N, planes * expansion, H, W), out_f32.shape
    np.testing.assert_allclose(np.asarray(out_f32), ref, atol=2e-3, rtol=2e-3)

    # bf16 storage / bf16-MXU path (HBM-traffic + MXU-rate optimization; looser check)
    fwd_bf16 = jax.jit(functools.partial(eres2net_block_forward, stride=stride,
                                         width=width, scale=scale_,
                                         act_dtype=jnp.bfloat16))
    out_bf16 = jax.block_until_ready(fwd_bf16(x, params))
    assert out_bf16.shape == (N, planes * expansion, H, W), out_bf16.shape
    np.testing.assert_allclose(np.asarray(out_bf16.astype(jnp.float32)), ref,
                               atol=2.5e-1, rtol=1e-1)

    print("KERNEL_OK")
</pallas_src>

<mosaic_0001>
module attributes {stable_mosaic.version = 11 : i64} {
  func.func @_fused_block_kernel(%arg0: i32, %arg1: memref<2x8x256xf32, #tpu.memory_space<vmem>>, %arg2: memref<9x1x256xf32, #tpu.memory_space<vmem>>, %arg3: memref<16x8xf32, #tpu.memory_space<vmem>>, %arg4: memref<16x1xf32, #tpu.memory_space<vmem>>, %arg5: memref<3x8x24xf32, #tpu.memory_space<vmem>>, %arg6: memref<8x1xf32, #tpu.memory_space<vmem>>, %arg7: memref<3x8x24xf32, #tpu.memory_space<vmem>>, %arg8: memref<8x1xf32, #tpu.memory_space<vmem>>, %arg9: memref<2x8xf32, #tpu.memory_space<vmem>>, %arg10: memref<2x8xf32, #tpu.memory_space<vmem>>, %arg11: memref<2x1xf32, #tpu.memory_space<vmem>>, %arg12: memref<8x2xf32, #tpu.memory_space<vmem>>, %arg13: memref<8x1xf32, #tpu.memory_space<vmem>>, %arg14: memref<16x16xf32, #tpu.memory_space<vmem>>, %arg15: memref<16x1xf32, #tpu.memory_space<vmem>>, %arg16: memref<16x8xf32, #tpu.memory_space<vmem>>, %arg17: memref<16x1xf32, #tpu.memory_space<vmem>>, %arg18: memref<2x16x256xf32, #tpu.memory_space<vmem>>) attributes {dimension_semantics = [#tpu.dimension_semantics<parallel>], iteration_bounds = array<i64: 2>, scalar_prefetch = 0 : i64, scratch_operands = 0 : i64, tpu.core_type = #tpu.core_type<tc>, window_params = [{transform_indices = @transform_0, window_bounds = array<i64: 2, 8, 256>}, {pipeline_mode = #tpu.pipeline_mode<synchronous>, transform_indices = @transform_1, window_bounds = array<i64: 9, 1, 256>}, {pipeline_mode = #tpu.pipeline_mode<synchronous>, transform_indices = @transform_2, window_bounds = array<i64: 16, 8>}, {pipeline_mode = #tpu.pipeline_mode<synchronous>, transform_indices = @transform_3, window_bounds = array<i64: 16, 1>}, {pipeline_mode = #tpu.pipeline_mode<synchronous>, transform_indices = @transform_4, window_bounds = array<i64: 3, 8, 24>}, {pipeline_mode = #tpu.pipeline_mode<synchronous>, transform_indices = @transform_5, window_bounds = array<i64: 8, 1>}, {pipeline_mode = #tpu.pipeline_mode<synchronous>, transform_indices = @transform_6, window_bounds = array<i64: 3, 8, 24>}, {pipeline_mode = #tpu.pipeline_mode<synchronous>, transform_indices = @transform_7, window_bounds = array<i64: 8, 1>}, {pipeline_mode = #tpu.pipeline_mode<synchronous>, transform_indices = @transform_8, window_bounds = array<i64: 2, 8>}, {pipeline_mode = #tpu.pipeline_mode<synchronous>, transform_indices = @transform_9, window_bounds = array<i64: 2, 8>}, {pipeline_mode = #tpu.pipeline_mode<synchronous>, transform_indices = @transform_10, window_bounds = array<i64: 2, 1>}, {pipeline_mode = #tpu.pipeline_mode<synchronous>, transform_indices = @transform_11, window_bounds = array<i64: 8, 2>}, {pipeline_mode = #tpu.pipeline_mode<synchronous>, transform_indices = @transform_12, window_bounds = array<i64: 8, 1>}, {pipeline_mode = #tpu.pipeline_mode<synchronous>, transform_indices = @transform_13, window_bounds = array<i64: 16, 16>}, {pipeline_mode = #tpu.pipeline_mode<synchronous>, transform_indices = @transform_14, window_bounds = array<i64: 16, 1>}, {pipeline_mode = #tpu.pipeline_mode<synchronous>, transform_indices = @transform_15, window_bounds = array<i64: 16, 8>}, {pipeline_mode = #tpu.pipeline_mode<synchronous>, transform_indices = @transform_16, window_bounds = array<i64: 16, 1>}, {transform_indices = @transform_17, window_bounds = array<i64: 2, 16, 256>}]} {
    %c0 = arith.constant 0 : index
    %c0_0 = arith.constant 0 : index
    %c0_1 = arith.constant 0 : index
    %0 = vector.load %arg1[%c0, %c0_0, %c0_1] : memref<2x8x256xf32, #tpu.memory_space<vmem>>, vector<1x8x256xf32>
    %1 = vector.shape_cast %0 : vector<1x8x256xf32> to vector<8x256xf32>
    %c0_2 = arith.constant 0 : index
    %c0_3 = arith.constant 0 : index
    %2 = vector.load %arg3[%c0_2, %c0_3] : memref<16x8xf32, #tpu.memory_space<vmem>>, vector<16x8xf32>
    %cst = arith.constant dense<0.000000e+00> : vector<16x256xf32>
    %3 = tpu.matmul %2, %1, %cst {dimension_numbers = #tpu.dot_dimension_numbers<[1], [0], [0], [1], [0, 0, 1, 1], [], []>} : vector<16x8xf32>, vector<8x256xf32>, vector<16x256xf32> -> vector<16x256xf32>
    %c0_4 = arith.constant 0 : index
    %c0_5 = arith.constant 0 : index
    %4 = vector.load %arg4[%c0_4, %c0_5] : memref<16x1xf32, #tpu.memory_space<vmem>>, vector<16x1xf32>
    %5 = vector.broadcast %4 : vector<16x1xf32> to vector<16x256xf32>
    %6 = arith.addf %3, %5 : vector<16x256xf32>
    %cst_6 = arith.constant 0.000000e+00 : f32
    %cst_7 = arith.constant 2.000000e+01 : f32
    %7 = vector.broadcast %cst_6 : f32 to vector<16x256xf32>
    %8 = arith.maximumf %7, %6 : vector<16x256xf32>
    %9 = vector.broadcast %cst_7 : f32 to vector<16x256xf32>
    %10 = arith.minimumf %9, %8 : vector<16x256xf32>
    %11 = vector.extract_strided_slice %10 {offsets = [0, 0], sizes = [8, 256], strides = [1, 1]} : vector<16x256xf32> to vector<8x256xf32>
    %c17_i32 = arith.constant 17 : i32
    %12 = tpu.dynamic_rotate %11 by %c17_i32 dim 1 : vector<8x256xf32>, i32 -> vector<8x256xf32>
    %c0_8 = arith.constant 0 : index
    %c0_9 = arith.constant 0 : index
    %c0_10 = arith.constant 0 : index
    %13 = vector.load %arg2[%c0_8, %c0_9, %c0_10] : memref<9x1x256xf32, #tpu.memory_space<vmem>>, vector<1x1x256xf32>
    %14 = vector.shape_cast %13 : vector<1x1x256xf32> to vector<1x256xf32>
    %15 = vector.broadcast %14 : vector<1x256xf32> to vector<8x256xf32>
    %16 = arith.mulf %12, %15 : vector<8x256xf32>
    %c16_i32 = arith.constant 16 : i32
    %17 = tpu.dynamic_rotate %11 by %c16_i32 dim 1 : vector<8x256xf32>, i32 -> vector<8x256xf32>
    %c1 = arith.constant 1 : index
    %c0_11 = arith.constant 0 : index
    %c0_12 = arith.constant 0 : index
    %18 = vector.load %arg2[%c1, %c0_11, %c0_12] : memref<9x1x256xf32, #tpu.memory_space<vmem>>, vector<1x1x256xf32>
    %19 = vector.shape_cast %18 : vector<1x1x256xf32> to vector<1x256xf32>
    %20 = vector.broadcast %19 : vector<1x256xf32> to vector<8x256xf32>
    %21 = arith.mulf %17, %20 : vector<8x256xf32>
    %c15_i32 = arith.constant 15 : i32
    %22 = tpu.dynamic_rotate %11 by %c15_i32 dim 1 : vector<8x256xf32>, i32 -> vector<8x256xf32>
    %c2 = arith.constant 2 : index
    %c0_13 = arith.constant 0 : index
    %c0_14 = arith.constant 0 : index
    %23 = vector.load %arg2[%c2, %c0_13, %c0_14] : memref<9x1x256xf32, #tpu.memory_space<vmem>>, vector<1x1x256xf32>
    %24 = vector.shape_cast %23 : vector<1x1x256xf32> to vector<1x256xf32>
    %25 = vector.broadcast %24 : vector<1x256xf32> to vector<8x256xf32>
    %26 = arith.mulf %22, %25 : vector<8x256xf32>
    %27 = tpu.concatenate %16, %21, %26 in 0 : vector<8x256xf32>, vector<8x256xf32>, vector<8x256xf32> -> vector<24x256xf32>
    %c0_15 = arith.constant 0 : index
    %c0_16 = arith.constant 0 : index
    %c0_17 = arith.constant 0 : index
    %28 = vector.load %arg5[%c0_15, %c0_16, %c0_17] : memref<3x8x24xf32, #tpu.memory_space<vmem>>, vector<1x8x24xf32>
    %29 = vector.shape_cast %28 : vector<1x8x24xf32> to vector<8x24xf32>
    %cst_18 = arith.constant dense<0.000000e+00> : vector<8x256xf32>
    %30 = tpu.matmul %29, %27, %cst_18 {dimension_numbers = #tpu.dot_dimension_numbers<[1], [0], [0], [1], [0, 0, 1, 1], [], []>} : vector<8x24xf32>, vector<24x256xf32>, vector<8x256xf32> -> vector<8x256xf32>
    %c1_i32 = arith.constant 1 : i32
    %31 = tpu.dynamic_rotate %11 by %c1_i32 dim 1 : vector<8x256xf32>, i32 -> vector<8x256xf32>
    %c3 = arith.constant 3 : index
    %c0_19 = arith.constant 0 : index
    %c0_20 = arith.constant 0 : index
    %32 = vector.load %arg2[%c3, %c0_19, %c0_20] : memref<9x1x256xf32, #tpu.memory_space<vmem>>, vector<1x1x256xf32>
    %33 = vector.shape_cast %32 : vector<1x1x256xf32> to vector<1x256xf32>
    %34 = vector.broadcast %33 : vector<1x256xf32> to vector<8x256xf32>
    %35 = arith.mulf %31, %34 : vector<8x256xf32>
    %c255_i32 = arith.constant 255 : i32
    %36 = tpu.dynamic_rotate %11 by %c255_i32 dim 1 : vector<8x256xf32>, i32 -> vector<8x256xf32>
    %c5 = arith.constant 5 : index
    %c0_21 = arith.constant 0 : index
    %c0_22 = arith.constant 0 : index
    %37 = vector.load %arg2[%c5, %c0_21, %c0_22] : memref<9x1x256xf32, #tpu.memory_space<vmem>>, vector<1x1x256xf32>
    %38 = vector.shape_cast %37 : vector<1x1x256xf32> to vector<1x256xf32>
    %39 = vector.broadcast %38 : vector<1x256xf32> to vector<8x256xf32>
    %40 = arith.mulf %36, %39 : vector<8x256xf32>
    %41 = tpu.concatenate %35, %11, %40 in 0 : vector<8x256xf32>, vector<8x256xf32>, vector<8x256xf32> -> vector<24x256xf32>
    %c1_23 = arith.constant 1 : index
    %c0_24 = arith.constant 0 : index
    %c0_25 = arith.constant 0 : index
    %42 = vector.load %arg5[%c1_23, %c0_24, %c0_25] : memref<3x8x24xf32, #tpu.memory_space<vmem>>, vector<1x8x24xf32>
    %43 = vector.shape_cast %42 : vector<1x8x24xf32> to vector<8x24xf32>
    %cst_26 = arith.constant dense<0.000000e+00> : vector<8x256xf32>
    %44 = tpu.matmul %43, %41, %cst_26 {dimension_numbers = #tpu.dot_dimension_numbers<[1], [0], [0], [1], [0, 0, 1, 1], [], []>} : vector<8x24xf32>, vector<24x256xf32>, vector<8x256xf32> -> vector<8x256xf32>
    %45 = arith.addf %30, %44 : vector<8x256xf32>
    %c241_i32 = arith.constant 241 : i32
    %46 = tpu.dynamic_rotate %11 by %c241_i32 dim 1 : vector<8x256xf32>, i32 -> vector<8x256xf32>
    %c6 = arith.constant 6 : index
    %c0_27 = arith.constant 0 : index
    %c0_28 = arith.constant 0 : index
    %47 = vector.load %arg2[%c6, %c0_27, %c0_28] : memref<9x1x256xf32, #tpu.memory_space<vmem>>, vector<1x1x256xf32>
    %48 = vector.shape_cast %47 : vector<1x1x256xf32> to vector<1x256xf32>
    %49 = vector.broadcast %48 : vector<1x256xf32> to vector<8x256xf32>
    %50 = arith.mulf %46, %49 : vector<8x256xf32>
    %c240_i32 = arith.constant 240 : i32
    %51 = tpu.dynamic_rotate %11 by %c240_i32 dim 1 : vector<8x256xf32>, i32 -> vector<8x256xf32>
    %c7 = arith.constant 7 : index
    %c0_29 = arith.constant 0 : index
    %c0_30 = arith.constant 0 : index
    %52 = vector.load %arg2[%c7, %c0_29, %c0_30] : memref<9x1x256xf32, #tpu.memory_space<vmem>>, vector<1x1x256xf32>
    %53 = vector.shape_cast %52 : vector<1x1x256xf32> to vector<1x256xf32>
    %54 = vector.broadcast %53 : vector<1x256xf32> to vector<8x256xf32>
    %55 = arith.mulf %51, %54 : vector<8x256xf32>
    %c239_i32 = arith.constant 239 : i32
    %56 = tpu.dynamic_rotate %11 by %c239_i32 dim 1 : vector<8x256xf32>, i32 -> vector<8x256xf32>
    %c8 = arith.constant 8 : index
    %c0_31 = arith.constant 0 : index
    %c0_32 = arith.constant 0 : index
    %57 = vector.load %arg2[%c8, %c0_31, %c0_32] : memref<9x1x256xf32, #tpu.memory_space<vmem>>, vector<1x1x256xf32>
    %58 = vector.shape_cast %57 : vector<1x1x256xf32> to vector<1x256xf32>
    %59 = vector.broadcast %58 : vector<1x256xf32> to vector<8x256xf32>
    %60 = arith.mulf %56, %59 : vector<8x256xf32>
    %61 = tpu.concatenate %50, %55, %60 in 0 : vector<8x256xf32>, vector<8x256xf32>, vector<8x256xf32> -> vector<24x256xf32>
    %c2_33 = arith.constant 2 : index
    %c0_34 = arith.constant 0 : index
    %c0_35 = arith.constant 0 : index
    %62 = vector.load %arg5[%c2_33, %c0_34, %c0_35] : memref<3x8x24xf32, #tpu.memory_space<vmem>>, vector<1x8x24xf32>
    %63 = vector.shape_cast %62 : vector<1x8x24xf32> to vector<8x24xf32>
    %cst_36 = arith.constant dense<0.000000e+00> : vector<8x256xf32>
    %64 = tpu.matmul %63, %61, %cst_36 {dimension_numbers = #tpu.dot_dimension_numbers<[1], [0], [0], [1], [0, 0, 1, 1], [], []>} : vector<8x24xf32>, vector<24x256xf32>, vector<8x256xf32> -> vector<8x256xf32>
    %65 = arith.addf %45, %64 : vector<8x256xf32>
    %c0_37 = arith.constant 0 : index
    %c0_38 = arith.constant 0 : index
    %66 = vector.load %arg6[%c0_37, %c0_38] : memref<8x1xf32, #tpu.memory_space<vmem>>, vector<8x1xf32>
    %67 = vector.broadcast %66 : vector<8x1xf32> to vector<8x256xf32>
    %68 = arith.addf %65, %67 : vector<8x256xf32>
    %cst_39 = arith.constant 0.000000e+00 : f32
    %cst_40 = arith.constant 2.000000e+01 : f32
    %69 = vector.broadcast %cst_39 : f32 to vector<8x256xf32>
    %70 = arith.maximumf %69, %68 : vector<8x256xf32>
    %71 = vector.broadcast %cst_40 : f32 to vector<8x256xf32>
    %72 = arith.minimumf %71, %70 : vector<8x256xf32>
    %73 = vector.extract_strided_slice %10 {offsets = [8, 0], sizes = [8, 256], strides = [1, 1]} : vector<16x256xf32> to vector<8x256xf32>
    %c0_41 = arith.constant 0 : index
    %c0_42 = arith.constant 0 : index
    %74 = vector.load %arg9[%c0_41, %c0_42] : memref<2x8xf32, #tpu.memory_space<vmem>>, vector<2x8xf32>
    %cst_43 = arith.constant dense<0.000000e+00> : vector<2x256xf32>
    %75 = tpu.matmul %74, %72, %cst_43 {dimension_numbers = #tpu.dot_dimension_numbers<[1], [0], [0], [1], [0, 0, 1, 1], [], []>} : vector<2x8xf32>, vector<8x256xf32>, vector<2x256xf32> -> vector<2x256xf32>
    %c0_44 = arith.constant 0 : index
    %c0_45 = arith.constant 0 : index
    %76 = vector.load %arg10[%c0_44, %c0_45] : memref<2x8xf32, #tpu.memory_space<vmem>>, vector<2x8xf32>
    %cst_46 = arith.constant dense<0.000000e+00> : vector<2x256xf32>
    %77 = tpu.matmul %76, %73, %cst_46 {dimension_numbers = #tpu.dot_dimension_numbers<[1], [0], [0], [1], [0, 0, 1, 1], [], []>} : vector<2x8xf32>, vector<8x256xf32>, vector<2x256xf32> -> vector<2x256xf32>
    %78 = arith.addf %75, %77 : vector<2x256xf32>
    %c0_47 = arith.constant 0 : index
    %c0_48 = arith.constant 0 : index
    %79 = vector.load %arg11[%c0_47, %c0_48] : memref<2x1xf32, #tpu.memory_space<vmem>>, vector<2x1xf32>
    %80 = vector.broadcast %79 : vector<2x1xf32> to vector<2x256xf32>
    %81 = arith.addf %78, %80 : vector<2x256xf32>
    %82 = arith.negf %81 : vector<2x256xf32>
    %83 = math.exp %82 : vector<2x256xf32>
    %cst_49 = arith.constant 1.000000e+00 : f32
    %84 = vector.broadcast %cst_49 : f32 to vector<2x256xf32>
    %85 = arith.addf %84, %83 : vector<2x256xf32>
    %86 = arith.divf %84, %85 : vector<2x256xf32>
    %87 = arith.mulf %81, %86 : vector<2x256xf32>
    %c0_50 = arith.constant 0 : index
    %c0_51 = arith.constant 0 : index
    %88 = vector.load %arg12[%c0_50, %c0_51] : memref<8x2xf32, #tpu.memory_space<vmem>>, vector<8x2xf32>
    %cst_52 = arith.constant dense<0.000000e+00> : vector<8x256xf32>
    %89 = tpu.matmul %88, %87, %cst_52 {dimension_numbers = #tpu.dot_dimension_numbers<[1], [0], [0], [1], [0, 0, 1, 1], [], []>} : vector<8x2xf32>, vector<2x256xf32>, vector<8x256xf32> -> vector<8x256xf32>
    %c0_53 = arith.constant 0 : index
    %c0_54 = arith.constant 0 : index
    %90 = vector.load %arg13[%c0_53, %c0_54] : memref<8x1xf32, #tpu.memory_space<vmem>>, vector<8x1xf32>
    %91 = vector.broadcast %90 : vector<8x1xf32> to vector<8x256xf32>
    %92 = arith.addf %89, %91 : vector<8x256xf32>
    %93 = math.tanh %92 : vector<8x256xf32>
    %cst_55 = arith.constant 1.000000e+00 : f32
    %94 = vector.broadcast %cst_55 : f32 to vector<8x256xf32>
    %95 = arith.addf %94, %93 : vector<8x256xf32>
    %96 = arith.mulf %72, %95 : vector<8x256xf32>
    %cst_56 = arith.constant 2.000000e+00 : f32
    %97 = vector.broadcast %cst_56 : f32 to vector<8x256xf32>
    %98 = arith.subf %97, %95 : vector<8x256xf32>
    %99 = arith.mulf %73, %98 : vector<8x256xf32>
    %100 = arith.addf %96, %99 : vector<8x256xf32>
    %c17_i32_57 = arith.constant 17 : i32
    %101 = tpu.dynamic_rotate %100 by %c17_i32_57 dim 1 : vector<8x256xf32>, i32 -> vector<8x256xf32>
    %c0_58 = arith.constant 0 : index
    %c0_59 = arith.constant 0 : index
    %c0_60 = arith.constant 0 : index
    %102 = vector.load %arg2[%c0_58, %c0_59, %c0_60] : memref<9x1x256xf32, #tpu.memory_space<vmem>>, vector<1x1x256xf32>
    %103 = vector.shape_cast %102 : vector<1x1x256xf32> to vector<1x256xf32>
    %104 = vector.broadcast %103 : vector<1x256xf32> to vector<8x256xf32>
    %105 = arith.mulf %101, %104 : vector<8x256xf32>
    %c16_i32_61 = arith.constant 16 : i32
    %106 = tpu.dynamic_rotate %100 by %c16_i32_61 dim 1 : vector<8x256xf32>, i32 -> vector<8x256xf32>
    %c1_62 = arith.constant 1 : index
    %c0_63 = arith.constant 0 : index
    %c0_64 = arith.constant 0 : index
    %107 = vector.load %arg2[%c1_62, %c0_63, %c0_64] : memref<9x1x256xf32, #tpu.memory_space<vmem>>, vector<1x1x256xf32>
    %108 = vector.shape_cast %107 : vector<1x1x256xf32> to vector<1x256xf32>
    %109 = vector.broadcast %108 : vector<1x256xf32> to vector<8x256xf32>
    %110 = arith.mulf %106, %109 : vector<8x256xf32>
    %c15_i32_65 = arith.constant 15 : i32
    %111 = tpu.dynamic_rotate %100 by %c15_i32_65 dim 1 : vector<8x256xf32>, i32 -> vector<8x256xf32>
    %c2_66 = arith.constant 2 : index
    %c0_67 = arith.constant 0 : index
    %c0_68 = arith.constant 0 : index
    %112 = vector.load %arg2[%c2_66, %c0_67, %c0_68] : memref<9x1x256xf32, #tpu.memory_space<vmem>>, vector<1x1x256xf32>
    %113 = vector.shape_cast %112 : vector<1x1x256xf32> to vector<1x256xf32>
    %114 = vector.broadcast %113 : vector<1x256xf32> to vector<8x256xf32>
    %115 = arith.mulf %111, %114 : vector<8x256xf32>
    %116 = tpu.concatenate %105, %110, %115 in 0 : vector<8x256xf32>, vector<8x256xf32>, vector<8x256xf32> -> vector<24x256xf32>
    %c0_69 = arith.constant 0 : index
    %c0_70 = arith.constant 0 : index
    %c0_71 = arith.constant 0 : index
    %117 = vector.load %arg7[%c0_69, %c0_70, %c0_71] : memref<3x8x24xf32, #tpu.memory_space<vmem>>, vector<1x8x24xf32>
    %118 = vector.shape_cast %117 : vector<1x8x24xf32> to vector<8x24xf32>
    %cst_72 = arith.constant dense<0.000000e+00> : vector<8x256xf32>
    %119 = tpu.matmul %118, %116, %cst_72 {dimension_numbers = #tpu.dot_dimension_numbers<[1], [0], [0], [1], [0, 0, 1, 1], [], []>} : vector<8x24xf32>, vector<24x256xf32>, vector<8x256xf32> -> vector<8x256xf32>
    %c1_i32_73 = arith.constant 1 : i32
    %120 = tpu.dynamic_rotate %100 by %c1_i32_73 dim 1 : vector<8x256xf32>, i32 -> vector<8x256xf32>
    %c3_74 = arith.constant 3 : index
    %c0_75 = arith.constant 0 : index
    %c0_76 = arith.constant 0 : index
    %121 = vector.load %arg2[%c3_74, %c0_75, %c0_76] : memref<9x1x256xf32, #tpu.memory_space<vmem>>, vector<1x1x256xf32>
    %122 = vector.shape_cast %121 : vector<1x1x256xf32> to vector<1x256xf32>
    %123 = vector.broadcast %122 : vector<1x256xf32> to vector<8x256xf32>
    %124 = arith.mulf %120, %123 : vector<8x256xf32>
    %c255_i32_77 = arith.constant 255 : i32
    %125 = tpu.dynamic_rotate %100 by %c255_i32_77 dim 1 : vector<8x256xf32>, i32 -> vector<8x256xf32>
    %c5_78 = arith.constant 5 : index
    %c0_79 = arith.constant 0 : index
    %c0_80 = arith.constant 0 : index
    %126 = vector.load %arg2[%c5_78, %c0_79, %c0_80] : memref<9x1x256xf32, #tpu.memory_space<vmem>>, vector<1x1x256xf32>
    %127 = vector.shape_cast %126 : vector<1x1x256xf32> to vector<1x256xf32>
    %128 = vector.broadcast %127 : vector<1x256xf32> to vector<8x256xf32>
    %129 = arith.mulf %125, %128 : vector<8x256xf32>
    %130 = tpu.concatenate %124, %100, %129 in 0 : vector<8x256xf32>, vector<8x256xf32>, vector<8x256xf32> -> vector<24x256xf32>
    %c1_81 = arith.constant 1 : index
    %c0_82 = arith.constant 0 : index
    %c0_83 = arith.constant 0 : index
    %131 = vector.load %arg7[%c1_81, %c0_82, %c0_83] : memref<3x8x24xf32, #tpu.memory_space<vmem>>, vector<1x8x24xf32>
    %132 = vector.shape_cast %131 : vector<1x8x24xf32> to vector<8x24xf32>
    %cst_84 = arith.constant dense<0.000000e+00> : vector<8x256xf32>
    %133 = tpu.matmul %132, %130, %cst_84 {dimension_numbers = #tpu.dot_dimension_numbers<[1], [0], [0], [1], [0, 0, 1, 1], [], []>} : vector<8x24xf32>, vector<24x256xf32>, vector<8x256xf32> -> vector<8x256xf32>
    %134 = arith.addf %119, %133 : vector<8x256xf32>
    %c241_i32_85 = arith.constant 241 : i32
    %135 = tpu.dynamic_rotate %100 by %c241_i32_85 dim 1 : vector<8x256xf32>, i32 -> vector<8x256xf32>
    %c6_86 = arith.constant 6 : index
    %c0_87 = arith.constant 0 : index
    %c0_88 = arith.constant 0 : index
    %136 = vector.load %arg2[%c6_86, %c0_87, %c0_88] : memref<9x1x256xf32, #tpu.memory_space<vmem>>, vector<1x1x256xf32>
    %137 = vector.shape_cast %136 : vector<1x1x256xf32> to vector<1x256xf32>
    %138 = vector.broadcast %137 : vector<1x256xf32> to vector<8x256xf32>
    %139 = arith.mulf %135, %138 : vector<8x256xf32>
    %c240_i32_89 = arith.constant 240 : i32
    %140 = tpu.dynamic_rotate %100 by %c240_i32_89 dim 1 : vector<8x256xf32>, i32 -> vector<8x256xf32>
    %c7_90 = arith.constant 7 : index
    %c0_91 = arith.constant 0 : index
    %c0_92 = arith.constant 0 : index
    %141 = vector.load %arg2[%c7_90, %c0_91, %c0_92] : memref<9x1x256xf32, #tpu.memory_space<vmem>>, vector<1x1x256xf32>
    %142 = vector.shape_cast %141 : vector<1x1x256xf32> to vector<1x256xf32>
    %143 = vector.broadcast %142 : vector<1x256xf32> to vector<8x256xf32>
    %144 = arith.mulf %140, %143 : vector<8x256xf32>
    %c239_i32_93 = arith.constant 239 : i32
    %145 = tpu.dynamic_rotate %100 by %c239_i32_93 dim 1 : vector<8x256xf32>, i32 -> vector<8x256xf32>
    %c8_94 = arith.constant 8 : index
    %c0_95 = arith.constant 0 : index
    %c0_96 = arith.constant 0 : index
    %146 = vector.load %arg2[%c8_94, %c0_95, %c0_96] : memref<9x1x256xf32, #tpu.memory_space<vmem>>, vector<1x1x256xf32>
    %147 = vector.shape_cast %146 : vector<1x1x256xf32> to vector<1x256xf32>
    %148 = vector.broadcast %147 : vector<1x256xf32> to vector<8x256xf32>
    %149 = arith.mulf %145, %148 : vector<8x256xf32>
    %150 = tpu.concatenate %139, %144, %149 in 0 : vector<8x256xf32>, vector<8x256xf32>, vector<8x256xf32> -> vector<24x256xf32>
    %c2_97 = arith.constant 2 : index
    %c0_98 = arith.constant 0 : index
    %c0_99 = arith.constant 0 : index
    %151 = vector.load %arg7[%c2_97, %c0_98, %c0_99] : memref<3x8x24xf32, #tpu.memory_space<vmem>>, vector<1x8x24xf32>
    %152 = vector.shape_cast %151 : vector<1x8x24xf32> to vector<8x24xf32>
    %cst_100 = arith.constant dense<0.000000e+00> : vector<8x256xf32>
    %153 = tpu.matmul %152, %150, %cst_100 {dimension_numbers = #tpu.dot_dimension_numbers<[1], [0], [0], [1], [0, 0, 1, 1], [], []>} : vector<8x24xf32>, vector<24x256xf32>, vector<8x256xf32> -> vector<8x256xf32>
    %154 = arith.addf %134, %153 : vector<8x256xf32>
    %c0_101 = arith.constant 0 : index
    %c0_102 = arith.constant 0 : index
    %155 = vector.load %arg8[%c0_101, %c0_102] : memref<8x1xf32, #tpu.memory_space<vmem>>, vector<8x1xf32>
    %156 = vector.broadcast %155 : vector<8x1xf32> to vector<8x256xf32>
    %157 = arith.addf %154, %156 : vector<8x256xf32>
    %cst_103 = arith.constant 0.000000e+00 : f32
    %cst_104 = arith.constant 2.000000e+01 : f32
    %158 = vector.broadcast %cst_103 : f32 to vector<8x256xf32>
    %159 = arith.maximumf %158, %157 : vector<8x256xf32>
    %160 = vector.broadcast %cst_104 : f32 to vector<8x256xf32>
    %161 = arith.minimumf %160, %159 : vector<8x256xf32>
    %162 = tpu.concatenate %72, %161 in 0 : vector<8x256xf32>, vector<8x256xf32> -> vector<16x256xf32>
    %c0_105 = arith.constant 0 : index
    %c0_106 = arith.constant 0 : index
    %163 = vector.load %arg14[%c0_105, %c0_106] : memref<16x16xf32, #tpu.memory_space<vmem>>, vector<16x16xf32>
    %cst_107 = arith.constant dense<0.000000e+00> : vector<16x256xf32>
    %164 = tpu.matmul %163, %162, %cst_107 {dimension_numbers = #tpu.dot_dimension_numbers<[1], [0], [0], [1], [0, 0, 1, 1], [], []>} : vector<16x16xf32>, vector<16x256xf32>, vector<16x256xf32> -> vector<16x256xf32>
    %c0_108 = arith.constant 0 : index
    %c0_109 = arith.constant 0 : index
    %165 = vector.load %arg15[%c0_108, %c0_109] : memref<16x1xf32, #tpu.memory_space<vmem>>, vector<16x1xf32>
    %166 = vector.broadcast %165 : vector<16x1xf32> to vector<16x256xf32>
    %167 = arith.addf %164, %166 : vector<16x256xf32>
    %c0_110 = arith.constant 0 : index
    %c0_111 = arith.constant 0 : index
    %168 = vector.load %arg16[%c0_110, %c0_111] : memref<16x8xf32, #tpu.memory_space<vmem>>, vector<16x8xf32>
    %cst_112 = arith.constant dense<0.000000e+00> : vector<16x256xf32>
    %169 = tpu.matmul %168, %1, %cst_112 {dimension_numbers = #tpu.dot_dimension_numbers<[1], [0], [0], [1], [0, 0, 1, 1], [], []>} : vector<16x8xf32>, vector<8x256xf32>, vector<16x256xf32> -> vector<16x256xf32>
    %c0_113 = arith.constant 0 : index
    %c0_114 = arith.constant 0 : index
    %170 = vector.load %arg17[%c0_113, %c0_114] : memref<16x1xf32, #tpu.memory_space<vmem>>, vector<16x1xf32>
    %171 = vector.broadcast %170 : vector<16x1xf32> to vector<16x256xf32>
    %172 = arith.addf %169, %171 : vector<16x256xf32>
    %173 = arith.addf %167, %172 : vector<16x256xf32>
    %cst_115 = arith.constant 0.000000e+00 : f32
    %cst_116 = arith.constant 2.000000e+01 : f32
    %174 = vector.broadcast %cst_115 : f32 to vector<16x256xf32>
    %175 = arith.maximumf %174, %173 : vector<16x256xf32>
    %176 = vector.broadcast %cst_116 : f32 to vector<16x256xf32>
    %177 = arith.minimumf %176, %175 : vector<16x256xf32>
    %c0_117 = arith.constant 0 : index
    %c0_118 = arith.constant 0 : index
    %c0_119 = arith.constant 0 : index
    %178 = vector.load %arg18[%c0_117, %c0_118, %c0_119] : memref<2x16x256xf32, #tpu.memory_space<vmem>>, vector<1x16x256xf32>
    %179 = vector.shape_cast %178 : vector<1x16x256xf32> to vector<16x256xf32>
    %180 = vector.shape_cast %177 : vector<16x256xf32> to vector<1x16x256xf32>
    tpu.vector_store %arg18[%c0_117, %c0_118, %c0_119], %180 {strides = array<i32>} : memref<2x16x256xf32, #tpu.memory_space<vmem>>, vector<1x16x256xf32>,
    %c1_120 = arith.constant 1 : index
    %c0_121 = arith.constant 0 : index
    %c0_122 = arith.constant 0 : index
    %181 = vector.load %arg1[%c1_120, %c0_121, %c0_122] : memref<2x8x256xf32, #tpu.memory_space<vmem>>, vector<1x8x256xf32>
    %182 = vector.shape_cast %181 : vector<1x8x256xf32> to vector<8x256xf32>
    %c0_123 = arith.constant 0 : index
    %c0_124 = arith.constant 0 : index
    %183 = vector.load %arg3[%c0_123, %c0_124] : memref<16x8xf32, #tpu.memory_space<vmem>>, vector<16x8xf32>
    %cst_125 = arith.constant dense<0.000000e+00> : vector<16x256xf32>
    %184 = tpu.matmul %183, %182, %cst_125 {dimension_numbers = #tpu.dot_dimension_numbers<[1], [0], [0], [1], [0, 0, 1, 1], [], []>} : vector<16x8xf32>, vector<8x256xf32>, vector<16x256xf32> -> vector<16x256xf32>
    %c0_126 = arith.constant 0 : index
    %c0_127 = arith.constant 0 : index
    %185 = vector.load %arg4[%c0_126, %c0_127] : memref<16x1xf32, #tpu.memory_space<vmem>>, vector<16x1xf32>
    %186 = vector.broadcast %185 : vector<16x1xf32> to vector<16x256xf32>
    %187 = arith.addf %184, %186 : vector<16x256xf32>
    %cst_128 = arith.constant 0.000000e+00 : f32
    %cst_129 = arith.constant 2.000000e+01 : f32
    %188 = vector.broadcast %cst_128 : f32 to vector<16x256xf32>
    %189 = arith.maximumf %188, %187 : vector<16x256xf32>
    %190 = vector.broadcast %cst_129 : f32 to vector<16x256xf32>
    %191 = arith.minimumf %190, %189 : vector<16x256xf32>
    %192 = vector.extract_strided_slice %191 {offsets = [0, 0], sizes = [8, 256], strides = [1, 1]} : vector<16x256xf32> to vector<8x256xf32>
    %c17_i32_130 = arith.constant 17 : i32
    %193 = tpu.dynamic_rotate %192 by %c17_i32_130 dim 1 : vector<8x256xf32>, i32 -> vector<8x256xf32>
    %c0_131 = arith.constant 0 : index
    %c0_132 = arith.constant 0 : index
    %c0_133 = arith.constant 0 : index
    %194 = vector.load %arg2[%c0_131, %c0_132, %c0_133] : memref<9x1x256xf32, #tpu.memory_space<vmem>>, vector<1x1x256xf32>
    %195 = vector.shape_cast %194 : vector<1x1x256xf32> to vector<1x256xf32>
    %196 = vector.broadcast %195 : vector<1x256xf32> to vector<8x256xf32>
    %197 = arith.mulf %193, %196 : vector<8x256xf32>
    %c16_i32_134 = arith.constant 16 : i32
    %198 = tpu.dynamic_rotate %192 by %c16_i32_134 dim 1 : vector<8x256xf32>, i32 -> vector<8x256xf32>
    %c1_135 = arith.constant 1 : index
    %c0_136 = arith.constant 0 : index
    %c0_137 = arith.constant 0 : index
    %199 = vector.load %arg2[%c1_135, %c0_136, %c0_137] : memref<9x1x256xf32, #tpu.memory_space<vmem>>, vector<1x1x256xf32>
    %200 = vector.shape_cast %199 : vector<1x1x256xf32> to vector<1x256xf32>
    %201 = vector.broadcast %200 : vector<1x256xf32> to vector<8x256xf32>
    %202 = arith.mulf %198, %201 : vector<8x256xf32>
    %c15_i32_138 = arith.constant 15 : i32
    %203 = tpu.dynamic_rotate %192 by %c15_i32_138 dim 1 : vector<8x256xf32>, i32 -> vector<8x256xf32>
    %c2_139 = arith.constant 2 : index
    %c0_140 = arith.constant 0 : index
    %c0_141 = arith.constant 0 : index
    %204 = vector.load %arg2[%c2_139, %c0_140, %c0_141] : memref<9x1x256xf32, #tpu.memory_space<vmem>>, vector<1x1x256xf32>
    %205 = vector.shape_cast %204 : vector<1x1x256xf32> to vector<1x256xf32>
    %206 = vector.broadcast %205 : vector<1x256xf32> to vector<8x256xf32>
    %207 = arith.mulf %203, %206 : vector<8x256xf32>
    %208 = tpu.concatenate %197, %202, %207 in 0 : vector<8x256xf32>, vector<8x256xf32>, vector<8x256xf32> -> vector<24x256xf32>
    %c0_142 = arith.constant 0 : index
    %c0_143 = arith.constant 0 : index
    %c0_144 = arith.constant 0 : index
    %209 = vector.load %arg5[%c0_142, %c0_143, %c0_144] : memref<3x8x24xf32, #tpu.memory_space<vmem>>, vector<1x8x24xf32>
    %210 = vector.shape_cast %209 : vector<1x8x24xf32> to vector<8x24xf32>
    %cst_145 = arith.constant dense<0.000000e+00> : vector<8x256xf32>
    %211 = tpu.matmul %210, %208, %cst_145 {dimension_numbers = #tpu.dot_dimension_numbers<[1], [0], [0], [1], [0, 0, 1, 1], [], []>} : vector<8x24xf32>, vector<24x256xf32>, vector<8x256xf32> -> vector<8x256xf32>
    %c1_i32_146 = arith.constant 1 : i32
    %212 = tpu.dynamic_rotate %192 by %c1_i32_146 dim 1 : vector<8x256xf32>, i32 -> vector<8x256xf32>
    %c3_147 = arith.constant 3 : index
    %c0_148 = arith.constant 0 : index
    %c0_149 = arith.constant 0 : index
    %213 = vector.load %arg2[%c3_147, %c0_148, %c0_149] : memref<9x1x256xf32, #tpu.memory_space<vmem>>, vector<1x1x256xf32>
    %214 = vector.shape_cast %213 : vector<1x1x256xf32> to vector<1x256xf32>
    %215 = vector.broadcast %214 : vector<1x256xf32> to vector<8x256xf32>
    %216 = arith.mulf %212, %215 : vector<8x256xf32>
    %c255_i32_150 = arith.constant 255 : i32
    %217 = tpu.dynamic_rotate %192 by %c255_i32_150 dim 1 : vector<8x256xf32>, i32 -> vector<8x256xf32>
    %c5_151 = arith.constant 5 : index
    %c0_152 = arith.constant 0 : index
    %c0_153 = arith.constant 0 : index
    %218 = vector.load %arg2[%c5_151, %c0_152, %c0_153] : memref<9x1x256xf32, #tpu.memory_space<vmem>>, vector<1x1x256xf32>
    %219 = vector.shape_cast %218 : vector<1x1x256xf32> to vector<1x256xf32>
    %220 = vector.broadcast %219 : vector<1x256xf32> to vector<8x256xf32>
    %221 = arith.mulf %217, %220 : vector<8x256xf32>
    %222 = tpu.concatenate %216, %192, %221 in 0 : vector<8x256xf32>, vector<8x256xf32>, vector<8x256xf32> -> vector<24x256xf32>
    %c1_154 = arith.constant 1 : index
    %c0_155 = arith.constant 0 : index
    %c0_156 = arith.constant 0 : index
    %223 = vector.load %arg5[%c1_154, %c0_155, %c0_156] : memref<3x8x24xf32, #tpu.memory_space<vmem>>, vector<1x8x24xf32>
    %224 = vector.shape_cast %223 : vector<1x8x24xf32> to vector<8x24xf32>
    %cst_157 = arith.constant dense<0.000000e+00> : vector<8x256xf32>
    %225 = tpu.matmul %224, %222, %cst_157 {dimension_numbers = #tpu.dot_dimension_numbers<[1], [0], [0], [1], [0, 0, 1, 1], [], []>} : vector<8x24xf32>, vector<24x256xf32>, vector<8x256xf32> -> vector<8x256xf32>
    %226 = arith.addf %211, %225 : vector<8x256xf32>
    %c241_i32_158 = arith.constant 241 : i32
    %227 = tpu.dynamic_rotate %192 by %c241_i32_158 dim 1 : vector<8x256xf32>, i32 -> vector<8x256xf32>
    %c6_159 = arith.constant 6 : index
    %c0_160 = arith.constant 0 : index
    %c0_161 = arith.constant 0 : index
    %228 = vector.load %arg2[%c6_159, %c0_160, %c0_161] : memref<9x1x256xf32, #tpu.memory_space<vmem>>, vector<1x1x256xf32>
    %229 = vector.shape_cast %228 : vector<1x1x256xf32> to vector<1x256xf32>
    %230 = vector.broadcast %229 : vector<1x256xf32> to vector<8x256xf32>
    %231 = arith.mulf %227, %230 : vector<8x256xf32>
    %c240_i32_162 = arith.constant 240 : i32
    %232 = tpu.dynamic_rotate %192 by %c240_i32_162 dim 1 : vector<8x256xf32>, i32 -> vector<8x256xf32>
    %c7_163 = arith.constant 7 : index
    %c0_164 = arith.constant 0 : index
    %c0_165 = arith.constant 0 : index
    %233 = vector.load %arg2[%c7_163, %c0_164, %c0_165] : memref<9x1x256xf32, #tpu.memory_space<vmem>>, vector<1x1x256xf32>
    %234 = vector.shape_cast %233 : vector<1x1x256xf32> to vector<1x256xf32>
    %235 = vector.broadcast %234 : vector<1x256xf32> to vector<8x256xf32>
    %236 = arith.mulf %232, %235 : vector<8x256xf32>
    %c239_i32_166 = arith.constant 239 : i32
    %237 = tpu.dynamic_rotate %192 by %c239_i32_166 dim 1 : vector<8x256xf32>, i32 -> vector<8x256xf32>
    %c8_167 = arith.constant 8 : index
    %c0_168 = arith.constant 0 : index
    %c0_169 = arith.constant 0 : index
    %238 = vector.load %arg2[%c8_167, %c0_168, %c0_169] : memref<9x1x256xf32, #tpu.memory_space<vmem>>, vector<1x1x256xf32>
    %239 = vector.shape_cast %238 : vector<1x1x256xf32> to vector<1x256xf32>
    %240 = vector.broadcast %239 : vector<1x256xf32> to vector<8x256xf32>
    %241 = arith.mulf %237, %240 : vector<8x256xf32>
    %242 = tpu.concatenate %231, %236, %241 in 0 : vector<8x256xf32>, vector<8x256xf32>, vector<8x256xf32> -> vector<24x256xf32>
    %c2_170 = arith.constant 2 : index
    %c0_171 = arith.constant 0 : index
    %c0_172 = arith.constant 0 : index
    %243 = vector.load %arg5[%c2_170, %c0_171, %c0_172] : memref<3x8x24xf32, #tpu.memory_space<vmem>>, vector<1x8x24xf32>
    %244 = vector.shape_cast %243 : vector<1x8x24xf32> to vector<8x24xf32>
    %cst_173 = arith.constant dense<0.000000e+00> : vector<8x256xf32>
    %245 = tpu.matmul %244, %242, %cst_173 {dimension_numbers = #tpu.dot_dimension_numbers<[1], [0], [0], [1], [0, 0, 1, 1], [], []>} : vector<8x24xf32>, vector<24x256xf32>, vector<8x256xf32> -> vector<8x256xf32>
    %246 = arith.addf %226, %245 : vector<8x256xf32>
    %c0_174 = arith.constant 0 : index
    %c0_175 = arith.constant 0 : index
    %247 = vector.load %arg6[%c0_174, %c0_175] : memref<8x1xf32, #tpu.memory_space<vmem>>, vector<8x1xf32>
    %248 = vector.broadcast %247 : vector<8x1xf32> to vector<8x256xf32>
    %249 = arith.addf %246, %248 : vector<8x256xf32>
    %cst_176 = arith.constant 0.000000e+00 : f32
    %cst_177 = arith.constant 2.000000e+01 : f32
    %250 = vector.broadcast %cst_176 : f32 to vector<8x256xf32>
    %251 = arith.maximumf %250, %249 : vector<8x256xf32>
    %252 = vector.broadcast %cst_177 : f32 to vector<8x256xf32>
    %253 = arith.minimumf %252, %251 : vector<8x256xf32>
    %254 = vector.extract_strided_slice %191 {offsets = [8, 0], sizes = [8, 256], strides = [1, 1]} : vector<16x256xf32> to vector<8x256xf32>
    %c0_178 = arith.constant 0 : index
    %c0_179 = arith.constant 0 : index
    %255 = vector.load %arg9[%c0_178, %c0_179] : memref<2x8xf32, #tpu.memory_space<vmem>>, vector<2x8xf32>
    %cst_180 = arith.constant dense<0.000000e+00> : vector<2x256xf32>
    %256 = tpu.matmul %255, %253, %cst_180 {dimension_numbers = #tpu.dot_dimension_numbers<[1], [0], [0], [1], [0, 0, 1, 1], [], []>} : vector<2x8xf32>, vector<8x256xf32>, vector<2x256xf32> -> vector<2x256xf32>
    %c0_181 = arith.constant 0 : index
    %c0_182 = arith.constant 0 : index
    %257 = vector.load %arg10[%c0_181, %c0_182] : memref<2x8xf32, #tpu.memory_space<vmem>>, vector<2x8xf32>
    %cst_183 = arith.constant dense<0.000000e+00> : vector<2x256xf32>
    %258 = tpu.matmul %257, %254, %cst_183 {dimension_numbers = #tpu.dot_dimension_numbers<[1], [0], [0], [1], [0, 0, 1, 1], [], []>} : vector<2x8xf32>, vector<8x256xf32>, vector<2x256xf32> -> vector<2x256xf32>
    %259 = arith.addf %256, %258 : vector<2x256xf32>
    %c0_184 = arith.constant 0 : index
    %c0_185 = arith.constant 0 : index
    %260 = vector.load %arg11[%c0_184, %c0_185] : memref<2x1xf32, #tpu.memory_space<vmem>>, vector<2x1xf32>
    %261 = vector.broadcast %260 : vector<2x1xf32> to vector<2x256xf32>
    %262 = arith.addf %259, %261 : vector<2x256xf32>
    %263 = arith.negf %262 : vector<2x256xf32>
    %264 = math.exp %263 : vector<2x256xf32>
    %cst_186 = arith.constant 1.000000e+00 : f32
    %265 = vector.broadcast %cst_186 : f32 to vector<2x256xf32>
    %266 = arith.addf %265, %264 : vector<2x256xf32>
    %267 = arith.divf %265, %266 : vector<2x256xf32>
    %268 = arith.mulf %262, %267 : vector<2x256xf32>
    %c0_187 = arith.constant 0 : index
    %c0_188 = arith.constant 0 : index
    %269 = vector.load %arg12[%c0_187, %c0_188] : memref<8x2xf32, #tpu.memory_space<vmem>>, vector<8x2xf32>
    %cst_189 = arith.constant dense<0.000000e+00> : vector<8x256xf32>
    %270 = tpu.matmul %269, %268, %cst_189 {dimension_numbers = #tpu.dot_dimension_numbers<[1], [0], [0], [1], [0, 0, 1, 1], [], []>} : vector<8x2xf32>, vector<2x256xf32>, vector<8x256xf32> -> vector<8x256xf32>
    %c0_190 = arith.constant 0 : index
    %c0_191 = arith.constant 0 : index
    %271 = vector.load %arg13[%c0_190, %c0_191] : memref<8x1xf32, #tpu.memory_space<vmem>>, vector<8x1xf32>
    %272 = vector.broadcast %271 : vector<8x1xf32> to vector<8x256xf32>
    %273 = arith.addf %270, %272 : vector<8x256xf32>
    %274 = math.tanh %273 : vector<8x256xf32>
    %cst_192 = arith.constant 1.000000e+00 : f32
    %275 = vector.broadcast %cst_192 : f32 to vector<8x256xf32>
    %276 = arith.addf %275, %274 : vector<8x256xf32>
    %277 = arith.mulf %253, %276 : vector<8x256xf32>
    %cst_193 = arith.constant 2.000000e+00 : f32
    %278 = vector.broadcast %cst_193 : f32 to vector<8x256xf32>
    %279 = arith.subf %278, %276 : vector<8x256xf32>
    %280 = arith.mulf %254, %279 : vector<8x256xf32>
    %281 = arith.addf %277, %280 : vector<8x256xf32>
    %c17_i32_194 = arith.constant 17 : i32
    %282 = tpu.dynamic_rotate %281 by %c17_i32_194 dim 1 : vector<8x256xf32>, i32 -> vector<8x256xf32>
    %c0_195 = arith.constant 0 : index
    %c0_196 = arith.constant 0 : index
    %c0_197 = arith.constant 0 : index
    %283 = vector.load %arg2[%c0_195, %c0_196, %c0_197] : memref<9x1x256xf32, #tpu.memory_space<vmem>>, vector<1x1x256xf32>
    %284 = vector.shape_cast %283 : vector<1x1x256xf32> to vector<1x256xf32>
    %285 = vector.broadcast %284 : vector<1x256xf32> to vector<8x256xf32>
    %286 = arith.mulf %282, %285 : vector<8x256xf32>
    %c16_i32_198 = arith.constant 16 : i32
    %287 = tpu.dynamic_rotate %281 by %c16_i32_198 dim 1 : vector<8x256xf32>, i32 -> vector<8x256xf32>
    %c1_199 = arith.constant 1 : index
    %c0_200 = arith.constant 0 : index
    %c0_201 = arith.constant 0 : index
    %288 = vector.load %arg2[%c1_199, %c0_200, %c0_201] : memref<9x1x256xf32, #tpu.memory_space<vmem>>, vector<1x1x256xf32>
    %289 = vector.shape_cast %288 : vector<1x1x256xf32> to vector<1x256xf32>
    %290 = vector.broadcast %289 : vector<1x256xf32> to vector<8x256xf32>
    %291 = arith.mulf %287, %290 : vector<8x256xf32>
    %c15_i32_202 = arith.constant 15 : i32
    %292 = tpu.dynamic_rotate %281 by %c15_i32_202 dim 1 : vector<8x256xf32>, i32 -> vector<8x256xf32>
    %c2_203 = arith.constant 2 : index
    %c0_204 = arith.constant 0 : index
    %c0_205 = arith.constant 0 : index
    %293 = vector.load %arg2[%c2_203, %c0_204, %c0_205] : memref<9x1x256xf32, #tpu.memory_space<vmem>>, vector<1x1x256xf32>
    %294 = vector.shape_cast %293 : vector<1x1x256xf32> to vector<1x256xf32>
    %295 = vector.broadcast %294 : vector<1x256xf32> to vector<8x256xf32>
    %296 = arith.mulf %292, %295 : vector<8x256xf32>
    %297 = tpu.concatenate %286, %291, %296 in 0 : vector<8x256xf32>, vector<8x256xf32>, vector<8x256xf32> -> vector<24x256xf32>
    %c0_206 = arith.constant 0 : index
    %c0_207 = arith.constant 0 : index
    %c0_208 = arith.constant 0 : index
    %298 = vector.load %arg7[%c0_206, %c0_207, %c0_208] : memref<3x8x24xf32, #tpu.memory_space<vmem>>, vector<1x8x24xf32>
    %299 = vector.shape_cast %298 : vector<1x8x24xf32> to vector<8x24xf32>
    %cst_209 = arith.constant dense<0.000000e+00> : vector<8x256xf32>
    %300 = tpu.matmul %299, %297, %cst_209 {dimension_numbers = #tpu.dot_dimension_numbers<[1], [0], [0], [1], [0, 0, 1, 1], [], []>} : vector<8x24xf32>, vector<24x256xf32>, vector<8x256xf32> -> vector<8x256xf32>
    %c1_i32_210 = arith.constant 1 : i32
    %301 = tpu.dynamic_rotate %281 by %c1_i32_210 dim 1 : vector<8x256xf32>, i32 -> vector<8x256xf32>
    %c3_211 = arith.constant 3 : index
    %c0_212 = arith.constant 0 : index
    %c0_213 = arith.constant 0 : index
    %302 = vector.load %arg2[%c3_211, %c0_212, %c0_213] : memref<9x1x256xf32, #tpu.memory_space<vmem>>, vector<1x1x256xf32>
    %303 = vector.shape_cast %302 : vector<1x1x256xf32> to vector<1x256xf32>
    %304 = vector.broadcast %303 : vector<1x256xf32> to vector<8x256xf32>
    %305 = arith.mulf %301, %304 : vector<8x256xf32>
    %c255_i32_214 = arith.constant 255 : i32
    %306 = tpu.dynamic_rotate %281 by %c255_i32_214 dim 1 : vector<8x256xf32>, i32 -> vector<8x256xf32>
    %c5_215 = arith.constant 5 : index
    %c0_216 = arith.constant 0 : index
    %c0_217 = arith.constant 0 : index
    %307 = vector.load %arg2[%c5_215, %c0_216, %c0_217] : memref<9x1x256xf32, #tpu.memory_space<vmem>>, vector<1x1x256xf32>
    %308 = vector.shape_cast %307 : vector<1x1x256xf32> to vector<1x256xf32>
    %309 = vector.broadcast %308 : vector<1x256xf32> to vector<8x256xf32>
    %310 = arith.mulf %306, %309 : vector<8x256xf32>
    %311 = tpu.concatenate %305, %281, %310 in 0 : vector<8x256xf32>, vector<8x256xf32>, vector<8x256xf32> -> vector<24x256xf32>
    %c1_218 = arith.constant 1 : index
    %c0_219 = arith.constant 0 : index
    %c0_220 = arith.constant 0 : index
    %312 = vector.load %arg7[%c1_218, %c0_219, %c0_220] : memref<3x8x24xf32, #tpu.memory_space<vmem>>, vector<1x8x24xf32>
    %313 = vector.shape_cast %312 : vector<1x8x24xf32> to vector<8x24xf32>
    %cst_221 = arith.constant dense<0.000000e+00> : vector<8x256xf32>
    %314 = tpu.matmul %313, %311, %cst_221 {dimension_numbers = #tpu.dot_dimension_numbers<[1], [0], [0], [1], [0, 0, 1, 1], [], []>} : vector<8x24xf32>, vector<24x256xf32>, vector<8x256xf32> -> vector<8x256xf32>
    %315 = arith.addf %300, %314 : vector<8x256xf32>
    %c241_i32_222 = arith.constant 241 : i32
    %316 = tpu.dynamic_rotate %281 by %c241_i32_222 dim 1 : vector<8x256xf32>, i32 -> vector<8x256xf32>
    %c6_223 = arith.constant 6 : index
    %c0_224 = arith.constant 0 : index
    %c0_225 = arith.constant 0 : index
    %317 = vector.load %arg2[%c6_223, %c0_224, %c0_225] : memref<9x1x256xf32, #tpu.memory_space<vmem>>, vector<1x1x256xf32>
    %318 = vector.shape_cast %317 : vector<1x1x256xf32> to vector<1x256xf32>
    %319 = vector.broadcast %318 : vector<1x256xf32> to vector<8x256xf32>
    %320 = arith.mulf %316, %319 : vector<8x256xf32>
    %c240_i32_226 = arith.constant 240 : i32
    %321 = tpu.dynamic_rotate %281 by %c240_i32_226 dim 1 : vector<8x256xf32>, i32 -> vector<8x256xf32>
    %c7_227 = arith.constant 7 : index
    %c0_228 = arith.constant 0 : index
    %c0_229 = arith.constant 0 : index
    %322 = vector.load %arg2[%c7_227, %c0_228, %c0_229] : memref<9x1x256xf32, #tpu.memory_space<vmem>>, vector<1x1x256xf32>
    %323 = vector.shape_cast %322 : vector<1x1x256xf32> to vector<1x256xf32>
    %324 = vector.broadcast %323 : vector<1x256xf32> to vector<8x256xf32>
    %325 = arith.mulf %321, %324 : vector<8x256xf32>
    %c239_i32_230 = arith.constant 239 : i32
    %326 = tpu.dynamic_rotate %281 by %c239_i32_230 dim 1 : vector<8x256xf32>, i32 -> vector<8x256xf32>
    %c8_231 = arith.constant 8 : index
    %c0_232 = arith.constant 0 : index
    %c0_233 = arith.constant 0 : index
    %327 = vector.load %arg2[%c8_231, %c0_232, %c0_233] : memref<9x1x256xf32, #tpu.memory_space<vmem>>, vector<1x1x256xf32>
    %328 = vector.shape_cast %327 : vector<1x1x256xf32> to vector<1x256xf32>
    %329 = vector.broadcast %328 : vector<1x256xf32> to vector<8x256xf32>
    %330 = arith.mulf %326, %329 : vector<8x256xf32>
    %331 = tpu.concatenate %320, %325, %330 in 0 : vector<8x256xf32>, vector<8x256xf32>, vector<8x256xf32> -> vector<24x256xf32>
    %c2_234 = arith.constant 2 : index
    %c0_235 = arith.constant 0 : index
    %c0_236 = arith.constant 0 : index
    %332 = vector.load %arg7[%c2_234, %c0_235, %c0_236] : memref<3x8x24xf32, #tpu.memory_space<vmem>>, vector<1x8x24xf32>
    %333 = vector.shape_cast %332 : vector<1x8x24xf32> to vector<8x24xf32>
    %cst_237 = arith.constant dense<0.000000e+00> : vector<8x256xf32>
    %334 = tpu.matmul %333, %331, %cst_237 {dimension_numbers = #tpu.dot_dimension_numbers<[1], [0], [0], [1], [0, 0, 1, 1], [], []>} : vector<8x24xf32>, vector<24x256xf32>, vector<8x256xf32> -> vector<8x256xf32>
    %335 = arith.addf %315, %334 : vector<8x256xf32>
    %c0_238 = arith.constant 0 : index
    %c0_239 = arith.constant 0 : index
    %336 = vector.load %arg8[%c0_238, %c0_239] : memref<8x1xf32, #tpu.memory_space<vmem>>, vector<8x1xf32>
    %337 = vector.broadcast %336 : vector<8x1xf32> to vector<8x256xf32>
    %338 = arith.addf %335, %337 : vector<8x256xf32>
    %cst_240 = arith.constant 0.000000e+00 : f32
    %cst_241 = arith.constant 2.000000e+01 : f32
    %339 = vector.broadcast %cst_240 : f32 to vector<8x256xf32>
    %340 = arith.maximumf %339, %338 : vector<8x256xf32>
    %341 = vector.broadcast %cst_241 : f32 to vector<8x256xf32>
    %342 = arith.minimumf %341, %340 : vector<8x256xf32>
    %343 = tpu.concatenate %253, %342 in 0 : vector<8x256xf32>, vector<8x256xf32> -> vector<16x256xf32>
    %c0_242 = arith.constant 0 : index
    %c0_243 = arith.constant 0 : index
    %344 = vector.load %arg14[%c0_242, %c0_243] : memref<16x16xf32, #tpu.memory_space<vmem>>, vector<16x16xf32>
    %cst_244 = arith.constant dense<0.000000e+00> : vector<16x256xf32>
    %345 = tpu.matmul %344, %343, %cst_244 {dimension_numbers = #tpu.dot_dimension_numbers<[1], [0], [0], [1], [0, 0, 1, 1], [], []>} : vector<16x16xf32>, vector<16x256xf32>, vector<16x256xf32> -> vector<16x256xf32>
    %c0_245 = arith.constant 0 : index
    %c0_246 = arith.constant 0 : index
    %346 = vector.load %arg15[%c0_245, %c0_246] : memref<16x1xf32, #tpu.memory_space<vmem>>, vector<16x1xf32>
    %347 = vector.broadcast %346 : vector<16x1xf32> to vector<16x256xf32>
    %348 = arith.addf %345, %347 : vector<16x256xf32>
    %c0_247 = arith.constant 0 : index
    %c0_248 = arith.constant 0 : index
    %349 = vector.load %arg16[%c0_247, %c0_248] : memref<16x8xf32, #tpu.memory_space<vmem>>, vector<16x8xf32>
    %cst_249 = arith.constant dense<0.000000e+00> : vector<16x256xf32>
    %350 = tpu.matmul %349, %182, %cst_249 {dimension_numbers = #tpu.dot_dimension_numbers<[1], [0], [0], [1], [0, 0, 1, 1], [], []>} : vector<16x8xf32>, vector<8x256xf32>, vector<16x256xf32> -> vector<16x256xf32>
    %c0_250 = arith.constant 0 : index
    %c0_251 = arith.constant 0 : index
    %351 = vector.load %arg17[%c0_250, %c0_251] : memref<16x1xf32, #tpu.memory_space<vmem>>, vector<16x1xf32>
    %352 = vector.broadcast %351 : vector<16x1xf32> to vector<16x256xf32>
    %353 = arith.addf %350, %352 : vector<16x256xf32>
    %354 = arith.addf %348, %353 : vector<16x256xf32>
    %cst_252 = arith.constant 0.000000e+00 : f32
    %cst_253 = arith.constant 2.000000e+01 : f32
    %355 = vector.broadcast %cst_252 : f32 to vector<16x256xf32>
    %356 = arith.maximumf %355, %354 : vector<16x256xf32>
    %357 = vector.broadcast %cst_253 : f32 to vector<16x256xf32>
    %358 = arith.minimumf %357, %356 : vector<16x256xf32>
    %c1_254 = arith.constant 1 : index
    %c0_255 = arith.constant 0 : index
    %c0_256 = arith.constant 0 : index
    %359 = vector.load %arg18[%c1_254, %c0_255, %c0_256] : memref<2x16x256xf32, #tpu.memory_space<vmem>>, vector<1x16x256xf32>
    %360 = vector.shape_cast %359 : vector<1x16x256xf32> to vector<16x256xf32>
    %361 = vector.shape_cast %358 : vector<16x256xf32> to vector<1x16x256xf32>
    tpu.vector_store %arg18[%c1_254, %c0_255, %c0_256], %361 {strides = array<i32>} : memref<2x16x256xf32, #tpu.memory_space<vmem>>, vector<1x16x256xf32>,
    return
  }
  func.func @transform_0(%arg0: i32) -> (i32, i32, i32) {
    %c0_i32 = arith.constant 0 : i32
    %c0_i32_0 = arith.constant 0 : i32
    %c0_i32_1 = arith.constant 0 : i32
    return %arg0, %c0_i32, %c0_i32_0 : i32, i32, i32
  }
  func.func @transform_1(%arg0: i32) -> (i32, i32, i32) {
    %c0_i32 = arith.constant 0 : i32
    %c0_i32_0 = arith.constant 0 : i32
    %c0_i32_1 = arith.constant 0 : i32
    %c0_i32_2 = arith.constant 0 : i32
    return %c0_i32, %c0_i32_0, %c0_i32_1 : i32, i32, i32
  }
  func.func @transform_2(%arg0: i32) -> (i32, i32) {
    %c0_i32 = arith.constant 0 : i32
    %c0_i32_0 = arith.constant 0 : i32
    %c0_i32_1 = arith.constant 0 : i32
    return %c0_i32, %c0_i32_0 : i32, i32
  }
  func.func @transform_3(%arg0: i32) -> (i32, i32) {
    %c0_i32 = arith.constant 0 : i32
    %c0_i32_0 = arith.constant 0 : i32
    %c0_i32_1 = arith.constant 0 : i32
    return %c0_i32, %c0_i32_0 : i32, i32
  }
  func.func @transform_4(%arg0: i32) -> (i32, i32, i32) {
    %c0_i32 = arith.constant 0 : i32
    %c0_i32_0 = arith.constant 0 : i32
    %c0_i32_1 = arith.constant 0 : i32
    %c0_i32_2 = arith.constant 0 : i32
    return %c0_i32, %c0_i32_0, %c0_i32_1 : i32, i32, i32
  }
  func.func @transform_5(%arg0: i32) -> (i32, i32) {
    %c0_i32 = arith.constant 0 : i32
    %c0_i32_0 = arith.constant 0 : i32
    %c0_i32_1 = arith.constant 0 : i32
    return %c0_i32, %c0_i32_0 : i32, i32
  }
  func.func @transform_6(%arg0: i32) -> (i32, i32, i32) {
    %c0_i32 = arith.constant 0 : i32
    %c0_i32_0 = arith.constant 0 : i32
    %c0_i32_1 = arith.constant 0 : i32
    %c0_i32_2 = arith.constant 0 : i32
    return %c0_i32, %c0_i32_0, %c0_i32_1 : i32, i32, i32
  }
  func.func @transform_7(%arg0: i32) -> (i32, i32) {
    %c0_i32 = arith.constant 0 : i32
    %c0_i32_0 = arith.constant 0 : i32
    %c0_i32_1 = arith.constant 0 : i32
    return %c0_i32, %c0_i32_0 : i32, i32
  }
  func.func @transform_8(%arg0: i32) -> (i32, i32) {
    %c0_i32 = arith.constant 0 : i32
    %c0_i32_0 = arith.constant 0 : i32
    %c0_i32_1 = arith.constant 0 : i32
    return %c0_i32, %c0_i32_0 : i32, i32
  }
  func.func @transform_9(%arg0: i32) -> (i32, i32) {
    %c0_i32 = arith.constant 0 : i32
    %c0_i32_0 = arith.constant 0 : i32
    %c0_i32_1 = arith.constant 0 : i32
    return %c0_i32, %c0_i32_0 : i32, i32
  }
  func.func @transform_10(%arg0: i32) -> (i32, i32) {
    %c0_i32 = arith.constant 0 : i32
    %c0_i32_0 = arith.constant 0 : i32
    %c0_i32_1 = arith.constant 0 : i32
    return %c0_i32, %c0_i32_0 : i32, i32
  }
  func.func @transform_11(%arg0: i32) -> (i32, i32) {
    %c0_i32 = arith.constant 0 : i32
    %c0_i32_0 = arith.constant 0 : i32
    %c0_i32_1 = arith.constant 0 : i32
    return %c0_i32, %c0_i32_0 : i32, i32
  }
  func.func @transform_12(%arg0: i32) -> (i32, i32) {
    %c0_i32 = arith.constant 0 : i32
    %c0_i32_0 = arith.constant 0 : i32
    %c0_i32_1 = arith.constant 0 : i32
    return %c0_i32, %c0_i32_0 : i32, i32
  }
  func.func @transform_13(%arg0: i32) -> (i32, i32) {
    %c0_i32 = arith.constant 0 : i32
    %c0_i32_0 = arith.constant 0 : i32
    %c0_i32_1 = arith.constant 0 : i32
    return %c0_i32, %c0_i32_0 : i32, i32
  }
  func.func @transform_14(%arg0: i32) -> (i32, i32) {
    %c0_i32 = arith.constant 0 : i32
    %c0_i32_0 = arith.constant 0 : i32
    %c0_i32_1 = arith.constant 0 : i32
    return %c0_i32, %c0_i32_0 : i32, i32
  }
  func.func @transform_15(%arg0: i32) -> (i32, i32) {
    %c0_i32 = arith.constant 0 : i32
    %c0_i32_0 = arith.constant 0 : i32
    %c0_i32_1 = arith.constant 0 : i32
    return %c0_i32, %c0_i32_0 : i32, i32
  }
  func.func @transform_16(%arg0: i32) -> (i32, i32) {
    %c0_i32 = arith.constant 0 : i32
    %c0_i32_0 = arith.constant 0 : i32
    %c0_i32_1 = arith.constant 0 : i32
    return %c0_i32, %c0_i32_0 : i32, i32
  }
  func.func @transform_17(%arg0: i32) -> (i32, i32, i32) {
    %c0_i32 = arith.constant 0 : i32
    %c0_i32_0 = arith.constant 0 : i32
    %c0_i32_1 = arith.constant 0 : i32
    return %arg0, %c0_i32, %c0_i32_0 : i32, i32, i32
  }
}

</mosaic_0001>

<llo_original>
// kernel: eres2net_block_forward.1
$region0: #{eres2net_block_forward.1}
  #allocation0 [shape = 'u32[]', space=smem, size = 0x4, offset = 0x4, fixed_abs, tag = 'smem constant byte address 0x4 - core index']
  #allocation1 [shape = 'u32[144,128]{1,0:T(1,128)}', space=vmem, size = 0x12000, scoped, tag = 'internal scratch']
  %s0 = inlined_call_operand.vmem [shape: f32[4,8,256], index: 0, kind: input, shape index: {}]
  %s1 = inlined_call_operand.vmem [shape: f32[9,1,256], index: 1, kind: input, shape index: {}]
  %s2 = inlined_call_operand.vmem [shape: f32[16,8], index: 2, kind: input, shape index: {}]
  %s3 = inlined_call_operand.vmem [shape: f32[16,1], index: 3, kind: input, shape index: {}]
  %s4 = inlined_call_operand.vmem [shape: f32[3,8,24], index: 4, kind: input, shape index: {}]
  %s5 = inlined_call_operand.vmem [shape: f32[8,1], index: 5, kind: input, shape index: {}]
  %s6 = inlined_call_operand.vmem [shape: f32[3,8,24], index: 6, kind: input, shape index: {}]
  %s7 = inlined_call_operand.vmem [shape: f32[8,1], index: 7, kind: input, shape index: {}]
  %s8 = inlined_call_operand.vmem [shape: f32[2,8], index: 8, kind: input, shape index: {}]
  %s9 = inlined_call_operand.vmem [shape: f32[2,8], index: 9, kind: input, shape index: {}]
  %s10 = inlined_call_operand.vmem [shape: f32[2,1], index: 10, kind: input, shape index: {}]
  %s11 = inlined_call_operand.vmem [shape: f32[8,2], index: 11, kind: input, shape index: {}]
  %s12 = inlined_call_operand.vmem [shape: f32[8,1], index: 12, kind: input, shape index: {}]
  %s13 = inlined_call_operand.vmem [shape: f32[16,16], index: 13, kind: input, shape index: {}]
  %s14 = inlined_call_operand.vmem [shape: f32[16,1], index: 14, kind: input, shape index: {}]
  %s15 = inlined_call_operand.vmem [shape: f32[16,8], index: 15, kind: input, shape index: {}]
  %s16 = inlined_call_operand.vmem [shape: f32[16,1], index: 16, kind: input, shape index: {}]
  %s17 = inlined_call_operand.vmem [shape: f32[4,16,256], index: 17, kind: output, shape index: {}]
  %s18 = sld [smem:[#allocation0]]
  $region101: #{eres2net_block_forward.1} parent=0
    _
  %s20 = ssub.s32 1, %s18
  %s21 = scalar_select 0, %s20, %s18
  loop: start=0, step=1, limit=4
  $region2: #{eres2net_block_forward.1} parent=0 // loop_pre_header
    _
  $region3: #{eres2net_block_forward.1} parent=0 // loop_header
    %s23 = sphi 0, %s27
    %p24 = scmp.ge.s32.totalorder %s23, 4
    %s33 = sphi 0, %s35
    %s36 = sphi 0, %s33
    %s37 = sphi 0, %s36
    %s53 = sphi 0, %s37
    %s57 = sphi 0, %s57
    %s59 = sphi 0, %s57
    %s60 = sphi 0, %s59
    %s74 = sphi 0, %s60
    %s78 = sphi 0, %s78
    %s80 = sphi 0, %s78
    %s81 = sphi 0, %s80
    %s95 = sphi 0, %s81
    %s99 = sphi 0, %s99
    %s101 = sphi 0, %s99
    %s102 = sphi 0, %s101
    %s116 = sphi 0, %s102
    %s120 = sphi 0, %s120
    %s122 = sphi 0, %s120
    %s123 = sphi 0, %s122
    %s137 = sphi 0, %s123
    %s141 = sphi 0, %s141
    %s143 = sphi 0, %s141
    %s144 = sphi 0, %s143
    %s158 = sphi 0, %s144
    %s162 = sphi 0, %s162
    %s164 = sphi 0, %s162
    %s165 = sphi 0, %s164
    %s179 = sphi 0, %s165
    %s183 = sphi 0, %s183
    %s185 = sphi 0, %s183
    %s186 = sphi 0, %s185
    %s200 = sphi 0, %s186
    %s204 = sphi 0, %s204
    %s206 = sphi 0, %s204
    %s207 = sphi 0, %s206
    %s221 = sphi 0, %s207
    %s225 = sphi 0, %s225
    %s227 = sphi 0, %s225
    %s228 = sphi 0, %s227
    %s242 = sphi 0, %s228
    %s246 = sphi 0, %s246
    %s248 = sphi 0, %s246
    %s249 = sphi 0, %s248
    %s263 = sphi 0, %s249
    %s267 = sphi 0, %s267
    %s269 = sphi 0, %s267
    %s270 = sphi 0, %s269
    %s284 = sphi 0, %s270
    %s288 = sphi 0, %s288
    %s290 = sphi 0, %s288
    %s291 = sphi 0, %s290
    %s305 = sphi 0, %s291
    %s309 = sphi 0, %s309
    %s311 = sphi 0, %s309
    %s312 = sphi 0, %s311
    %s326 = sphi 0, %s312
    %s330 = sphi 0, %s330
    %s332 = sphi 0, %s330
    %s333 = sphi 0, %s332
    %s347 = sphi 0, %s333
    %s351 = sphi 0, %s351
    %s353 = sphi 0, %s351
    %s354 = sphi 0, %s353
    %s368 = sphi 0, %s354
    %s372 = sphi 0, %s372
    %s374 = sphi 0, %s372
    %s375 = sphi 0, %s374
    %s389 = sphi 0, %s375
    %s395 = sphi 0, %s397
    %s398 = sphi 0, %s395
    %s399 = sphi 0, %s398
    %s415 = sphi 0, %s399
  $region4: #{eres2net_block_forward.1} parent=0 // loop_header_branch
    %26 = sbr.rel (%p24) target = $region8
  $region5: #{eres2net_block_forward.1} parent=0 // loop_body
    %s28 = ssub.s32 %s23, 1
    %s29 = ssub.s32 %s23, 2
    %s30 = sadd.s32 %s23, 1
    %s31 = ssub.s32 %s23, %s30
    %p32 = scmp.eq.s32.totalorder %s31, 0
    %s34 = sadd.s32 %s33, 1
    %s35 = scalar_select %p32, %s33, %s34
    %p38 = pneg %p32
    %p39 = scmp.eq.s32.totalorder %s23, 1
    %p40 = por %p38, %p39
    %p41 = scmp.ne.s32.totalorder %s33, %s36
    %p42 = scmp.eq.s32.totalorder %s23, 0
    %p43 = por %p41, %p42
    %p44 = scmp.ne.s32.totalorder %s33, %s36
    %p45 = scmp.eq.s32.totalorder %s28, 1
    %p46 = por %p44, %p45
    %p47 = scmp.ne.s32.totalorder %s36, %s37
    %p48 = scmp.eq.s32.totalorder %s28, 0
    %p49 = por %p47, %p48
    %p50 = scmp.ne.s32.totalorder %s36, %s37
    %p51 = scmp.eq.s32.totalorder %s29, 1
    %p52 = por %p50, %p51
    %p54 = scmp.ne.s32.totalorder %s37, %s53
    %p55 = scmp.eq.s32.totalorder %s29, 0
    %p56 = por %p54, %p55
    %s58 = sadd.s32 %s57, 1
    %p61 = scmp.eq.s32.totalorder %s23, 1
    %p62 = scmp.ne.s32.totalorder %s57, %s59
    %p63 = scmp.eq.s32.totalorder %s23, 0
    %p64 = por %p62, %p63
    %p65 = scmp.ne.s32.totalorder %s57, %s59
    %p66 = scmp.eq.s32.totalorder %s28, 1
    %p67 = por %p65, %p66
    %p68 = scmp.ne.s32.totalorder %s59, %s60
    %p69 = scmp.eq.s32.totalorder %s28, 0
    %p70 = por %p68, %p69
    %p71 = scmp.ne.s32.totalorder %s59, %s60
    %p72 = scmp.eq.s32.totalorder %s29, 1
    %p73 = por %p71, %p72
    %p75 = scmp.ne.s32.totalorder %s60, %s74
    %p76 = scmp.eq.s32.totalorder %s29, 0
    %p77 = por %p75, %p76
    %s79 = sadd.s32 %s78, 1
    %p82 = scmp.eq.s32.totalorder %s23, 1
    %p83 = scmp.ne.s32.totalorder %s78, %s80
    %p84 = scmp.eq.s32.totalorder %s23, 0
    %p85 = por %p83, %p84
    %p86 = scmp.ne.s32.totalorder %s78, %s80
    %p87 = scmp.eq.s32.totalorder %s28, 1
    %p88 = por %p86, %p87
    %p89 = scmp.ne.s32.totalorder %s80, %s81
    %p90 = scmp.eq.s32.totalorder %s28, 0
    %p91 = por %p89, %p90
    %p92 = scmp.ne.s32.totalorder %s80, %s81
    %p93 = scmp.eq.s32.totalorder %s29, 1
    %p94 = por %p92, %p93
    %p96 = scmp.ne.s32.totalorder %s81, %s95
    %p97 = scmp.eq.s32.totalorder %s29, 0
    %p98 = por %p96, %p97
    %s100 = sadd.s32 %s99, 1
    %p103 = scmp.eq.s32.totalorder %s23, 1
    %p104 = scmp.ne.s32.totalorder %s99, %s101
    %p105 = scmp.eq.s32.totalorder %s23, 0
    %p106 = por %p104, %p105
    %p107 = scmp.ne.s32.totalorder %s99, %s101
    %p108 = scmp.eq.s32.totalorder %s28, 1
    %p109 = por %p107, %p108
    %p110 = scmp.ne.s32.totalorder %s101, %s102
    %p111 = scmp.eq.s32.totalorder %s28, 0
    %p112 = por %p110, %p111
    %p113 = scmp.ne.s32.totalorder %s101, %s102
    %p114 = scmp.eq.s32.totalorder %s29, 1
    %p115 = por %p113, %p114
    %p117 = scmp.ne.s32.totalorder %s102, %s116
    %p118 = scmp.eq.s32.totalorder %s29, 0
    %p119 = por %p117, %p118
    %s121 = sadd.s32 %s120, 1
    %p124 = scmp.eq.s32.totalorder %s23, 1
    %p125 = scmp.ne.s32.totalorder %s120, %s122
    %p126 = scmp.eq.s32.totalorder %s23, 0
    %p127 = por %p125, %p126
    %p128 = scmp.ne.s32.totalorder %s120, %s122
    %p129 = scmp.eq.s32.totalorder %s28, 1
    %p130 = por %p128, %p129
    %p131 = scmp.ne.s32.totalorder %s122, %s123
    %p132 = scmp.eq.s32.totalorder %s28, 0
    %p133 = por %p131, %p132
    %p134 = scmp.ne.s32.totalorder %s122, %s123
    %p135 = scmp.eq.s32.totalorder %s29, 1
    %p136 = por %p134, %p135
    %p138 = scmp.ne.s32.totalorder %s123, %s137
    %p139 = scmp.eq.s32.totalorder %s29, 0
    %p140 = por %p138, %p139
    %s142 = sadd.s32 %s141, 1
    %p145 = scmp.eq.s32.totalorder %s23, 1
    %p146 = scmp.ne.s32.totalorder %s141, %s143
    %p147 = scmp.eq.s32.totalorder %s23, 0
    %p148 = por %p146, %p147
    %p149 = scmp.ne.s32.totalorder %s141, %s143
    %p150 = scmp.eq.s32.totalorder %s28, 1
    %p151 = por %p149, %p150
    %p152 = scmp.ne.s32.totalorder %s143, %s144
    %p153 = scmp.eq.s32.totalorder %s28, 0
    %p154 = por %p152, %p153
    %p155 = scmp.ne.s32.totalorder %s143, %s144
    %p156 = scmp.eq.s32.totalorder %s29, 1
    %p157 = por %p155, %p156
    %p159 = scmp.ne.s32.totalorder %s144, %s158
    %p160 = scmp.eq.s32.totalorder %s29, 0
    %p161 = por %p159, %p160
    %s163 = sadd.s32 %s162, 1
    %p166 = scmp.eq.s32.totalorder %s23, 1
    %p167 = scmp.ne.s32.totalorder %s162, %s164
    %p168 = scmp.eq.s32.totalorder %s23, 0
    %p169 = por %p167, %p168
    %p170 = scmp.ne.s32.totalorder %s162, %s164
    %p171 = scmp.eq.s32.totalorder %s28, 1
    %p172 = por %p170, %p171
    %p173 = scmp.ne.s32.totalorder %s164, %s165
    %p174 = scmp.eq.s32.totalorder %s28, 0
    %p175 = por %p173, %p174
    %p176 = scmp.ne.s32.totalorder %s164, %s165
    %p177 = scmp.eq.s32.totalorder %s29, 1
    %p178 = por %p176, %p177
    %p180 = scmp.ne.s32.totalorder %s165, %s179
    %p181 = scmp.eq.s32.totalorder %s29, 0
    %p182 = por %p180, %p181
    %s184 = sadd.s32 %s183, 1
    %p187 = scmp.eq.s32.totalorder %s23, 1
    %p188 = scmp.ne.s32.totalorder %s183, %s185
    %p189 = scmp.eq.s32.totalorder %s23, 0
    %p190 = por %p188, %p189
    %p191 = scmp.ne.s32.totalorder %s183, %s185
    %p192 = scmp.eq.s32.totalorder %s28, 1
    %p193 = por %p191, %p192
    %p194 = scmp.ne.s32.totalorder %s185, %s186
    %p195 = scmp.eq.s32.totalorder %s28, 0
    %p196 = por %p194, %p195
    %p197 = scmp.ne.s32.totalorder %s185, %s186
    %p198 = scmp.eq.s32.totalorder %s29, 1
    %p199 = por %p197, %p198
    %p201 = scmp.ne.s32.totalorder %s186, %s200
    %p202 = scmp.eq.s32.totalorder %s29, 0
    %p203 = por %p201, %p202
    %s205 = sadd.s32 %s204, 1
    %p208 = scmp.eq.s32.totalorder %s23, 1
    %p209 = scmp.ne.s32.totalorder %s204, %s206
    %p210 = scmp.eq.s32.totalorder %s23, 0
    %p211 = por %p209, %p210
    %p212 = scmp.ne.s32.totalorder %s204, %s206
    %p213 = scmp.eq.s32.totalorder %s28, 1
    %p214 = por %p212, %p213
    %p215 = scmp.ne.s32.totalorder %s206, %s207
    %p216 = scmp.eq.s32.totalorder %s28, 0
    %p217 = por %p215, %p216
    %p218 = scmp.ne.s32.totalorder %s206, %s207
    %p219 = scmp.eq.s32.totalorder %s29, 1
    %p220 = por %p218, %p219
    %p222 = scmp.ne.s32.totalorder %s207, %s221
    %p223 = scmp.eq.s32.totalorder %s29, 0
    %p224 = por %p222, %p223
    %s226 = sadd.s32 %s225, 1
    %p229 = scmp.eq.s32.totalorder %s23, 1
    %p230 = scmp.ne.s32.totalorder %s225, %s227
    %p231 = scmp.eq.s32.totalorder %s23, 0
    %p232 = por %p230, %p231
    %p233 = scmp.ne.s32.totalorder %s225, %s227
    %p234 = scmp.eq.s32.totalorder %s28, 1
    %p235 = por %p233, %p234
    %p236 = scmp.ne.s32.totalorder %s227, %s228
    %p237 = scmp.eq.s32.totalorder %s28, 0
    %p238 = por %p236, %p237
    %p239 = scmp.ne.s32.totalorder %s227, %s228
    %p240 = scmp.eq.s32.totalorder %s29, 1
    %p241 = por %p239, %p240
    %p243 = scmp.ne.s32.totalorder %s228, %s242
    %p244 = scmp.eq.s32.totalorder %s29, 0
    %p245 = por %p243, %p244
    %s247 = sadd.s32 %s246, 1
    %p250 = scmp.eq.s32.totalorder %s23, 1
    %p251 = scmp.ne.s32.totalorder %s246, %s248
    %p252 = scmp.eq.s32.totalorder %s23, 0
    %p253 = por %p251, %p252
    %p254 = scmp.ne.s32.totalorder %s246, %s248
    %p255 = scmp.eq.s32.totalorder %s28, 1
    %p256 = por %p254, %p255
    %p257 = scmp.ne.s32.totalorder %s248, %s249
    %p258 = scmp.eq.s32.totalorder %s28, 0
    %p259 = por %p257, %p258
    %p260 = scmp.ne.s32.totalorder %s248, %s249
    %p261 = scmp.eq.s32.totalorder %s29, 1
    %p262 = por %p260, %p261
    %p264 = scmp.ne.s32.totalorder %s249, %s263
    %p265 = scmp.eq.s32.totalorder %s29, 0
    %p266 = por %p264, %p265
    %s268 = sadd.s32 %s267, 1
    %p271 = scmp.eq.s32.totalorder %s23, 1
    %p272 = scmp.ne.s32.totalorder %s267, %s269
    %p273 = scmp.eq.s32.totalorder %s23, 0
    %p274 = por %p272, %p273
    %p275 = scmp.ne.s32.totalorder %s267, %s269
    %p276 = scmp.eq.s32.totalorder %s28, 1
    %p277 = por %p275, %p276
    %p278 = scmp.ne.s32.totalorder %s269, %s270
    %p279 = scmp.eq.s32.totalorder %s28, 0
    %p280 = por %p278, %p279
    %p281 = scmp.ne.s32.totalorder %s269, %s270
    %p282 = scmp.eq.s32.totalorder %s29, 1
    %p283 = por %p281, %p282
    %p285 = scmp.ne.s32.totalorder %s270, %s284
    %p286 = scmp.eq.s32.totalorder %s29, 0
    %p287 = por %p285, %p286
    %s289 = sadd.s32 %s288, 1
    %p292 = scmp.eq.s32.totalorder %s23, 1
    %p293 = scmp.ne.s32.totalorder %s288, %s290
    %p294 = scmp.eq.s32.totalorder %s23, 0
    %p295 = por %p293, %p294
    %p296 = scmp.ne.s32.totalorder %s288, %s290
    %p297 = scmp.eq.s32.totalorder %s28, 1
    %p298 = por %p296, %p297
    %p299 = scmp.ne.s32.totalorder %s290, %s291
    %p300 = scmp.eq.s32.totalorder %s28, 0
    %p301 = por %p299, %p300
    %p302 = scmp.ne.s32.totalorder %s290, %s291
    %p303 = scmp.eq.s32.totalorder %s29, 1
    %p304 = por %p302, %p303
    %p306 = scmp.ne.s32.totalorder %s291, %s305
    %p307 = scmp.eq.s32.totalorder %s29, 0
    %p308 = por %p306, %p307
    %s310 = sadd.s32 %s309, 1
    %p313 = scmp.eq.s32.totalorder %s23, 1
    %p314 = scmp.ne.s32.totalorder %s309, %s311
    %p315 = scmp.eq.s32.totalorder %s23, 0
    %p316 = por %p314, %p315
    %p317 = scmp.ne.s32.totalorder %s309, %s311
    %p318 = scmp.eq.s32.totalorder %s28, 1
    %p319 = por %p317, %p318
    %p320 = scmp.ne.s32.totalorder %s311, %s312
    %p321 = scmp.eq.s32.totalorder %s28, 0
    %p322 = por %p320, %p321
    %p323 = scmp.ne.s32.totalorder %s311, %s312
    %p324 = scmp.eq.s32.totalorder %s29, 1
    %p325 = por %p323, %p324
    %p327 = scmp.ne.s32.totalorder %s312, %s326
    %p328 = scmp.eq.s32.totalorder %s29, 0
    %p329 = por %p327, %p328
    %s331 = sadd.s32 %s330, 1
    %p334 = scmp.eq.s32.totalorder %s23, 1
    %p335 = scmp.ne.s32.totalorder %s330, %s332
    %p336 = scmp.eq.s32.totalorder %s23, 0
    %p337 = por %p335, %p336
    %p338 = scmp.ne.s32.totalorder %s330, %s332
    %p339 = scmp.eq.s32.totalorder %s28, 1
    %p340 = por %p338, %p339
    %p341 = scmp.ne.s32.totalorder %s332, %s333
    %p342 = scmp.eq.s32.totalorder %s28, 0
    %p343 = por %p341, %p342
    %p344 = scmp.ne.s32.totalorder %s332, %s333
    %p345 = scmp.eq.s32.totalorder %s29, 1
    %p346 = por %p344, %p345
    %p348 = scmp.ne.s32.totalorder %s333, %s347
    %p349 = scmp.eq.s32.totalorder %s29, 0
    %p350 = por %p348, %p349
    %s352 = sadd.s32 %s351, 1
    %p355 = scmp.eq.s32.totalorder %s23, 1
    %p356 = scmp.ne.s32.totalorder %s351, %s353
    %p357 = scmp.eq.s32.totalorder %s23, 0
    %p358 = por %p356, %p357
    %p359 = scmp.ne.s32.totalorder %s351, %s353
    %p360 = scmp.eq.s32.totalorder %s28, 1
    %p361 = por %p359, %p360
    %p362 = scmp.ne.s32.totalorder %s353, %s354
    %p363 = scmp.eq.s32.totalorder %s28, 0
    %p364 = por %p362, %p363
    %p365 = scmp.ne.s32.totalorder %s353, %s354
    %p366 = scmp.eq.s32.totalorder %s29, 1
    %p367 = por %p365, %p366
    %p369 = scmp.ne.s32.totalorder %s354, %s368
    %p370 = scmp.eq.s32.totalorder %s29, 0
    %p371 = por %p369, %p370
    %s373 = sadd.s32 %s372, 1
    %p376 = scmp.eq.s32.totalorder %s23, 1
    %p377 = scmp.ne.s32.totalorder %s372, %s374
    %p378 = scmp.eq.s32.totalorder %s23, 0
    %p379 = por %p377, %p378
    %p380 = scmp.ne.s32.totalorder %s372, %s374
    %p381 = scmp.eq.s32.totalorder %s28, 1
    %p382 = por %p380, %p381
    %p383 = scmp.ne.s32.totalorder %s374, %s375
    %p384 = scmp.eq.s32.totalorder %s28, 0
    %p385 = por %p383, %p384
    %p386 = scmp.ne.s32.totalorder %s374, %s375
    %p387 = scmp.eq.s32.totalorder %s29, 1
    %p388 = por %p386, %p387
    %p390 = scmp.ne.s32.totalorder %s375, %s389
    %p391 = scmp.eq.s32.totalorder %s29, 0
    %p392 = por %p390, %p391
    %s393 = ssub.s32 %s23, %s30
    %p394 = scmp.eq.s32.totalorder %s393, 0
    %s396 = sadd.s32 %s395, 1
    %s397 = scalar_select %p394, %s395, %s396
    %p400 = pneg %p394
    %p401 = scmp.eq.s32.totalorder %s23, 1
    %p402 = por %p400, %p401
    %p403 = scmp.ne.s32.totalorder %s395, %s398
    %p404 = scmp.eq.s32.totalorder %s23, 0
    %p405 = por %p403, %p404
    %p406 = scmp.ne.s32.totalorder %s395, %s398
    %p407 = scmp.eq.s32.totalorder %s28, 1
    %p408 = por %p406, %p407
    %p409 = scmp.ne.s32.totalorder %s398, %s399
    %p410 = scmp.eq.s32.totalorder %s28, 0
    %p411 = por %p409, %p410
    %p412 = scmp.ne.s32.totalorder %s398, %s399
    %p413 = scmp.eq.s32.totalorder %s29, 1
    %p414 = por %p412, %p413
    %p416 = scmp.ne.s32.totalorder %s399, %s415
    %p417 = scmp.eq.s32.totalorder %s29, 0
    %p418 = por %p416, %p417
    %p419 = scmp.le.s32.totalorder 1, %s23
    %p420 = scmp.lt.s32.totalorder %s23, 3
    %p421 = pnand %p419, %p420
    %p422 = pneg %p421
    // Predicated region
    $region9: #{eres2net_block_forward.1} parent=5 // pred_check
      _
    $region10: #{eres2net_block_forward.1} parent=5 // pred_check_branch
      %424 = sbr.rel (%p421) target = $region12
    $region11: #{eres2net_block_forward.1} parent=5 // pred_region
      %s425 = ssub.s32 %s23, 1
      // Predicated region
      $region13: #{eres2net_block_forward.1} parent=11 // pred_check
        %p426 = pneg %p70
      $region14: #{eres2net_block_forward.1} parent=11 // pred_check_branch
        %428 = sbr.rel (%p426) target = $region16
      $region15: #{eres2net_block_forward.1} parent=11 // pred_region
        _
      $region16: #{eres2net_block_forward.1} parent=11 // pred_fallthru
        _
      // Predicated region
      $region17: #{eres2net_block_forward.1} parent=11 // pred_check
        %p429 = pneg %p91
      $region18: #{eres2net_block_forward.1} parent=11 // pred_check_branch
        %431 = sbr.rel (%p429) target = $region20
      $region19: #{eres2net_block_forward.1} parent=11 // pred_region
        _
      $region20: #{eres2net_block_forward.1} parent=11 // pred_fallthru
        _
      // Predicated region
      $region21: #{eres2net_block_forward.1} parent=11 // pred_check
        %p432 = pneg %p112
      $region22: #{eres2net_block_forward.1} parent=11 // pred_check_branch
        %434 = sbr.rel (%p432) target = $region24
      $region23: #{eres2net_block_forward.1} parent=11 // pred_region
        _
      $region24: #{eres2net_block_forward.1} parent=11 // pred_fallthru
        _
      // Predicated region
      $region25: #{eres2net_block_forward.1} parent=11 // pred_check
        %p435 = pneg %p133
      $region26: #{eres2net_block_forward.1} parent=11 // pred_check_branch
        %437 = sbr.rel (%p435) target = $region28
      $region27: #{eres2net_block_forward.1} parent=11 // pred_region
        _
      $region28: #{eres2net_block_forward.1} parent=11 // pred_fallthru
        _
      // Predicated region
      $region29: #{eres2net_block_forward.1} parent=11 // pred_check
        %p438 = pneg %p154
      $region30: #{eres2net_block_forward.1} parent=11 // pred_check_branch
        %440 = sbr.rel (%p438) target = $region32
      $region31: #{eres2net_block_forward.1} parent=11 // pred_region
        _
      $region32: #{eres2net_block_forward.1} parent=11 // pred_fallthru
        _
      // Predicated region
      $region33: #{eres2net_block_forward.1} parent=11 // pred_check
        %p441 = pneg %p175
      $region34: #{eres2net_block_forward.1} parent=11 // pred_check_branch
        %443 = sbr.rel (%p441) target = $region36
      $region35: #{eres2net_block_forward.1} parent=11 // pred_region
        _
      $region36: #{eres2net_block_forward.1} parent=11 // pred_fallthru
        _
      // Predicated region
      $region37: #{eres2net_block_forward.1} parent=11 // pred_check
        %p444 = pneg %p196
      $region38: #{eres2net_block_forward.1} parent=11 // pred_check_branch
        %446 = sbr.rel (%p444) target = $region40
      $region39: #{eres2net_block_forward.1} parent=11 // pred_region
        _
      $region40: #{eres2net_block_forward.1} parent=11 // pred_fallthru
        _
      // Predicated region
      $region41: #{eres2net_block_forward.1} parent=11 // pred_check
        %p447 = pneg %p217
      $region42: #{eres2net_block_forward.1} parent=11 // pred_check_branch
        %449 = sbr.rel (%p447) target = $region44
      $region43: #{eres2net_block_forward.1} parent=11 // pred_region
        _
      $region44: #{eres2net_block_forward.1} parent=11 // pred_fallthru
        _
      // Predicated region
      $region45: #{eres2net_block_forward.1} parent=11 // pred_check
        %p450 = pneg %p238
      $region46: #{eres2net_block_forward.1} parent=11 // pred_check_branch
        %452 = sbr.rel (%p450) target = $region48
      $region47: #{eres2net_block_forward.1} parent=11 // pred_region
        _
      $region48: #{eres2net_block_forward.1} parent=11 // pred_fallthru
        _
      // Predicated region
      $region49: #{eres2net_block_forward.1} parent=11 // pred_check
        %p453 = pneg %p259
      $region50: #{eres2net_block_forward.1} parent=11 // pred_check_branch
        %455 = sbr.rel (%p453) target = $region52
      $region51: #{eres2net_block_forward.1} parent=11 // pred_region
        _
      $region52: #{eres2net_block_forward.1} parent=11 // pred_fallthru
        _
      // Predicated region
      $region53: #{eres2net_block_forward.1} parent=11 // pred_check
        %p456 = pneg %p280
      $region54: #{eres2net_block_forward.1} parent=11 // pred_check_branch
        %458 = sbr.rel (%p456) target = $region56
      $region55: #{eres2net_block_forward.1} parent=11 // pred_region
        _
      $region56: #{eres2net_block_forward.1} parent=11 // pred_fallthru
        _
      // Predicated region
      $region57: #{eres2net_block_forward.1} parent=11 // pred_check
        %p459 = pneg %p301
      $region58: #{eres2net_block_forward.1} parent=11 // pred_check_branch
        %461 = sbr.rel (%p459) target = $region60
      $region59: #{eres2net_block_forward.1} parent=11 // pred_region
        _
      $region60: #{eres2net_block_forward.1} parent=11 // pred_fallthru
        _
      // Predicated region
      $region61: #{eres2net_block_forward.1} parent=11 // pred_check
        %p462 = pneg %p322
      $region62: #{eres2net_block_forward.1} parent=11 // pred_check_branch
        %464 = sbr.rel (%p462) target = $region64
      $region63: #{eres2net_block_forward.1} parent=11 // pred_region
        _
      $region64: #{eres2net_block_forward.1} parent=11 // pred_fallthru
        _
      // Predicated region
      $region65: #{eres2net_block_forward.1} parent=11 // pred_check
        %p465 = pneg %p343
      $region66: #{eres2net_block_forward.1} parent=11 // pred_check_branch
        %467 = sbr.rel (%p465) target = $region68
      $region67: #{eres2net_block_forward.1} parent=11 // pred_region
        _
      $region68: #{eres2net_block_forward.1} parent=11 // pred_fallthru
        _
      // Predicated region
      $region69: #{eres2net_block_forward.1} parent=11 // pred_check
        %p468 = pneg %p364
      $region70: #{eres2net_block_forward.1} parent=11 // pred_check_branch
        %470 = sbr.rel (%p468) target = $region72
      $region71: #{eres2net_block_forward.1} parent=11 // pred_region
        _
      $region72: #{eres2net_block_forward.1} parent=11 // pred_fallthru
        _
      // Predicated region
      $region73: #{eres2net_block_forward.1} parent=11 // pred_check
        %p471 = pneg %p385
      $region74: #{eres2net_block_forward.1} parent=11 // pred_check_branch
        %473 = sbr.rel (%p471) target = $region76
      $region75: #{eres2net_block_forward.1} parent=11 // pred_region
        _
      $region76: #{eres2net_block_forward.1} parent=11 // pred_fallthru
        _
    $region12: #{eres2net_block_forward.1} parent=5 // pred_fallthru
      _
    %p474 = scmp.lt.s32.totalorder %s23, 2
    // Predicated region
    $region77: #{eres2net_block_forward.1} parent=5 // pred_check
      %p475 = pneg %p474
    $region78: #{eres2net_block_forward.1} parent=5 // pred_check_branch
      %477 = sbr.rel (%p475) target = $region80
    $region79: #{eres2net_block_forward.1} parent=5 // pred_region
      // Predicated region
      $region81: #{eres2net_block_forward.1} parent=79 // pred_check
        %p478 = pneg %p43
      $region82: #{eres2net_block_forward.1} parent=79 // pred_check_branch
        %480 = sbr.rel (%p478) target = $region84
      $region83: #{eres2net_block_forward.1} parent=79 // pred_region
        %s481 = smul.u32 2, %s23
        %p482 = scmp.lt.s32.totalorder %s481, 3
        %s483 = scalar_select %p482, %s481, 3
        %s484 = smul.addr %s483, 2
        %s485 = smul.addr %s484, 8
        %s486 = scalar_lea.vmem %s0, %s485
        %s487 = smul.u32 2, %s23
      $region84: #{eres2net_block_forward.1} parent=79 // pred_fallthru
        _
    $region80: #{eres2net_block_forward.1} parent=5 // pred_fallthru
      _
    %p488 = scmp.le.s32.totalorder 1, %s23
    %p489 = scmp.lt.s32.totalorder %s23, 3
    %p490 = pnand %p488, %p489
    %p491 = pneg %p490
    // Predicated region
    $region85: #{eres2net_block_forward.1} parent=5 // pred_check
      _
    $region86: #{eres2net_block_forward.1} parent=5 // pred_check_branch
      %493 = sbr.rel (%p490) target = $region88
    $region87: #{eres2net_block_forward.1} parent=5 // pred_region
      %s494 = ssub.s32 %s23, 1
      %s495 = smul.u32 2, %s28
      %p496 = scmp.lt.s32.totalorder %s495, 3
      %s497 = scalar_select %p496, %s495, 3
      %s498 = smul.addr %s497, 2
      %s499 = smul.addr %s498, 8
      %s500 = scalar_lea.vmem %s0, %s499
      %p501 = pneg %p49
      %p502 = pneg %p46
      %p503 = pneg %p70
      %p504 = pneg %p67
      %p505 = pneg %p91
      %p506 = pneg %p88
      %p507 = pneg %p112
      %p508 = pneg %p109
      %p509 = pneg %p133
      %p510 = pneg %p130
      %p511 = pneg %p154
      %p512 = pneg %p151
      %p513 = pneg %p175
      %p514 = pneg %p172
      %p515 = pneg %p196
      %p516 = pneg %p193
      %p517 = pneg %p217
      %p518 = pneg %p214
      %p519 = pneg %p238
      %p520 = pneg %p235
      %p521 = pneg %p259
      %p522 = pneg %p256
      %p523 = pneg %p280
      %p524 = pneg %p277
      %p525 = pneg %p301
      %p526 = pneg %p298
      %p527 = pneg %p322
      %p528 = pneg %p319
      %p529 = pneg %p343
      %p530 = pneg %p340
      %p531 = pneg %p364
      %p532 = pneg %p361
      %p533 = pneg %p385
      %p534 = pneg %p382
      %p535 = pneg %p411
      %p536 = pneg %p408
      %s537 = smul.u32 2, %s28
      %p538 = scmp.lt.s32.totalorder %s537, 3
      %s539 = scalar_select %p538, %s537, 3
      %s540 = smul.addr %s539, 4
      %s541 = smul.addr %s540, 8
      %s542 = scalar_lea.vmem %s17, %s541
      %s543 = smul.u32 2, %s28
      %p544 = scmp.lt.s32.totalorder %s543, 3
      %s545 = scalar_select %p544, %s543, 3
      %s546 = smul.addr %s545, 2
      %s547 = smul.addr %s546, 8
      %s548 = scalar_lea.vmem %s0, %s547
      %s549 = smul.u32 2, %s28
      %s550 = smul.u32 2, %s28
      %p551 = scmp.lt.s32.totalorder %s550, 3
      %s552 = scalar_select %p551, %s550, 3
      %s553 = smul.addr %s552, 4
      %s554 = smul.addr %s553, 8
      %s555 = scalar_lea.vmem %s17, %s554
      %s556 = smul.u32 2, %s28
      %v557 = vld [vmem:[%s548] sm:$0xff]
      %v558 = vld [vmem:[%s548 + $0x8] sm:$0xff]
      %v559 = vld [vmem:[%s2] sm:$0xff]
      %v560 = vld [vmem:[%s2 + $0x8] sm:$0xff]
      %v561 = vld [vmem:[%s3] sm:$0xff]
      %v562 = vld [vmem:[%s3 + $0x8] sm:$0xff]
      %564 = vset.pattern.permute.xlu0 0
      %565 = vperm.xlu0 %564, %v561
      %v566 = vpop.permute.xlu0 %565
      %569 = vset.pattern.permute.xlu0 0
      %570 = vperm.xlu0 %569, %v562
      %v571 = vpop.permute.xlu0 %570
      %vm573 = vcmask 64512
      %v575 = vsel %vm573, %v559, 0
      %v578 = vsel %vm573, %v560, 0
      %580 = vmatprep.subr.mxu0 %v558
      %581 = vmatpush1.msra.mxu0 %v557
      %582 = vmatprep.subr.mxu0 0.0
      %583 = vmatpush1.msra.mxu0 0.0
      %584 = vmatprep.subr.mxu0 0.0
      %585 = vmatpush1.msra.mxu0 0.0
      %586 = vmatprep.subr.mxu0 0.0
      %587 = vmatpush1.msra.mxu0 0.0
      %588 = vmatprep.subr.mxu0 0.0
      %589 = vmatpush1.msra.mxu0 0.0
      %590 = vmatprep.subr.mxu0 0.0
      %591 = vmatpush1.msra.mxu0 0.0
      %592 = vmatprep.subr.mxu0 0.0
      %593 = vmatpush1.msra.mxu0 0.0
      %594 = vmatprep.subr.mxu0 0.0
      %595 = vmatpush1.msra.mxu0 0.0
      %596 = vmatprep.subr.mxu0 0.0
      %597 = vmatpush1.msra.mxu0 0.0
      %598 = vmatprep.subr.mxu0 0.0
      %599 = vmatpush1.msra.mxu0 0.0
      %600 = vmatprep.subr.mxu0 0.0
      %601 = vmatpush1.msra.mxu0 0.0
      %602 = vmatprep.subr.mxu0 0.0
      %603 = vmatpush1.msra.mxu0 0.0
      %604 = vmatprep.subr.mxu0 0.0
      %605 = vmatpush1.msra.mxu0 0.0
      %606 = vmatprep.subr.mxu0 0.0
      %607 = vmatpush1.msra.mxu0 0.0
      %608 = vmatprep.subr.mxu0 0.0
      %609 = vmatpush1.msra.mxu0 0.0
      %610 = vmatprep.subr.mxu0 0.0
      %611 = vmatpush1.msra.mxu0 0.0
      %612 = vmatprep.subr.mxu0 0.0
      %613 = vmatpush1.msra.mxu0 0.0
      %614 = vmatprep.subr.mxu0 0.0
      %615 = vmatpush1.msra.mxu0 0.0
      %616 = vmatprep.subr.mxu0 0.0
      %617 = vmatpush1.msra.mxu0 0.0
      %618 = vmatprep.subr.mxu0 0.0
      %619 = vmatpush1.msra.mxu0 0.0
      %620 = vmatprep.subr.mxu0 0.0
      %621 = vmatpush1.msra.mxu0 0.0
      %622 = vmatprep.subr.mxu0 0.0
      %623 = vmatpush1.msra.mxu0 0.0
      %624 = vmatprep.subr.mxu0 0.0
      %625 = vmatpush1.msra.mxu0 0.0
      %626 = vmatprep.subr.mxu0 0.0
      %627 = vmatpush1.msra.mxu0 0.0
      %628 = vmatprep.subr.mxu0 0.0
      %629 = vmatpush1.msra.mxu0 0.0
      %630 = vmatprep.subr.mxu0 0.0
      %631 = vmatpush1.msra.mxu0 0.0
      %632 = vmatprep.subr.mxu0 0.0
      %633 = vmatpush1.msra.mxu0 0.0
      %634 = vmatprep.subr.mxu0 0.0
      %635 = vmatpush1.msra.mxu0 0.0
      %636 = vmatprep.subr.mxu0 0.0
      %637 = vmatpush1.msra.mxu0 0.0
      %638 = vmatprep.subr.mxu0 0.0
      %639 = vmatpush1.msra.mxu0 0.0
      %640 = vmatprep.subr.mxu0 0.0
      %641 = vmatpush1.msra.mxu0 0.0
      %642 = vmatprep.subr.mxu0 0.0
      %643 = vmatpush1.msra.mxu0 0.0
      %644 = vmatprep.mubr.f32.mxu0 0.0
      %645 = vmatmul.mubr.f32.gmra.mrb[0].mxu0 %v575
      %v646 = vpop.f32.mrb[0].mxu0
      %v647 = vadd.f32 %v566, %v646
      %v648 = vpop.f32.mrb[0].mxu0
      %v649 = vadd.f32 %v566, %v648
      %650 = vmatprep.mubr.f32.mxu0 0.0
      %651 = vmatmul.mubr.f32.gmra.mrb[0].mxu0 %v578
      %v652 = vpop.f32.mrb[0].mxu0
      %v653 = vadd.f32 %v571, %v652
      %v654 = vpop.f32.mrb[0].mxu0
      %v655 = vadd.f32 %v571, %v654
      %656 = vdwg.mxu0
      %v657 = vmax.f32 %v647, 0.0
      %v658 = vmax.f32 %v649, 0.0
      %v659 = vmax.f32 %v653, 0.0
      %v660 = vmax.f32 %v655, 0.0
      %v661 = vmin.f32 %v657, 20.0
      %v662 = vmin.f32 %v658, 20.0
      %v663 = vmin.f32 %v659, 20.0
      %v664 = vmin.f32 %v660, 20.0
      %665 = vrot.lane.b32.xlu0 %v661, 17
      %v666 = vpop.permute.xlu0 %665
      %667 = vrot.lane.b32.xlu0 %v662, 17
      %v668 = vpop.permute.xlu0 %667
      %v669 = vlaneseq
      %v670 = vand.u32 %v669, 127
      %vm671 = vcmp.lt.s32.totalorder %v670, 17
      %v672 = vsel %vm671, %v666, %v668
      %v673 = vsel %vm671, %v668, %v666
      %v674 = vld [vmem:[%s1] sm:$0x3]
      %v676 = vlaneseq
      %v677 = vshrl.u32 %v676, 7
      %v678 = vsub.s32 0, %v677
      %v679 = vrot.slane %v674, %v678
      %v680 = vlaneseq
      %v681 = vshrl.u32 %v680, 7
      %v682 = vsub.s32 1, %v681
      %v683 = vrot.slane %v674, %v682
      %v686 = vmul.f32 %v673, %v679
      %v687 = vmul.f32 %v672, %v683
      %688 = vrot.lane.b32.xlu0 %v661, 16
      %v689 = vpop.permute.xlu0 %688
      %690 = vrot.lane.b32.xlu0 %v662, 16
      %v691 = vpop.permute.xlu0 %690
      %vm692 = vcmp.lt.s32.totalorder %v670, 16
      %v693 = vsel %vm692, %v689, %v691
      %v694 = vsel %vm692, %v691, %v689
      %s695 = scalar_lea.vmem %s1, 2
      %v696 = vld [vmem:[%s695] sm:$0x3]
      %v698 = vlaneseq
      %v699 = vshrl.u32 %v698, 7
      %v700 = vsub.s32 0, %v699
      %v701 = vrot.slane %v696, %v700
      %v702 = vlaneseq
      %v703 = vshrl.u32 %v702, 7
      %v704 = vsub.s32 1, %v703
      %v705 = vrot.slane %v696, %v704
      %v708 = vmul.f32 %v694, %v701
      %v709 = vmul.f32 %v693, %v705
      %710 = vrot.lane.b32.xlu0 %v661, 15
      %v711 = vpop.permute.xlu0 %710
      %712 = vrot.lane.b32.xlu0 %v662, 15
      %v713 = vpop.permute.xlu0 %712
      %vm714 = vcmp.lt.s32.totalorder %v670, 15
      %v715 = vsel %vm714, %v711, %v713
      %v716 = vsel %vm714, %v713, %v711
      %s717 = scalar_lea.vmem %s1, 4
      %v718 = vld [vmem:[%s717] sm:$0x3]
      %v720 = vlaneseq
      %v721 = vshrl.u32 %v720, 7
      %v722 = vsub.s32 0, %v721
      %v723 = vrot.slane %v718, %v722
      %v724 = vlaneseq
      %v725 = vshrl.u32 %v724, 7
      %v726 = vsub.s32 1, %v725
      %v727 = vrot.slane %v718, %v726
      %v730 = vmul.f32 %v716, %v723
      %v731 = vmul.f32 %v715, %v727
      %v732 = vld [vmem:[%s4] sm:$0xff]
      %733 = vrot.lane.b32.xlu0 %v661, 1
      %v734 = vpop.permute.xlu0 %733
      %735 = vrot.lane.b32.xlu0 %v662, 1
      %v736 = vpop.permute.xlu0 %735
      %vm737 = vcmp.lt.s32.totalorder %v670, 1
      %v738 = vsel %vm737, %v734, %v736
      %v739 = vsel %vm737, %v736, %v734
      %s740 = scalar_lea.vmem %s1, 6
      %v741 = vld [vmem:[%s740] sm:$0x3]
      %v743 = vlaneseq
      %v744 = vshrl.u32 %v743, 7
      %v745 = vsub.s32 0, %v744
      %v746 = vrot.slane %v741, %v745
      %v747 = vlaneseq
      %v748 = vshrl.u32 %v747, 7
      %v749 = vsub.s32 1, %v748
      %v750 = vrot.slane %v741, %v749
      %v753 = vmul.f32 %v739, %v746
      %v754 = vmul.f32 %v738, %v750
      %755 = vrot.lane.b32.xlu0 %v661, 127
      %v756 = vpop.permute.xlu0 %755
      %757 = vrot.lane.b32.xlu0 %v662, 127
      %v758 = vpop.permute.xlu0 %757
      %vm759 = vcmp.lt.s32.totalorder %v670, 127
      %v760 = vsel %vm759, %v756, %v758
      %v761 = vsel %vm759, %v758, %v756
      %s762 = scalar_lea.vmem %s1, 10
      %v763 = vld [vmem:[%s762] sm:$0x3]
      %v765 = vlaneseq
      %v766 = vshrl.u32 %v765, 7
      %v767 = vsub.s32 0, %v766
      %v768 = vrot.slane %v763, %v767
      %v769 = vlaneseq
      %v770 = vshrl.u32 %v769, 7
      %v771 = vsub.s32 1, %v770
      %v772 = vrot.slane %v763, %v771
      %v775 = vmul.f32 %v760, %v768
      %v776 = vmul.f32 %v761, %v772
      %s777 = scalar_lea.vmem %s4, 8
      %v778 = vld [vmem:[%s777] sm:$0xff]
      %vm779 = vcmask 195584
      %v781 = vsel %vm779, %v778, 0
      %783 = vmatprep.subr.mxu0 %v754
      %784 = vmatpush1.msra.mxu0 %v753
      %785 = vmatprep.subr.mxu0 %v662
      %786 = vmatpush1.msra.mxu0 %v661
      %787 = vmatprep.subr.mxu0 %v776
      %788 = vmatpush1.msra.mxu0 %v775
      %789 = vmatprep.subr.mxu0 0.0
      %790 = vmatpush1.msra.mxu0 0.0
      %791 = vmatprep.subr.mxu0 0.0
      %792 = vmatpush1.msra.mxu0 0.0
      %793 = vmatprep.subr.mxu0 0.0
      %794 = vmatpush1.msra.mxu0 0.0
      %795 = vmatprep.subr.mxu0 0.0
      %796 = vmatpush1.msra.mxu0 0.0
      %797 = vmatprep.subr.mxu0 0.0
      %798 = vmatpush1.msra.mxu0 0.0
      %799 = vmatprep.subr.mxu0 0.0
      %800 = vmatpush1.msra.mxu0 0.0
      %801 = vmatprep.subr.mxu0 0.0
      %802 = vmatpush1.msra.mxu0 0.0
      %803 = vmatprep.subr.mxu0 0.0
      %804 = vmatpush1.msra.mxu0 0.0
      %805 = vmatprep.subr.mxu0 0.0
      %806 = vmatpush1.msra.mxu0 0.0
      %807 = vmatprep.subr.mxu0 0.0
      %808 = vmatpush1.msra.mxu0 0.0
      %809 = vmatprep.subr.mxu0 0.0
      %810 = vmatpush1.msra.mxu0 0.0
      %811 = vmatprep.subr.mxu0 0.0
      %812 = vmatpush1.msra.mxu0 0.0
      %813 = vmatprep.subr.mxu0 0.0
      %814 = vmatpush1.msra.mxu0 0.0
      %815 = vmatprep.subr.mxu0 0.0
      %816 = vmatpush1.msra.mxu0 0.0
      %817 = vmatprep.subr.mxu0 0.0
      %818 = vmatpush1.msra.mxu0 0.0
      %819 = vmatprep.subr.mxu0 0.0
      %820 = vmatpush1.msra.mxu0 0.0
      %821 = vmatprep.subr.mxu0 0.0
      %822 = vmatpush1.msra.mxu0 0.0
      %823 = vmatprep.subr.mxu0 0.0
      %824 = vmatpush1.msra.mxu0 0.0
      %825 = vmatprep.subr.mxu0 0.0
      %826 = vmatpush1.msra.mxu0 0.0
      %827 = vmatprep.subr.mxu0 0.0
      %828 = vmatpush1.msra.mxu0 0.0
      %829 = vmatprep.subr.mxu0 0.0
      %830 = vmatpush1.msra.mxu0 0.0
      %831 = vmatprep.subr.mxu0 0.0
      %832 = vmatpush1.msra.mxu0 0.0
      %833 = vmatprep.subr.mxu0 0.0
      %834 = vmatpush1.msra.mxu0 0.0
      %835 = vmatprep.subr.mxu0 0.0
      %836 = vmatpush1.msra.mxu0 0.0
      %837 = vmatprep.subr.mxu0 0.0
      %838 = vmatpush1.msra.mxu0 0.0
      %839 = vmatprep.subr.mxu0 0.0
      %840 = vmatpush1.msra.mxu0 0.0
      %841 = vmatprep.subr.mxu0 0.0
      %842 = vmatpush1.msra.mxu0 0.0
      %843 = vmatprep.subr.mxu0 0.0
      %844 = vmatpush1.msra.mxu0 0.0
      %845 = vmatprep.subr.mxu0 0.0
      %846 = vmatpush1.msra.mxu0 0.0
      %847 = vmatprep.mubr.f32.mxu0 0.0
      %848 = vmatmul.mubr.f32.gmra.mrb[0].mxu0 %v781
      %v849 = vpop.f32.mrb[0].mxu0
      %v850 = vadd.f32 0.0, %v849
      %v851 = vpop.f32.mrb[0].mxu0
      %v852 = vadd.f32 0.0, %v851
      %853 = vdwg.mxu0
      %v855 = vsel %vm779, %v732, 0
      %857 = vmatprep.subr.mxu0 %v687
      %858 = vmatpush1.msra.mxu0 %v686
      %859 = vmatprep.subr.mxu0 %v709
      %860 = vmatpush1.msra.mxu0 %v708
      %861 = vmatprep.subr.mxu0 %v731
      %862 = vmatpush1.msra.mxu0 %v730
      %863 = vmatprep.subr.mxu0 0.0
      %864 = vmatpush1.msra.mxu0 0.0
      %865 = vmatprep.subr.mxu0 0.0
      %866 = vmatpush1.msra.mxu0 0.0
      %867 = vmatprep.subr.mxu0 0.0
      %868 = vmatpush1.msra.mxu0 0.0
      %869 = vmatprep.subr.mxu0 0.0
      %870 = vmatpush1.msra.mxu0 0.0
      %871 = vmatprep.subr.mxu0 0.0
      %872 = vmatpush1.msra.mxu0 0.0
      %873 = vmatprep.subr.mxu0 0.0
      %874 = vmatpush1.msra.mxu0 0.0
      %875 = vmatprep.subr.mxu0 0.0
      %876 = vmatpush1.msra.mxu0 0.0
      %877 = vmatprep.subr.mxu0 0.0
      %878 = vmatpush1.msra.mxu0 0.0
      %879 = vmatprep.subr.mxu0 0.0
      %880 = vmatpush1.msra.mxu0 0.0
      %881 = vmatprep.subr.mxu0 0.0
      %882 = vmatpush1.msra.mxu0 0.0
      %883 = vmatprep.subr.mxu0 0.0
      %884 = vmatpush1.msra.mxu0 0.0
      %885 = vmatprep.subr.mxu0 0.0
      %886 = vmatpush1.msra.mxu0 0.0
      %887 = vmatprep.subr.mxu0 0.0
      %888 = vmatpush1.msra.mxu0 0.0
      %889 = vmatprep.subr.mxu0 0.0
      %890 = vmatpush1.msra.mxu0 0.0
      %891 = vmatprep.subr.mxu0 0.0
      %892 = vmatpush1.msra.mxu0 0.0
      %893 = vmatprep.subr.mxu0 0.0
      %894 = vmatpush1.msra.mxu0 0.0
      %895 = vmatprep.subr.mxu0 0.0
      %896 = vmatpush1.msra.mxu0 0.0
      %897 = vmatprep.subr.mxu0 0.0
      %898 = vmatpush1.msra.mxu0 0.0
      %899 = vmatprep.subr.mxu0 0.0
      %900 = vmatpush1.msra.mxu0 0.0
      %901 = vmatprep.subr.mxu0 0.0
      %902 = vmatpush1.msra.mxu0 0.0
      %903 = vmatprep.subr.mxu0 0.0
      %904 = vmatpush1.msra.mxu0 0.0
      %905 = vmatprep.subr.mxu0 0.0
      %906 = vmatpush1.msra.mxu0 0.0
      %907 = vmatprep.subr.mxu0 0.0
      %908 = vmatpush1.msra.mxu0 0.0
      %909 = vmatprep.subr.mxu0 0.0
      %910 = vmatpush1.msra.mxu0 0.0
      %911 = vmatprep.subr.mxu0 0.0
      %912 = vmatpush1.msra.mxu0 0.0
      %913 = vmatprep.subr.mxu0 0.0
      %914 = vmatpush1.msra.mxu0 0.0
      %915 = vmatprep.subr.mxu0 0.0
      %916 = vmatpush1.msra.mxu0 0.0
      %917 = vmatprep.subr.mxu0 0.0
      %918 = vmatpush1.msra.mxu0 0.0
      %919 = vmatprep.subr.mxu0 0.0
      %920 = vmatpush1.msra.mxu0 0.0
      %921 = vmatprep.mubr.f32.mxu0 0.0
      %922 = vmatmul.mubr.f32.gmra.mrb[0].mxu0 %v855
      %v923 = vpop.f32.mrb[0].mxu0
      %v924 = vadd.f32 %v850, %v923
      %v925 = vpop.f32.mrb[0].mxu0
      %v926 = vadd.f32 %v852, %v925
      %927 = vdwg.mxu0
      %928 = vrot.lane.b32.xlu0 %v661, 113
      %v929 = vpop.permute.xlu0 %928
      %930 = vrot.lane.b32.xlu0 %v662, 113
      %v931 = vpop.permute.xlu0 %930
      %vm932 = vcmp.lt.s32.totalorder %v670, 113
      %v933 = vsel %vm932, %v929, %v931
      %v934 = vsel %vm932, %v931, %v929
      %s935 = scalar_lea.vmem %s1, 12
      %v936 = vld [vmem:[%s935] sm:$0x3]
      %v938 = vlaneseq
      %v939 = vshrl.u32 %v938, 7
      %v940 = vsub.s32 0, %v939
      %v941 = vrot.slane %v936, %v940
      %v942 = vlaneseq
      %v943 = vshrl.u32 %v942, 7
      %v944 = vsub.s32 1, %v943
      %v945 = vrot.slane %v936, %v944
      %v948 = vmul.f32 %v933, %v941
      %v949 = vmul.f32 %v934, %v945
      %950 = vrot.lane.b32.xlu0 %v661, 112
      %v951 = vpop.permute.xlu0 %950
      %952 = vrot.lane.b32.xlu0 %v662, 112
      %v953 = vpop.permute.xlu0 %952
      %vm954 = vcmp.lt.s32.totalorder %v670, 112
      %v955 = vsel %vm954, %v951, %v953
      %v956 = vsel %vm954, %v953, %v951
      %s957 = scalar_lea.vmem %s1, 14
      %v958 = vld [vmem:[%s957] sm:$0x3]
      %v960 = vlaneseq
      %v961 = vshrl.u32 %v960, 7
      %v962 = vsub.s32 0, %v961
      %v963 = vrot.slane %v958, %v962
      %v964 = vlaneseq
      %v965 = vshrl.u32 %v964, 7
      %v966 = vsub.s32 1, %v965
      %v967 = vrot.slane %v958, %v966
      %v970 = vmul.f32 %v955, %v963
      %v971 = vmul.f32 %v956, %v967
      %972 = vrot.lane.b32.xlu0 %v661, 111
      %v973 = vpop.permute.xlu0 %972
      %974 = vrot.lane.b32.xlu0 %v662, 111
      %v975 = vpop.permute.xlu0 %974
      %vm976 = vcmp.lt.s32.totalorder %v670, 111
      %v977 = vsel %vm976, %v973, %v975
      %v978 = vsel %vm976, %v975, %v973
      %s979 = scalar_lea.vmem %s1, 16
      %v980 = vld [vmem:[%s979] sm:$0x3]
      %v982 = vlaneseq
      %v983 = vshrl.u32 %v982, 7
      %v984 = vsub.s32 0, %v983
      %v985 = vrot.slane %v980, %v984
      %v986 = vlaneseq
      %v987 = vshrl.u32 %v986, 7
      %v988 = vsub.s32 1, %v987
      %v989 = vrot.slane %v980, %v988
      %v992 = vmul.f32 %v977, %v985
      %v993 = vmul.f32 %v978, %v989
      %s994 = scalar_lea.vmem %s4, 16
      %v995 = vld [vmem:[%s994] sm:$0xff]
      %v997 = vsel %vm779, %v995, 0
      %999 = vmatprep.subr.mxu0 %v949
      %1000 = vmatpush1.msra.mxu0 %v948
      %1001 = vmatprep.subr.mxu0 %v971
      %1002 = vmatpush1.msra.mxu0 %v970
      %1003 = vmatprep.subr.mxu0 %v993
      %1004 = vmatpush1.msra.mxu0 %v992
      %1005 = vmatprep.subr.mxu0 0.0
      %1006 = vmatpush1.msra.mxu0 0.0
      %1007 = vmatprep.subr.mxu0 0.0
      %1008 = vmatpush1.msra.mxu0 0.0
      %1009 = vmatprep.subr.mxu0 0.0
      %1010 = vmatpush1.msra.mxu0 0.0
      %1011 = vmatprep.subr.mxu0 0.0
      %1012 = vmatpush1.msra.mxu0 0.0
      %1013 = vmatprep.subr.mxu0 0.0
      %1014 = vmatpush1.msra.mxu0 0.0
      %1015 = vmatprep.subr.mxu0 0.0
      %1016 = vmatpush1.msra.mxu0 0.0
      %1017 = vmatprep.subr.mxu0 0.0
      %1018 = vmatpush1.msra.mxu0 0.0
      %1019 = vmatprep.subr.mxu0 0.0
      %1020 = vmatpush1.msra.mxu0 0.0
      %1021 = vmatprep.subr.mxu0 0.0
      %1022 = vmatpush1.msra.mxu0 0.0
      %1023 = vmatprep.subr.mxu0 0.0
      %1024 = vmatpush1.msra.mxu0 0.0
      %1025 = vmatprep.subr.mxu0 0.0
      %1026 = vmatpush1.msra.mxu0 0.0
      %1027 = vmatprep.subr.mxu0 0.0
      %1028 = vmatpush1.msra.mxu0 0.0
      %1029 = vmatprep.subr.mxu0 0.0
      %1030 = vmatpush1.msra.mxu0 0.0
      %1031 = vmatprep.subr.mxu0 0.0
      %1032 = vmatpush1.msra.mxu0 0.0
      %1033 = vmatprep.subr.mxu0 0.0
      %1034 = vmatpush1.msra.mxu0 0.0
      %1035 = vmatprep.subr.mxu0 0.0
      %1036 = vmatpush1.msra.mxu0 0.0
      %1037 = vmatprep.subr.mxu0 0.0
      %1038 = vmatpush1.msra.mxu0 0.0
      %1039 = vmatprep.subr.mxu0 0.0
      %1040 = vmatpush1.msra.mxu0 0.0
      %1041 = vmatprep.subr.mxu0 0.0
      %1042 = vmatpush1.msra.mxu0 0.0
      %1043 = vmatprep.subr.mxu0 0.0
      %1044 = vmatpush1.msra.mxu0 0.0
      %1045 = vmatprep.subr.mxu0 0.0
      %1046 = vmatpush1.msra.mxu0 0.0
      %1047 = vmatprep.subr.mxu0 0.0
      %1048 = vmatpush1.msra.mxu0 0.0
      %1049 = vmatprep.subr.mxu0 0.0
      %1050 = vmatpush1.msra.mxu0 0.0
      %1051 = vmatprep.subr.mxu0 0.0
      %1052 = vmatpush1.msra.mxu0 0.0
      %1053 = vmatprep.subr.mxu0 0.0
      %1054 = vmatpush1.msra.mxu0 0.0
      %1055 = vmatprep.subr.mxu0 0.0
      %1056 = vmatpush1.msra.mxu0 0.0
      %1057 = vmatprep.subr.mxu0 0.0
      %1058 = vmatpush1.msra.mxu0 0.0
      %1059 = vmatprep.subr.mxu0 0.0
      %1060 = vmatpush1.msra.mxu0 0.0
      %1061 = vmatprep.subr.mxu0 0.0
      %1062 = vmatpush1.msra.mxu0 0.0
      %1063 = vmatprep.mubr.f32.mxu0 0.0
      %1064 = vmatmul.mubr.f32.gmra.mrb[0].mxu0 %v997
      %v1065 = vpop.f32.mrb[0].mxu0
      %v1066 = vadd.f32 0.0, %v1065
      %v1067 = vpop.f32.mrb[0].mxu0
      %v1068 = vadd.f32 0.0, %v1067
      %1069 = vdwg.mxu0
      %v1070 = vadd.f32 %v924, %v1066
      %v1071 = vadd.f32 %v926, %v1068
      %v1072 = vld [vmem:[%s5] sm:$0xff]
      %1074 = vset.pattern.permute.xlu0 0
      %1075 = vperm.xlu0 %1074, %v1072
      %v1076 = vpop.permute.xlu0 %1075
      %v1078 = vadd.f32 %v1070, %v1076
      %v1079 = vadd.f32 %v1071, %v1076
      %v1080 = vmax.f32 %v1078, 0.0
      %v1081 = vmax.f32 %v1079, 0.0
      %v1082 = vmin.f32 %v1080, 20.0
      %v1083 = vmin.f32 %v1081, 20.0
      %v1084 = vld [vmem:[%s8] sm:$0x3]
      %v1085 = vld [vmem:[%s9] sm:$0x3]
      %v1087 = vsel %vm573, %v1085, 0
      %1089 = vmatprep.subr.mxu0 %v664
      %1090 = vmatpush1.msra.mxu0 %v663
      %1091 = vmatprep.subr.mxu0 0.0
      %1092 = vmatpush1.msra.mxu0 0.0
      %1093 = vmatprep.subr.mxu0 0.0
      %1094 = vmatpush1.msra.mxu0 0.0
      %1095 = vmatprep.subr.mxu0 0.0
      %1096 = vmatpush1.msra.mxu0 0.0
      %1097 = vmatprep.subr.mxu0 0.0
      %1098 = vmatpush1.msra.mxu0 0.0
      %1099 = vmatprep.subr.mxu0 0.0
      %1100 = vmatpush1.msra.mxu0 0.0
      %1101 = vmatprep.subr.mxu0 0.0
      %1102 = vmatpush1.msra.mxu0 0.0
      %1103 = vmatprep.subr.mxu0 0.0
      %1104 = vmatpush1.msra.mxu0 0.0
      %1105 = vmatprep.subr.mxu0 0.0
      %1106 = vmatpush1.msra.mxu0 0.0
      %1107 = vmatprep.subr.mxu0 0.0
      %1108 = vmatpush1.msra.mxu0 0.0
      %1109 = vmatprep.subr.mxu0 0.0
      %1110 = vmatpush1.msra.mxu0 0.0
      %1111 = vmatprep.subr.mxu0 0.0
      %1112 = vmatpush1.msra.mxu0 0.0
      %1113 = vmatprep.subr.mxu0 0.0
      %1114 = vmatpush1.msra.mxu0 0.0
      %1115 = vmatprep.subr.mxu0 0.0
      %1116 = vmatpush1.msra.mxu0 0.0
      %1117 = vmatprep.subr.mxu0 0.0
      %1118 = vmatpush1.msra.mxu0 0.0
      %1119 = vmatprep.subr.mxu0 0.0
      %1120 = vmatpush1.msra.mxu0 0.0
      %1121 = vmatprep.subr.mxu0 0.0
      %1122 = vmatpush1.msra.mxu0 0.0
      %1123 = vmatprep.subr.mxu0 0.0
      %1124 = vmatpush1.msra.mxu0 0.0
      %1125 = vmatprep.subr.mxu0 0.0
      %1126 = vmatpush1.msra.mxu0 0.0
      %1127 = vmatprep.subr.mxu0 0.0
      %1128 = vmatpush1.msra.mxu0 0.0
      %1129 = vmatprep.subr.mxu0 0.0
      %1130 = vmatpush1.msra.mxu0 0.0
      %1131 = vmatprep.subr.mxu0 0.0
      %1132 = vmatpush1.msra.mxu0 0.0
      %1133 = vmatprep.subr.mxu0 0.0
      %1134 = vmatpush1.msra.mxu0 0.0
      %1135 = vmatprep.subr.mxu0 0.0
      %1136 = vmatpush1.msra.mxu0 0.0
      %1137 = vmatprep.subr.mxu0 0.0
      %1138 = vmatpush1.msra.mxu0 0.0
      %1139 = vmatprep.subr.mxu0 0.0
      %1140 = vmatpush1.msra.mxu0 0.0
      %1141 = vmatprep.subr.mxu0 0.0
      %1142 = vmatpush1.msra.mxu0 0.0
      %1143 = vmatprep.subr.mxu0 0.0
      %1144 = vmatpush1.msra.mxu0 0.0
      %1145 = vmatprep.subr.mxu0 0.0
      %1146 = vmatpush1.msra.mxu0 0.0
      %1147 = vmatprep.subr.mxu0 0.0
      %1148 = vmatpush1.msra.mxu0 0.0
      %1149 = vmatprep.subr.mxu0 0.0
      %1150 = vmatpush1.msra.mxu0 0.0
      %1151 = vmatprep.subr.mxu0 0.0
      %1152 = vmatpush1.msra.mxu0 0.0
      %1153 = vmatprep.mubr.f32.mxu0 0.0
      %1154 = vmatmul.mubr.f32.gmra.mrb[0].mxu0 %v1087
      %v1155 = vpop.f32.mrb[0].mxu0
      %v1156 = vadd.f32 0.0, %v1155
      %v1157 = vpop.f32.mrb[0].mxu0
      %v1158 = vadd.f32 0.0, %v1157
      %1159 = vdwg.mxu0
      %v1161 = vsel %vm573, %v1084, 0
      %1163 = vmatprep.subr.mxu0 %v1083
      %1164 = vmatpush1.msra.mxu0 %v1082
      %1165 = vmatprep.subr.mxu0 0.0
      %1166 = vmatpush1.msra.mxu0 0.0
      %1167 = vmatprep.subr.mxu0 0.0
      %1168 = vmatpush1.msra.mxu0 0.0
      %1169 = vmatprep.subr.mxu0 0.0
      %1170 = vmatpush1.msra.mxu0 0.0
      %1171 = vmatprep.subr.mxu0 0.0
      %1172 = vmatpush1.msra.mxu0 0.0
      %1173 = vmatprep.subr.mxu0 0.0
      %1174 = vmatpush1.msra.mxu0 0.0
      %1175 = vmatprep.subr.mxu0 0.0
      %1176 = vmatpush1.msra.mxu0 0.0
      %1177 = vmatprep.subr.mxu0 0.0
      %1178 = vmatpush1.msra.mxu0 0.0
      %1179 = vmatprep.subr.mxu0 0.0
      %1180 = vmatpush1.msra.mxu0 0.0
      %1181 = vmatprep.subr.mxu0 0.0
      %1182 = vmatpush1.msra.mxu0 0.0
      %1183 = vmatprep.subr.mxu0 0.0
      %1184 = vmatpush1.msra.mxu0 0.0
      %1185 = vmatprep.subr.mxu0 0.0
      %1186 = vmatpush1.msra.mxu0 0.0
      %1187 = vmatprep.subr.mxu0 0.0
      %1188 = vmatpush1.msra.mxu0 0.0
      %1189 = vmatprep.subr.mxu0 0.0
      %1190 = vmatpush1.msra.mxu0 0.0
      %1191 = vmatprep.subr.mxu0 0.0
      %1192 = vmatpush1.msra.mxu0 0.0
      %1193 = vmatprep.subr.mxu0 0.0
      %1194 = vmatpush1.msra.mxu0 0.0
      %1195 = vmatprep.subr.mxu0 0.0
      %1196 = vmatpush1.msra.mxu0 0.0
      %1197 = vmatprep.subr.mxu0 0.0
      %1198 = vmatpush1.msra.mxu0 0.0
      %1199 = vmatprep.subr.mxu0 0.0
      %1200 = vmatpush1.msra.mxu0 0.0
      %1201 = vmatprep.subr.mxu0 0.0
      %1202 = vmatpush1.msra.mxu0 0.0
      %1203 = vmatprep.subr.mxu0 0.0
      %1204 = vmatpush1.msra.mxu0 0.0
      %1205 = vmatprep.subr.mxu0 0.0
      %1206 = vmatpush1.msra.mxu0 0.0
      %1207 = vmatprep.subr.mxu0 0.0
      %1208 = vmatpush1.msra.mxu0 0.0
      %1209 = vmatprep.subr.mxu0 0.0
      %1210 = vmatpush1.msra.mxu0 0.0
      %1211 = vmatprep.subr.mxu0 0.0
      %1212 = vmatpush1.msra.mxu0 0.0
      %1213 = vmatprep.subr.mxu0 0.0
      %1214 = vmatpush1.msra.mxu0 0.0
      %1215 = vmatprep.subr.mxu0 0.0
      %1216 = vmatpush1.msra.mxu0 0.0
      %1217 = vmatprep.subr.mxu0 0.0
      %1218 = vmatpush1.msra.mxu0 0.0
      %1219 = vmatprep.subr.mxu0 0.0
      %1220 = vmatpush1.msra.mxu0 0.0
      %1221 = vmatprep.subr.mxu0 0.0
      %1222 = vmatpush1.msra.mxu0 0.0
      %1223 = vmatprep.subr.mxu0 0.0
      %1224 = vmatpush1.msra.mxu0 0.0
      %1225 = vmatprep.subr.mxu0 0.0
      %1226 = vmatpush1.msra.mxu0 0.0
      %1227 = vmatprep.mubr.f32.mxu0 0.0
      %1228 = vmatmul.mubr.f32.gmra.mrb[0].mxu0 %v1161
      %v1229 = vpop.f32.mrb[0].mxu0
      %v1230 = vadd.f32 %v1156, %v1229
      %v1231 = vpop.f32.mrb[0].mxu0
      %v1232 = vadd.f32 %v1158, %v1231
      %1233 = vdwg.mxu0
      %v1234 = vld [vmem:[%s10] sm:$0x3]
      %1236 = vset.pattern.permute.xlu0 0
      %1237 = vperm.xlu0 %1236, %v1234
      %v1238 = vpop.permute.xlu0 %1237
      %v1240 = vadd.f32 %v1230, %v1238
      %v1241 = vadd.f32 %v1232, %v1238
      %v1242 = vxor.u32 %v1240, 2147483648
      %v1243 = vxor.u32 %v1241, 2147483648
      %v1244 = vmul.f32 %v1242, 1.442695
      %v1245 = vpow.pop %v1244
      %v1246 = vmul.f32 %v1243, 1.442695
      %v1247 = vpow.pop %v1246
      %v1248 = vadd.f32 %v1245, 1.0
      %v1249 = vadd.f32 %v1247, 1.0
      %v1250 = vrcp.pop %v1248
      %v1251 = vmul.f32 1.0, %v1250
      %v1252 = vrcp.pop %v1249
      %v1253 = vmul.f32 1.0, %v1252
      %v1254 = vmul.f32 %v1240, %v1251
      %v1255 = vmul.f32 %v1241, %v1253
      %v1256 = vld [vmem:[%s11] sm:$0xff]
      %v1257 = vld [vmem:[%s12] sm:$0xff]
      %1259 = vset.pattern.permute.xlu0 0
      %1260 = vperm.xlu0 %1259, %v1257
      %v1261 = vpop.permute.xlu0 %1260
      %vm1263 = vcmask 15360
      %v1265 = vsel %vm1263, %v1256, 0
      %vm1267 = vcmask 1041408
      %v1269 = vsel %vm1267, %v1254, 0
      %v1272 = vsel %vm1267, %v1255, 0
      %1274 = vmatprep.subr.mxu0 %v1272
      %1275 = vmatpush1.msra.mxu0 %v1269
      %1276 = vmatprep.subr.mxu0 0.0
      %1277 = vmatpush1.msra.mxu0 0.0
      %1278 = vmatprep.subr.mxu0 0.0
      %1279 = vmatpush1.msra.mxu0 0.0
      %1280 = vmatprep.subr.mxu0 0.0
      %1281 = vmatpush1.msra.mxu0 0.0
      %1282 = vmatprep.subr.mxu0 0.0
      %1283 = vmatpush1.msra.mxu0 0.0
      %1284 = vmatprep.subr.mxu0 0.0
      %1285 = vmatpush1.msra.mxu0 0.0
      %1286 = vmatprep.subr.mxu0 0.0
      %1287 = vmatpush1.msra.mxu0 0.0
      %1288 = vmatprep.subr.mxu0 0.0
      %1289 = vmatpush1.msra.mxu0 0.0
      %1290 = vmatprep.subr.mxu0 0.0
      %1291 = vmatpush1.msra.mxu0 0.0
      %1292 = vmatprep.subr.mxu0 0.0
      %1293 = vmatpush1.msra.mxu0 0.0
      %1294 = vmatprep.subr.mxu0 0.0
      %1295 = vmatpush1.msra.mxu0 0.0
      %1296 = vmatprep.subr.mxu0 0.0
      %1297 = vmatpush1.msra.mxu0 0.0
      %1298 = vmatprep.subr.mxu0 0.0
      %1299 = vmatpush1.msra.mxu0 0.0
      %1300 = vmatprep.subr.mxu0 0.0
      %1301 = vmatpush1.msra.mxu0 0.0
      %1302 = vmatprep.subr.mxu0 0.0
      %1303 = vmatpush1.msra.mxu0 0.0
      %1304 = vmatprep.subr.mxu0 0.0
      %1305 = vmatpush1.msra.mxu0 0.0
      %1306 = vmatprep.subr.mxu0 0.0
      %1307 = vmatpush1.msra.mxu0 0.0
      %1308 = vmatprep.subr.mxu0 0.0
      %1309 = vmatpush1.msra.mxu0 0.0
      %1310 = vmatprep.subr.mxu0 0.0
      %1311 = vmatpush1.msra.mxu0 0.0
      %1312 = vmatprep.subr.mxu0 0.0
      %1313 = vmatpush1.msra.mxu0 0.0
      %1314 = vmatprep.subr.mxu0 0.0
      %1315 = vmatpush1.msra.mxu0 0.0
      %1316 = vmatprep.subr.mxu0 0.0
      %1317 = vmatpush1.msra.mxu0 0.0
      %1318 = vmatprep.subr.mxu0 0.0
      %1319 = vmatpush1.msra.mxu0 0.0
      %1320 = vmatprep.subr.mxu0 0.0
      %1321 = vmatpush1.msra.mxu0 0.0
      %1322 = vmatprep.subr.mxu0 0.0
      %1323 = vmatpush1.msra.mxu0 0.0
      %1324 = vmatprep.subr.mxu0 0.0
      %1325 = vmatpush1.msra.mxu0 0.0
      %1326 = vmatprep.subr.mxu0 0.0
      %1327 = vmatpush1.msra.mxu0 0.0
      %1328 = vmatprep.subr.mxu0 0.0
      %1329 = vmatpush1.msra.mxu0 0.0
      %1330 = vmatprep.subr.mxu0 0.0
      %1331 = vmatpush1.msra.mxu0 0.0
      %1332 = vmatprep.subr.mxu0 0.0
      %1333 = vmatpush1.msra.mxu0 0.0
      %1334 = vmatprep.subr.mxu0 0.0
      %1335 = vmatpush1.msra.mxu0 0.0
      %1336 = vmatprep.subr.mxu0 0.0
      %1337 = vmatpush1.msra.mxu0 0.0
      %1338 = vmatprep.mubr.f32.mxu0 0.0
      %1339 = vmatmul.mubr.f32.gmra.mrb[0].mxu0 %v1265
      %v1340 = vpop.f32.mrb[0].mxu0
      %v1341 = vadd.f32 %v1261, %v1340
      %v1342 = vpop.f32.mrb[0].mxu0
      %v1343 = vadd.f32 %v1261, %v1342
      %1344 = vdwg.mxu0
      %v1345 = vtanh.pop %v1341
      %v1346 = vtanh.pop %v1343
      %v1347 = vadd.f32 %v1345, 1.0
      %v1348 = vadd.f32 %v1346, 1.0
      %v1349 = vmul.f32 %v1082, %v1347
      %v1350 = vmul.f32 %v1083, %v1348
      %v1351 = vsub.f32 2.0, %v1347
      %v1352 = vsub.f32 2.0, %v1348
      %v1353 = vmul.f32 %v663, %v1351
      %v1354 = vmul.f32 %v664, %v1352
      %v1355 = vadd.f32 %v1349, %v1353
      %v1356 = vadd.f32 %v1350, %v1354
      %1357 = vrot.lane.b32.xlu0 %v1355, 17
      %v1358 = vpop.permute.xlu0 %1357
      %1359 = vrot.lane.b32.xlu0 %v1356, 17
      %v1360 = vpop.permute.xlu0 %1359
      %v1361 = vsel %vm671, %v1358, %v1360
      %v1362 = vsel %vm671, %v1360, %v1358
      %v1363 = vmul.f32 %v1362, %v679
      %v1364 = vmul.f32 %v1361, %v683
      %1365 = vrot.lane.b32.xlu0 %v1355, 16
      %v1366 = vpop.permute.xlu0 %1365
      %1367 = vrot.lane.b32.xlu0 %v1356, 16
      %v1368 = vpop.permute.xlu0 %1367
      %v1369 = vsel %vm692, %v1366, %v1368
      %v1370 = vsel %vm692, %v1368, %v1366
      %v1371 = vmul.f32 %v1370, %v701
      %v1372 = vmul.f32 %v1369, %v705
      %1373 = vrot.lane.b32.xlu0 %v1355, 15
      %v1374 = vpop.permute.xlu0 %1373
      %1375 = vrot.lane.b32.xlu0 %v1356, 15
      %v1376 = vpop.permute.xlu0 %1375
      %v1377 = vsel %vm714, %v1374, %v1376
      %v1378 = vsel %vm714, %v1376, %v1374
      %v1379 = vmul.f32 %v1378, %v723
      %v1380 = vmul.f32 %v1377, %v727
      %v1381 = vld [vmem:[%s6] sm:$0xff]
      %1382 = vrot.lane.b32.xlu0 %v1355, 1
      %v1383 = vpop.permute.xlu0 %1382
      %1384 = vrot.lane.b32.xlu0 %v1356, 1
      %v1385 = vpop.permute.xlu0 %1384
      %v1386 = vsel %vm737, %v1383, %v1385
      %v1387 = vsel %vm737, %v1385, %v1383
      %v1388 = vmul.f32 %v1387, %v746
      %v1389 = vmul.f32 %v1386, %v750
      %1390 = vrot.lane.b32.xlu0 %v1355, 127
      %v1391 = vpop.permute.xlu0 %1390
      %1392 = vrot.lane.b32.xlu0 %v1356, 127
      %v1393 = vpop.permute.xlu0 %1392
      %v1394 = vsel %vm759, %v1391, %v1393
      %v1395 = vsel %vm759, %v1393, %v1391
      %v1396 = vmul.f32 %v1394, %v768
      %v1397 = vmul.f32 %v1395, %v772
      %s1398 = scalar_lea.vmem %s6, 8
      %v1399 = vld [vmem:[%s1398] sm:$0xff]
      %v1401 = vsel %vm779, %v1399, 0
      %1403 = vmatprep.subr.mxu0 %v1389
      %1404 = vmatpush1.msra.mxu0 %v1388
      %1405 = vmatprep.subr.mxu0 %v1356
      %1406 = vmatpush1.msra.mxu0 %v1355
      %1407 = vmatprep.subr.mxu0 %v1397
      %1408 = vmatpush1.msra.mxu0 %v1396
      %1409 = vmatprep.subr.mxu0 0.0
      %1410 = vmatpush1.msra.mxu0 0.0
      %1411 = vmatprep.subr.mxu0 0.0
      %1412 = vmatpush1.msra.mxu0 0.0
      %1413 = vmatprep.subr.mxu0 0.0
      %1414 = vmatpush1.msra.mxu0 0.0
      %1415 = vmatprep.subr.mxu0 0.0
      %1416 = vmatpush1.msra.mxu0 0.0
      %1417 = vmatprep.subr.mxu0 0.0
      %1418 = vmatpush1.msra.mxu0 0.0
      %1419 = vmatprep.subr.mxu0 0.0
      %1420 = vmatpush1.msra.mxu0 0.0
      %1421 = vmatprep.subr.mxu0 0.0
      %1422 = vmatpush1.msra.mxu0 0.0
      %1423 = vmatprep.subr.mxu0 0.0
      %1424 = vmatpush1.msra.mxu0 0.0
      %1425 = vmatprep.subr.mxu0 0.0
      %1426 = vmatpush1.msra.mxu0 0.0
      %1427 = vmatprep.subr.mxu0 0.0
      %1428 = vmatpush1.msra.mxu0 0.0
      %1429 = vmatprep.subr.mxu0 0.0
      %1430 = vmatpush1.msra.mxu0 0.0
      %1431 = vmatprep.subr.mxu0 0.0
      %1432 = vmatpush1.msra.mxu0 0.0
      %1433 = vmatprep.subr.mxu0 0.0
      %1434 = vmatpush1.msra.mxu0 0.0
      %1435 = vmatprep.subr.mxu0 0.0
      %1436 = vmatpush1.msra.mxu0 0.0
      %1437 = vmatprep.subr.mxu0 0.0
      %1438 = vmatpush1.msra.mxu0 0.0
      %1439 = vmatprep.subr.mxu0 0.0
      %1440 = vmatpush1.msra.mxu0 0.0
      %1441 = vmatprep.subr.mxu0 0.0
      %1442 = vmatpush1.msra.mxu0 0.0
      %1443 = vmatprep.subr.mxu0 0.0
      %1444 = vmatpush1.msra.mxu0 0.0
      %1445 = vmatprep.subr.mxu0 0.0
      %1446 = vmatpush1.msra.mxu0 0.0
      %1447 = vmatprep.subr.mxu0 0.0
      %1448 = vmatpush1.msra.mxu0 0.0
      %1449 = vmatprep.subr.mxu0 0.0
      %1450 = vmatpush1.msra.mxu0 0.0
      %1451 = vmatprep.subr.mxu0 0.0
      %1452 = vmatpush1.msra.mxu0 0.0
      %1453 = vmatprep.subr.mxu0 0.0
      %1454 = vmatpush1.msra.mxu0 0.0
      %1455 = vmatprep.subr.mxu0 0.0
      %1456 = vmatpush1.msra.mxu0 0.0
      %1457 = vmatprep.subr.mxu0 0.0
      %1458 = vmatpush1.msra.mxu0 0.0
      %1459 = vmatprep.subr.mxu0 0.0
      %1460 = vmatpush1.msra.mxu0 0.0
      %1461 = vmatprep.subr.mxu0 0.0
      %1462 = vmatpush1.msra.mxu0 0.0
      %1463 = vmatprep.subr.mxu0 0.0
      %1464 = vmatpush1.msra.mxu0 0.0
      %1465 = vmatprep.subr.mxu0 0.0
      %1466 = vmatpush1.msra.mxu0 0.0
      %1467 = vmatprep.mubr.f32.mxu0 0.0
      %1468 = vmatmul.mubr.f32.gmra.mrb[0].mxu0 %v1401
      %v1469 = vpop.f32.mrb[0].mxu0
      %v1470 = vadd.f32 0.0, %v1469
      %v1471 = vpop.f32.mrb[0].mxu0
      %v1472 = vadd.f32 0.0, %v1471
      %1473 = vdwg.mxu0
      %v1475 = vsel %vm779, %v1381, 0
      %1477 = vmatprep.subr.mxu0 %v1364
      %1478 = vmatpush1.msra.mxu0 %v1363
      %1479 = vmatprep.subr.mxu0 %v1372
      %1480 = vmatpush1.msra.mxu0 %v1371
      %1481 = vmatprep.subr.mxu0 %v1380
      %1482 = vmatpush1.msra.mxu0 %v1379
      %1483 = vmatprep.subr.mxu0 0.0
      %1484 = vmatpush1.msra.mxu0 0.0
      %1485 = vmatprep.subr.mxu0 0.0
      %1486 = vmatpush1.msra.mxu0 0.0
      %1487 = vmatprep.subr.mxu0 0.0
      %1488 = vmatpush1.msra.mxu0 0.0
      %1489 = vmatprep.subr.mxu0 0.0
      %1490 = vmatpush1.msra.mxu0 0.0
      %1491 = vmatprep.subr.mxu0 0.0
      %1492 = vmatpush1.msra.mxu0 0.0
      %1493 = vmatprep.subr.mxu0 0.0
      %1494 = vmatpush1.msra.mxu0 0.0
      %1495 = vmatprep.subr.mxu0 0.0
      %1496 = vmatpush1.msra.mxu0 0.0
      %1497 = vmatprep.subr.mxu0 0.0
      %1498 = vmatpush1.msra.mxu0 0.0
      %1499 = vmatprep.subr.mxu0 0.0
      %1500 = vmatpush1.msra.mxu0 0.0
      %1501 = vmatprep.subr.mxu0 0.0
      %1502 = vmatpush1.msra.mxu0 0.0
      %1503 = vmatprep.subr.mxu0 0.0
      %1504 = vmatpush1.msra.mxu0 0.0
      %1505 = vmatprep.subr.mxu0 0.0
      %1506 = vmatpush1.msra.mxu0 0.0
      %1507 = vmatprep.subr.mxu0 0.0
      %1508 = vmatpush1.msra.mxu0 0.0
      %1509 = vmatprep.subr.mxu0 0.0
      %1510 = vmatpush1.msra.mxu0 0.0
      %1511 = vmatprep.subr.mxu0 0.0
      %1512 = vmatpush1.msra.mxu0 0.0
      %1513 = vmatprep.subr.mxu0 0.0
      %1514 = vmatpush1.msra.mxu0 0.0
      %1515 = vmatprep.subr.mxu0 0.0
      %1516 = vmatpush1.msra.mxu0 0.0
      %1517 = vmatprep.subr.mxu0 0.0
      %1518 = vmatpush1.msra.mxu0 0.0
      %1519 = vmatprep.subr.mxu0 0.0
      %1520 = vmatpush1.msra.mxu0 0.0
      %1521 = vmatprep.subr.mxu0 0.0
      %1522 = vmatpush1.msra.mxu0 0.0
      %1523 = vmatprep.subr.mxu0 0.0
      %1524 = vmatpush1.msra.mxu0 0.0
      %1525 = vmatprep.subr.mxu0 0.0
      %1526 = vmatpush1.msra.mxu0 0.0
      %1527 = vmatprep.subr.mxu0 0.0
      %1528 = vmatpush1.msra.mxu0 0.0
      %1529 = vmatprep.subr.mxu0 0.0
      %1530 = vmatpush1.msra.mxu0 0.0
      %1531 = vmatprep.subr.mxu0 0.0
      %1532 = vmatpush1.msra.mxu0 0.0
      %1533 = vmatprep.subr.mxu0 0.0
      %1534 = vmatpush1.msra.mxu0 0.0
      %1535 = vmatprep.subr.mxu0 0.0
      %1536 = vmatpush1.msra.mxu0 0.0
      %1537 = vmatprep.subr.mxu0 0.0
      %1538 = vmatpush1.msra.mxu0 0.0
      %1539 = vmatprep.subr.mxu0 0.0
      %1540 = vmatpush1.msra.mxu0 0.0
      %1541 = vmatprep.mubr.f32.mxu0 0.0
      %1542 = vmatmul.mubr.f32.gmra.mrb[0].mxu0 %v1475
      %v1543 = vpop.f32.mrb[0].mxu0
      %v1544 = vadd.f32 %v1470, %v1543
      %v1545 = vpop.f32.mrb[0].mxu0
      %v1546 = vadd.f32 %v1472, %v1545
      %1547 = vdwg.mxu0
      %1548 = vrot.lane.b32.xlu0 %v1355, 113
      %v1549 = vpop.permute.xlu0 %1548
      %1550 = vrot.lane.b32.xlu0 %v1356, 113
      %v1551 = vpop.permute.xlu0 %1550
      %v1552 = vsel %vm932, %v1549, %v1551
      %v1553 = vsel %vm932, %v1551, %v1549
      %v1554 = vmul.f32 %v1552, %v941
      %v1555 = vmul.f32 %v1553, %v945
      %1556 = vrot.lane.b32.xlu0 %v1355, 112
      %v1557 = vpop.permute.xlu0 %1556
      %1558 = vrot.lane.b32.xlu0 %v1356, 112
      %v1559 = vpop.permute.xlu0 %1558
      %v1560 = vsel %vm954, %v1557, %v1559
      %v1561 = vsel %vm954, %v1559, %v1557
      %v1562 = vmul.f32 %v1560, %v963
      %v1563 = vmul.f32 %v1561, %v967
      %1564 = vrot.lane.b32.xlu0 %v1355, 111
      %v1565 = vpop.permute.xlu0 %1564
      %1566 = vrot.lane.b32.xlu0 %v1356, 111
      %v1567 = vpop.permute.xlu0 %1566
      %v1568 = vsel %vm976, %v1565, %v1567
      %v1569 = vsel %vm976, %v1567, %v1565
      %v1570 = vmul.f32 %v1568, %v985
      %v1571 = vmul.f32 %v1569, %v989
      %s1572 = scalar_lea.vmem %s6, 16
      %v1573 = vld [vmem:[%s1572] sm:$0xff]
      %v1575 = vsel %vm779, %v1573, 0
      %1577 = vmatprep.subr.mxu0 %v1555
      %1578 = vmatpush1.msra.mxu0 %v1554
      %1579 = vmatprep.subr.mxu0 %v1563
      %1580 = vmatpush1.msra.mxu0 %v1562
      %1581 = vmatprep.subr.mxu0 %v1571
      %1582 = vmatpush1.msra.mxu0 %v1570
      %1583 = vmatprep.subr.mxu0 0.0
      %1584 = vmatpush1.msra.mxu0 0.0
      %1585 = vmatprep.subr.mxu0 0.0
      %1586 = vmatpush1.msra.mxu0 0.0
      %1587 = vmatprep.subr.mxu0 0.0
      %1588 = vmatpush1.msra.mxu0 0.0
      %1589 = vmatprep.subr.mxu0 0.0
      %1590 = vmatpush1.msra.mxu0 0.0
      %1591 = vmatprep.subr.mxu0 0.0
      %1592 = vmatpush1.msra.mxu0 0.0
      %1593 = vmatprep.subr.mxu0 0.0
      %1594 = vmatpush1.msra.mxu0 0.0
      %1595 = vmatprep.subr.mxu0 0.0
      %1596 = vmatpush1.msra.mxu0 0.0
      %1597 = vmatprep.subr.mxu0 0.0
      %1598 = vmatpush1.msra.mxu0 0.0
      %1599 = vmatprep.subr.mxu0 0.0
      %1600 = vmatpush1.msra.mxu0 0.0
      %1601 = vmatprep.subr.mxu0 0.0
      %1602 = vmatpush1.msra.mxu0 0.0
      %1603 = vmatprep.subr.mxu0 0.0
      %1604 = vmatpush1.msra.mxu0 0.0
      %1605 = vmatprep.subr.mxu0 0.0
      %1606 = vmatpush1.msra.mxu0 0.0
      %1607 = vmatprep.subr.mxu0 0.0
      %1608 = vmatpush1.msra.mxu0 0.0
      %1609 = vmatprep.subr.mxu0 0.0
      %1610 = vmatpush1.msra.mxu0 0.0
      %1611 = vmatprep.subr.mxu0 0.0
      %1612 = vmatpush1.msra.mxu0 0.0
      %1613 = vmatprep.subr.mxu0 0.0
      %1614 = vmatpush1.msra.mxu0 0.0
      %1615 = vmatprep.subr.mxu0 0.0
      %1616 = vmatpush1.msra.mxu0 0.0
      %1617 = vmatprep.subr.mxu0 0.0
      %1618 = vmatpush1.msra.mxu0 0.0
      %1619 = vmatprep.subr.mxu0 0.0
      %1620 = vmatpush1.msra.mxu0 0.0
      %1621 = vmatprep.subr.mxu0 0.0
      %1622 = vmatpush1.msra.mxu0 0.0
      %1623 = vmatprep.subr.mxu0 0.0
      %1624 = vmatpush1.msra.mxu0 0.0
      %1625 = vmatprep.subr.mxu0 0.0
      %1626 = vmatpush1.msra.mxu0 0.0
      %1627 = vmatprep.subr.mxu0 0.0
      %1628 = vmatpush1.msra.mxu0 0.0
      %1629 = vmatprep.subr.mxu0 0.0
      %1630 = vmatpush1.msra.mxu0 0.0
      %1631 = vmatprep.subr.mxu0 0.0
      %1632 = vmatpush1.msra.mxu0 0.0
      %1633 = vmatprep.subr.mxu0 0.0
      %1634 = vmatpush1.msra.mxu0 0.0
      %1635 = vmatprep.subr.mxu0 0.0
      %1636 = vmatpush1.msra.mxu0 0.0
      %1637 = vmatprep.subr.mxu0 0.0
      %1638 = vmatpush1.msra.mxu0 0.0
      %1639 = vmatprep.subr.mxu0 0.0
      %1640 = vmatpush1.msra.mxu0 0.0
      %1641 = vmatprep.mubr.f32.mxu0 0.0
      %1642 = vmatmul.mubr.f32.gmra.mrb[0].mxu0 %v1575
      %v1643 = vpop.f32.mrb[0].mxu0
      %v1644 = vadd.f32 0.0, %v1643
      %v1645 = vpop.f32.mrb[0].mxu0
      %v1646 = vadd.f32 0.0, %v1645
      %1647 = vdwg.mxu0
      %v1648 = vadd.f32 %v1544, %v1644
      %v1649 = vadd.f32 %v1546, %v1646
      %v1650 = vld [vmem:[%s7] sm:$0xff]
      %1652 = vset.pattern.permute.xlu0 0
      %1653 = vperm.xlu0 %1652, %v1650
      %v1654 = vpop.permute.xlu0 %1653
      %v1656 = vadd.f32 %v1648, %v1654
      %v1657 = vadd.f32 %v1649, %v1654
      %v1658 = vmax.f32 %v1656, 0.0
      %v1659 = vmax.f32 %v1657, 0.0
      %v1660 = vmin.f32 %v1658, 20.0
      %v1661 = vmin.f32 %v1659, 20.0
      %v1662 = vld [vmem:[%s13] sm:$0xff]
      %v1663 = vld [vmem:[%s13 + $0x8] sm:$0xff]
      %v1664 = vld [vmem:[%s14] sm:$0xff]
      %v1665 = vld [vmem:[%s14 + $0x8] sm:$0xff]
      %1667 = vset.pattern.permute.xlu0 0
      %1668 = vperm.xlu0 %1667, %v1664
      %v1669 = vpop.permute.xlu0 %1668
      %1672 = vset.pattern.permute.xlu0 0
      %1673 = vperm.xlu0 %1672, %v1665
      %v1674 = vpop.permute.xlu0 %1673
      %vm1676 = vcmask 130048
      %v1678 = vsel %vm1676, %v1662, 0
      %v1681 = vsel %vm1676, %v1663, 0
      %1683 = vmatprep.subr.mxu0 %v1083
      %1684 = vmatpush1.msra.mxu0 %v1082
      %1685 = vmatprep.subr.mxu0 %v1661
      %1686 = vmatpush1.msra.mxu0 %v1660
      %1687 = vmatprep.subr.mxu0 0.0
      %1688 = vmatpush1.msra.mxu0 0.0
      %1689 = vmatprep.subr.mxu0 0.0
      %1690 = vmatpush1.msra.mxu0 0.0
      %1691 = vmatprep.subr.mxu0 0.0
      %1692 = vmatpush1.msra.mxu0 0.0
      %1693 = vmatprep.subr.mxu0 0.0
      %1694 = vmatpush1.msra.mxu0 0.0
      %1695 = vmatprep.subr.mxu0 0.0
      %1696 = vmatpush1.msra.mxu0 0.0
      %1697 = vmatprep.subr.mxu0 0.0
      %1698 = vmatpush1.msra.mxu0 0.0
      %1699 = vmatprep.subr.mxu0 0.0
      %1700 = vmatpush1.msra.mxu0 0.0
      %1701 = vmatprep.subr.mxu0 0.0
      %1702 = vmatpush1.msra.mxu0 0.0
      %1703 = vmatprep.subr.mxu0 0.0
      %1704 = vmatpush1.msra.mxu0 0.0
      %1705 = vmatprep.subr.mxu0 0.0
      %1706 = vmatpush1.msra.mxu0 0.0
      %1707 = vmatprep.subr.mxu0 0.0
      %1708 = vmatpush1.msra.mxu0 0.0
      %1709 = vmatprep.subr.mxu0 0.0
      %1710 = vmatpush1.msra.mxu0 0.0
      %1711 = vmatprep.subr.mxu0 0.0
      %1712 = vmatpush1.msra.mxu0 0.0
      %1713 = vmatprep.subr.mxu0 0.0
      %1714 = vmatpush1.msra.mxu0 0.0
      %1715 = vmatprep.subr.mxu0 0.0
      %1716 = vmatpush1.msra.mxu0 0.0
      %1717 = vmatprep.subr.mxu0 0.0
      %1718 = vmatpush1.msra.mxu0 0.0
      %1719 = vmatprep.subr.mxu0 0.0
      %1720 = vmatpush1.msra.mxu0 0.0
      %1721 = vmatprep.subr.mxu0 0.0
      %1722 = vmatpush1.msra.mxu0 0.0
      %1723 = vmatprep.subr.mxu0 0.0
      %1724 = vmatpush1.msra.mxu0 0.0
      %1725 = vmatprep.subr.mxu0 0.0
      %1726 = vmatpush1.msra.mxu0 0.0
      %1727 = vmatprep.subr.mxu0 0.0
      %1728 = vmatpush1.msra.mxu0 0.0
      %1729 = vmatprep.subr.mxu0 0.0
      %1730 = vmatpush1.msra.mxu0 0.0
      %1731 = vmatprep.subr.mxu0 0.0
      %1732 = vmatpush1.msra.mxu0 0.0
      %1733 = vmatprep.subr.mxu0 0.0
      %1734 = vmatpush1.msra.mxu0 0.0
      %1735 = vmatprep.subr.mxu0 0.0
      %1736 = vmatpush1.msra.mxu0 0.0
      %1737 = vmatprep.subr.mxu0 0.0
      %1738 = vmatpush1.msra.mxu0 0.0
      %1739 = vmatprep.subr.mxu0 0.0
      %1740 = vmatpush1.msra.mxu0 0.0
      %1741 = vmatprep.subr.mxu0 0.0
      %1742 = vmatpush1.msra.mxu0 0.0
      %1743 = vmatprep.subr.mxu0 0.0
      %1744 = vmatpush1.msra.mxu0 0.0
      %1745 = vmatprep.subr.mxu0 0.0
      %1746 = vmatpush1.msra.mxu0 0.0
      %1747 = vmatprep.mubr.f32.mxu0 0.0
      %1748 = vmatmul.mubr.f32.gmra.mrb[0].mxu0 %v1678
      %v1749 = vpop.f32.mrb[0].mxu0
      %v1750 = vadd.f32 %v1669, %v1749
      %v1751 = vpop.f32.mrb[0].mxu0
      %v1752 = vadd.f32 %v1669, %v1751
      %1753 = vmatprep.mubr.f32.mxu0 0.0
      %1754 = vmatmul.mubr.f32.gmra.mrb[0].mxu0 %v1681
      %v1755 = vpop.f32.mrb[0].mxu0
      %v1756 = vadd.f32 %v1674, %v1755
      %v1757 = vpop.f32.mrb[0].mxu0
      %v1758 = vadd.f32 %v1674, %v1757
      %1759 = vdwg.mxu0
      %v1760 = vld [vmem:[%s15] sm:$0xff]
      %v1761 = vld [vmem:[%s15 + $0x8] sm:$0xff]
      %v1762 = vld [vmem:[%s16] sm:$0xff]
      %v1763 = vld [vmem:[%s16 + $0x8] sm:$0xff]
      %1765 = vset.pattern.permute.xlu0 0
      %1766 = vperm.xlu0 %1765, %v1762
      %v1767 = vpop.permute.xlu0 %1766
      %1770 = vset.pattern.permute.xlu0 0
      %1771 = vperm.xlu0 %1770, %v1763
      %v1772 = vpop.permute.xlu0 %1771
      %v1775 = vsel %vm573, %v1760, 0
      %v1778 = vsel %vm573, %v1761, 0
      %1780 = vmatprep.subr.mxu0 %v558
      %1781 = vmatpush1.msra.mxu0 %v557
      %1782 = vmatprep.subr.mxu0 0.0
      %1783 = vmatpush1.msra.mxu0 0.0
      %1784 = vmatprep.subr.mxu0 0.0
      %1785 = vmatpush1.msra.mxu0 0.0
      %1786 = vmatprep.subr.mxu0 0.0
      %1787 = vmatpush1.msra.mxu0 0.0
      %1788 = vmatprep.subr.mxu0 0.0
      %1789 = vmatpush1.msra.mxu0 0.0
      %1790 = vmatprep.subr.mxu0 0.0
      %1791 = vmatpush1.msra.mxu0 0.0
      %1792 = vmatprep.subr.mxu0 0.0
      %1793 = vmatpush1.msra.mxu0 0.0
      %1794 = vmatprep.subr.mxu0 0.0
      %1795 = vmatpush1.msra.mxu0 0.0
      %1796 = vmatprep.subr.mxu0 0.0
      %1797 = vmatpush1.msra.mxu0 0.0
      %1798 = vmatprep.subr.mxu0 0.0
      %1799 = vmatpush1.msra.mxu0 0.0
      %1800 = vmatprep.subr.mxu0 0.0
      %1801 = vmatpush1.msra.mxu0 0.0
      %1802 = vmatprep.subr.mxu0 0.0
      %1803 = vmatpush1.msra.mxu0 0.0
      %1804 = vmatprep.subr.mxu0 0.0
      %1805 = vmatpush1.msra.mxu0 0.0
      %1806 = vmatprep.subr.mxu0 0.0
      %1807 = vmatpush1.msra.mxu0 0.0
      %1808 = vmatprep.subr.mxu0 0.0
      %1809 = vmatpush1.msra.mxu0 0.0
      %1810 = vmatprep.subr.mxu0 0.0
      %1811 = vmatpush1.msra.mxu0 0.0
      %1812 = vmatprep.subr.mxu0 0.0
      %1813 = vmatpush1.msra.mxu0 0.0
      %1814 = vmatprep.subr.mxu0 0.0
      %1815 = vmatpush1.msra.mxu0 0.0
      %1816 = vmatprep.subr.mxu0 0.0
      %1817 = vmatpush1.msra.mxu0 0.0
      %1818 = vmatprep.subr.mxu0 0.0
      %1819 = vmatpush1.msra.mxu0 0.0
      %1820 = vmatprep.subr.mxu0 0.0
      %1821 = vmatpush1.msra.mxu0 0.0
      %1822 = vmatprep.subr.mxu0 0.0
      %1823 = vmatpush1.msra.mxu0 0.0
      %1824 = vmatprep.subr.mxu0 0.0
      %1825 = vmatpush1.msra.mxu0 0.0
      %1826 = vmatprep.subr.mxu0 0.0
      %1827 = vmatpush1.msra.mxu0 0.0
      %1828 = vmatprep.subr.mxu0 0.0
      %1829 = vmatpush1.msra.mxu0 0.0
      %1830 = vmatprep.subr.mxu0 0.0
      %1831 = vmatpush1.msra.mxu0 0.0
      %1832 = vmatprep.subr.mxu0 0.0
      %1833 = vmatpush1.msra.mxu0 0.0
      %1834 = vmatprep.subr.mxu0 0.0
      %1835 = vmatpush1.msra.mxu0 0.0
      %1836 = vmatprep.subr.mxu0 0.0
      %1837 = vmatpush1.msra.mxu0 0.0
      %1838 = vmatprep.subr.mxu0 0.0
      %1839 = vmatpush1.msra.mxu0 0.0
      %1840 = vmatprep.subr.mxu0 0.0
      %1841 = vmatpush1.msra.mxu0 0.0
      %1842 = vmatprep.subr.mxu0 0.0
      %1843 = vmatpush1.msra.mxu0 0.0
      %1844 = vmatprep.mubr.f32.mxu0 0.0
      %1845 = vmatmul.mubr.f32.gmra.mrb[0].mxu0 %v1775
      %v1846 = vpop.f32.mrb[0].mxu0
      %v1847 = vadd.f32 %v1767, %v1846
      %v1848 = vpop.f32.mrb[0].mxu0
      %v1849 = vadd.f32 %v1767, %v1848
      %1850 = vmatprep.mubr.f32.mxu0 0.0
      %1851 = vmatmul.mubr.f32.gmra.mrb[0].mxu0 %v1778
      %v1852 = vpop.f32.mrb[0].mxu0
      %v1853 = vadd.f32 %v1772, %v1852
      %v1854 = vpop.f32.mrb[0].mxu0
      %v1855 = vadd.f32 %v1772, %v1854
      %1856 = vdwg.mxu0
      %v1857 = vadd.f32 %v1750, %v1847
      %v1858 = vadd.f32 %v1752, %v1849
      %v1859 = vadd.f32 %v1756, %v1853
      %v1860 = vadd.f32 %v1758, %v1855
      %v1861 = vmax.f32 %v1857, 0.0
      %v1862 = vmax.f32 %v1858, 0.0
      %v1863 = vmax.f32 %v1859, 0.0
      %v1864 = vmax.f32 %v1860, 0.0
      %v1865 = vmin.f32 %v1861, 20.0
      %v1866 = vmin.f32 %v1862, 20.0
      %v1867 = vmin.f32 %v1863, 20.0
      %v1868 = vmin.f32 %v1864, 20.0
      %1869 = vst [vmem:[%s555] sm:$0xff] %v1865
      %1870 = vst [vmem:[%s555 + $0x8] sm:$0xff] %v1866
      %1871 = vst [vmem:[%s555 + $0x10] sm:$0xff] %v1867
      %1872 = vst [vmem:[%s555 + $0x18] sm:$0xff] %v1868
      %s1873 = scalar_lea.vmem %s548, 16
      %v1874 = vld [vmem:[%s1873] sm:$0xff]
      %v1875 = vld [vmem:[%s1873 + $0x8] sm:$0xff]
      %v1876 = vld [vmem:[%s2] sm:$0xff]
      %v1877 = vld [vmem:[%s2 + $0x8] sm:$0xff]
      %v1878 = vld [vmem:[%s3] sm:$0xff]
      %v1879 = vld [vmem:[%s3 + $0x8] sm:$0xff]
      %1881 = vset.pattern.permute.xlu0 0
      %1882 = vperm.xlu0 %1881, %v1878
      %v1883 = vpop.permute.xlu0 %1882
      %1886 = vset.pattern.permute.xlu0 0
      %1887 = vperm.xlu0 %1886, %v1879
      %v1888 = vpop.permute.xlu0 %1887
      %v1891 = vsel %vm573, %v1876, 0
      %v1894 = vsel %vm573, %v1877, 0
      %1896 = vmatprep.subr.mxu0 %v1875
      %1897 = vmatpush1.msra.mxu0 %v1874
      %1898 = vmatprep.subr.mxu0 0.0
      %1899 = vmatpush1.msra.mxu0 0.0
      %1900 = vmatprep.subr.mxu0 0.0
      %1901 = vmatpush1.msra.mxu0 0.0
      %1902 = vmatprep.subr.mxu0 0.0
      %1903 = vmatpush1.msra.mxu0 0.0
      %1904 = vmatprep.subr.mxu0 0.0
      %1905 = vmatpush1.msra.mxu0 0.0
      %1906 = vmatprep.subr.mxu0 0.0
      %1907 = vmatpush1.msra.mxu0 0.0
      %1908 = vmatprep.subr.mxu0 0.0
      %1909 = vmatpush1.msra.mxu0 0.0
      %1910 = vmatprep.subr.mxu0 0.0
      %1911 = vmatpush1.msra.mxu0 0.0
      %1912 = vmatprep.subr.mxu0 0.0
      %1913 = vmatpush1.msra.mxu0 0.0
      %1914 = vmatprep.subr.mxu0 0.0
      %1915 = vmatpush1.msra.mxu0 0.0
      %1916 = vmatprep.subr.mxu0 0.0
      %1917 = vmatpush1.msra.mxu0 0.0
      %1918 = vmatprep.subr.mxu0 0.0
      %1919 = vmatpush1.msra.mxu0 0.0
      %1920 = vmatprep.subr.mxu0 0.0
      %1921 = vmatpush1.msra.mxu0 0.0
      %1922 = vmatprep.subr.mxu0 0.0
      %1923 = vmatpush1.msra.mxu0 0.0
      %1924 = vmatprep.subr.mxu0 0.0
      %1925 = vmatpush1.msra.mxu0 0.0
      %1926 = vmatprep.subr.mxu0 0.0
      %1927 = vmatpush1.msra.mxu0 0.0
      %1928 = vmatprep.subr.mxu0 0.0
      %1929 = vmatpush1.msra.mxu0 0.0
      %1930 = vmatprep.subr.mxu0 0.0
      %1931 = vmatpush1.msra.mxu0 0.0
      %1932 = vmatprep.subr.mxu0 0.0
      %1933 = vmatpush1.msra.mxu0 0.0
      %1934 = vmatprep.subr.mxu0 0.0
      %1935 = vmatpush1.msra.mxu0 0.0
      %1936 = vmatprep.subr.mxu0 0.0
      %1937 = vmatpush1.msra.mxu0 0.0
      %1938 = vmatprep.subr.mxu0 0.0
      %1939 = vmatpush1.msra.mxu0 0.0
      %1940 = vmatprep.subr.mxu0 0.0
      %1941 = vmatpush1.msra.mxu0 0.0
      %1942 = vmatprep.subr.mxu0 0.0
      %1943 = vmatpush1.msra.mxu0 0.0
      %1944 = vmatprep.subr.mxu0 0.0
      %1945 = vmatpush1.msra.mxu0 0.0
      %1946 = vmatprep.subr.mxu0 0.0
      %1947 = vmatpush1.msra.mxu0 0.0
      %1948 = vmatprep.subr.mxu0 0.0
      %1949 = vmatpush1.msra.mxu0 0.0
      %1950 = vmatprep.subr.mxu0 0.0
      %1951 = vmatpush1.msra.mxu0 0.0
      %1952 = vmatprep.subr.mxu0 0.0
      %1953 = vmatpush1.msra.mxu0 0.0
      %1954 = vmatprep.subr.mxu0 0.0
      %1955 = vmatpush1.msra.mxu0 0.0
      %1956 = vmatprep.subr.mxu0 0.0
      %1957 = vmatpush1.msra.mxu0 0.0
      %1958 = vmatprep.subr.mxu0 0.0
      %1959 = vmatpush1.msra.mxu0 0.0
      %1960 = vmatprep.mubr.f32.mxu0 0.0
      %1961 = vmatmul.mubr.f32.gmra.mrb[0].mxu0 %v1891
      %v1962 = vpop.f32.mrb[0].mxu0
      %v1963 = vadd.f32 %v1883, %v1962
      %v1964 = vpop.f32.mrb[0].mxu0
      %v1965 = vadd.f32 %v1883, %v1964
      %1966 = vmatprep.mubr.f32.mxu0 0.0
      %1967 = vmatmul.mubr.f32.gmra.mrb[0].mxu0 %v1894
      %v1968 = vpop.f32.mrb[0].mxu0
      %v1969 = vadd.f32 %v1888, %v1968
      %v1970 = vpop.f32.mrb[0].mxu0
      %v1971 = vadd.f32 %v1888, %v1970
      %1972 = vdwg.mxu0
      %v1973 = vmax.f32 %v1963, 0.0
      %v1974 = vmax.f32 %v1965, 0.0
      %v1975 = vmax.f32 %v1969, 0.0
      %v1976 = vmax.f32 %v1971, 0.0
      %v1977 = vmin.f32 %v1973, 20.0
      %v1978 = vmin.f32 %v1974, 20.0
      %v1979 = vmin.f32 %v1975, 20.0
      %v1980 = vmin.f32 %v1976, 20.0
      %1981 = vrot.lane.b32.xlu0 %v1977, 17
      %v1982 = vpop.permute.xlu0 %1981
      %1983 = vrot.lane.b32.xlu0 %v1978, 17
      %v1984 = vpop.permute.xlu0 %1983
      %v1985 = vsel %vm671, %v1982, %v1984
      %v1986 = vsel %vm671, %v1984, %v1982
      %v1987 = vld [vmem:[%s1] sm:$0x3]
      %v1989 = vlaneseq
      %v1990 = vshrl.u32 %v1989, 7
      %v1991 = vsub.s32 0, %v1990
      %v1992 = vrot.slane %v1987, %v1991
      %v1993 = vlaneseq
      %v1994 = vshrl.u32 %v1993, 7
      %v1995 = vsub.s32 1, %v1994
      %v1996 = vrot.slane %v1987, %v1995
      %v1999 = vmul.f32 %v1986, %v1992
      %v2000 = vmul.f32 %v1985, %v1996
      %2001 = vrot.lane.b32.xlu0 %v1977, 16
      %v2002 = vpop.permute.xlu0 %2001
      %2003 = vrot.lane.b32.xlu0 %v1978, 16
      %v2004 = vpop.permute.xlu0 %2003
      %v2005 = vsel %vm692, %v2002, %v2004
      %v2006 = vsel %vm692, %v2004, %v2002
      %v2007 = vld [vmem:[%s695] sm:$0x3]
      %v2009 = vlaneseq
      %v2010 = vshrl.u32 %v2009, 7
      %v2011 = vsub.s32 0, %v2010
      %v2012 = vrot.slane %v2007, %v2011
      %v2013 = vlaneseq
      %v2014 = vshrl.u32 %v2013, 7
      %v2015 = vsub.s32 1, %v2014
      %v2016 = vrot.slane %v2007, %v2015
      %v2019 = vmul.f32 %v2006, %v2012
      %v2020 = vmul.f32 %v2005, %v2016
      %2021 = vrot.lane.b32.xlu0 %v1977, 15
      %v2022 = vpop.permute.xlu0 %2021
      %2023 = vrot.lane.b32.xlu0 %v1978, 15
      %v2024 = vpop.permute.xlu0 %2023
      %v2025 = vsel %vm714, %v2022, %v2024
      %v2026 = vsel %vm714, %v2024, %v2022
      %v2027 = vld [vmem:[%s717] sm:$0x3]
      %v2029 = vlaneseq
      %v2030 = vshrl.u32 %v2029, 7
      %v2031 = vsub.s32 0, %v2030
      %v2032 = vrot.slane %v2027, %v2031
      %v2033 = vlaneseq
      %v2034 = vshrl.u32 %v2033, 7
      %v2035 = vsub.s32 1, %v2034
      %v2036 = vrot.slane %v2027, %v2035
      %v2039 = vmul.f32 %v2026, %v2032
      %v2040 = vmul.f32 %v2025, %v2036
      %v2041 = vld [vmem:[%s4] sm:$0xff]
      %2042 = vrot.lane.b32.xlu0 %v1977, 1
      %v2043 = vpop.permute.xlu0 %2042
      %2044 = vrot.lane.b32.xlu0 %v1978, 1
      %v2045 = vpop.permute.xlu0 %2044
      %v2046 = vsel %vm737, %v2043, %v2045
      %v2047 = vsel %vm737, %v2045, %v2043
      %v2048 = vld [vmem:[%s740] sm:$0x3]
      %v2050 = vlaneseq
      %v2051 = vshrl.u32 %v2050, 7
      %v2052 = vsub.s32 0, %v2051
      %v2053 = vrot.slane %v2048, %v2052
      %v2054 = vlaneseq
      %v2055 = vshrl.u32 %v2054, 7
      %v2056 = vsub.s32 1, %v2055
      %v2057 = vrot.slane %v2048, %v2056
      %v2060 = vmul.f32 %v2047, %v2053
      %v2061 = vmul.f32 %v2046, %v2057
      %2062 = vrot.lane.b32.xlu0 %v1977, 127
      %v2063 = vpop.permute.xlu0 %2062
      %2064 = vrot.lane.b32.xlu0 %v1978, 127
      %v2065 = vpop.permute.xlu0 %2064
      %v2066 = vsel %vm759, %v2063, %v2065
      %v2067 = vsel %vm759, %v2065, %v2063
      %v2068 = vld [vmem:[%s762] sm:$0x3]
      %v2070 = vlaneseq
      %v2071 = vshrl.u32 %v2070, 7
      %v2072 = vsub.s32 0, %v2071
      %v2073 = vrot.slane %v2068, %v2072
      %v2074 = vlaneseq
      %v2075 = vshrl.u32 %v2074, 7
      %v2076 = vsub.s32 1, %v2075
      %v2077 = vrot.slane %v2068, %v2076
      %v2080 = vmul.f32 %v2066, %v2073
      %v2081 = vmul.f32 %v2067, %v2077
      %v2082 = vld [vmem:[%s777] sm:$0xff]
      %v2084 = vsel %vm779, %v2082, 0
      %2086 = vmatprep.subr.mxu0 %v2061
      %2087 = vmatpush1.msra.mxu0 %v2060
      %2088 = vmatprep.subr.mxu0 %v1978
      %2089 = vmatpush1.msra.mxu0 %v1977
      %2090 = vmatprep.subr.mxu0 %v2081
      %2091 = vmatpush1.msra.mxu0 %v2080
      %2092 = vmatprep.subr.mxu0 0.0
      %2093 = vmatpush1.msra.mxu0 0.0
      %2094 = vmatprep.subr.mxu0 0.0
      %2095 = vmatpush1.msra.mxu0 0.0
      %2096 = vmatprep.subr.mxu0 0.0
      %2097 = vmatpush1.msra.mxu0 0.0
      %2098 = vmatprep.subr.mxu0 0.0
      %2099 = vmatpush1.msra.mxu0 0.0
      %2100 = vmatprep.subr.mxu0 0.0
      %2101 = vmatpush1.msra.mxu0 0.0
      %2102 = vmatprep.subr.mxu0 0.0
      %2103 = vmatpush1.msra.mxu0 0.0
      %2104 = vmatprep.subr.mxu0 0.0
      %2105 = vmatpush1.msra.mxu0 0.0
      %2106 = vmatprep.subr.mxu0 0.0
      %2107 = vmatpush1.msra.mxu0 0.0
      %2108 = vmatprep.subr.mxu0 0.0
      %2109 = vmatpush1.msra.mxu0 0.0
      %2110 = vmatprep.subr.mxu0 0.0
      %2111 = vmatpush1.msra.mxu0 0.0
      %2112 = vmatprep.subr.mxu0 0.0
      %2113 = vmatpush1.msra.mxu0 0.0
      %2114 = vmatprep.subr.mxu0 0.0
      %2115 = vmatpush1.msra.mxu0 0.0
      %2116 = vmatprep.subr.mxu0 0.0
      %2117 = vmatpush1.msra.mxu0 0.0
      %2118 = vmatprep.subr.mxu0 0.0
      %2119 = vmatpush1.msra.mxu0 0.0
      %2120 = vmatprep.subr.mxu0 0.0
      %2121 = vmatpush1.msra.mxu0 0.0
      %2122 = vmatprep.subr.mxu0 0.0
      %2123 = vmatpush1.msra.mxu0 0.0
      %2124 = vmatprep.subr.mxu0 0.0
      %2125 = vmatpush1.msra.mxu0 0.0
      %2126 = vmatprep.subr.mxu0 0.0
      %2127 = vmatpush1.msra.mxu0 0.0
      %2128 = vmatprep.subr.mxu0 0.0
      %2129 = vmatpush1.msra.mxu0 0.0
      %2130 = vmatprep.subr.mxu0 0.0
      %2131 = vmatpush1.msra.mxu0 0.0
      %2132 = vmatprep.subr.mxu0 0.0
      %2133 = vmatpush1.msra.mxu0 0.0
      %2134 = vmatprep.subr.mxu0 0.0
      %2135 = vmatpush1.msra.mxu0 0.0
      %2136 = vmatprep.subr.mxu0 0.0
      %2137 = vmatpush1.msra.mxu0 0.0
      %2138 = vmatprep.subr.mxu0 0.0
      %2139 = vmatpush1.msra.mxu0 0.0
      %2140 = vmatprep.subr.mxu0 0.0
      %2141 = vmatpush1.msra.mxu0 0.0
      %2142 = vmatprep.subr.mxu0 0.0
      %2143 = vmatpush1.msra.mxu0 0.0
      %2144 = vmatprep.subr.mxu0 0.0
      %2145 = vmatpush1.msra.mxu0 0.0
      %2146 = vmatprep.subr.mxu0 0.0
      %2147 = vmatpush1.msra.mxu0 0.0
      %2148 = vmatprep.subr.mxu0 0.0
      %2149 = vmatpush1.msra.mxu0 0.0
      %2150 = vmatprep.mubr.f32.mxu0 0.0
      %2151 = vmatmul.mubr.f32.gmra.mrb[0].mxu0 %v2084
      %v2152 = vpop.f32.mrb[0].mxu0
      %v2153 = vadd.f32 0.0, %v2152
      %v2154 = vpop.f32.mrb[0].mxu0
      %v2155 = vadd.f32 0.0, %v2154
      %2156 = vdwg.mxu0
      %v2158 = vsel %vm779, %v2041, 0
      %2160 = vmatprep.subr.mxu0 %v2000
      %2161 = vmatpush1.msra.mxu0 %v1999
      %2162 = vmatprep.subr.mxu0 %v2020
      %2163 = vmatpush1.msra.mxu0 %v2019
      %2164 = vmatprep.subr.mxu0 %v2040
      %2165 = vmatpush1.msra.mxu0 %v2039
      %2166 = vmatprep.subr.mxu0 0.0
      %2167 = vmatpush1.msra.mxu0 0.0
      %2168 = vmatprep.subr.mxu0 0.0
      %2169 = vmatpush1.msra.mxu0 0.0
      %2170 = vmatprep.subr.mxu0 0.0
      %2171 = vmatpush1.msra.mxu0 0.0
      %2172 = vmatprep.subr.mxu0 0.0
      %2173 = vmatpush1.msra.mxu0 0.0
      %2174 = vmatprep.subr.mxu0 0.0
      %2175 = vmatpush1.msra.mxu0 0.0
      %2176 = vmatprep.subr.mxu0 0.0
      %2177 = vmatpush1.msra.mxu0 0.0
      %2178 = vmatprep.subr.mxu0 0.0
      %2179 = vmatpush1.msra.mxu0 0.0
      %2180 = vmatprep.subr.mxu0 0.0
      %2181 = vmatpush1.msra.mxu0 0.0
      %2182 = vmatprep.subr.mxu0 0.0
      %2183 = vmatpush1.msra.mxu0 0.0
      %2184 = vmatprep.subr.mxu0 0.0
      %2185 = vmatpush1.msra.mxu0 0.0
      %2186 = vmatprep.subr.mxu0 0.0
      %2187 = vmatpush1.msra.mxu0 0.0
      %2188 = vmatprep.subr.mxu0 0.0
      %2189 = vmatpush1.msra.mxu0 0.0
      %2190 = vmatprep.subr.mxu0 0.0
      %2191 = vmatpush1.msra.mxu0 0.0
      %2192 = vmatprep.subr.mxu0 0.0
      %2193 = vmatpush1.msra.mxu0 0.0
      %2194 = vmatprep.subr.mxu0 0.0
      %2195 = vmatpush1.msra.mxu0 0.0
      %2196 = vmatprep.subr.mxu0 0.0
      %2197 = vmatpush1.msra.mxu0 0.0
      %2198 = vmatprep.subr.mxu0 0.0
      %2199 = vmatpush1.msra.mxu0 0.0
      %2200 = vmatprep.subr.mxu0 0.0
      %2201 = vmatpush1.msra.mxu0 0.0
      %2202 = vmatprep.subr.mxu0 0.0
      %2203 = vmatpush1.msra.mxu0 0.0
      %2204 = vmatprep.subr.mxu0 0.0
      %2205 = vmatpush1.msra.mxu0 0.0
      %2206 = vmatprep.subr.mxu0 0.0
      %2207 = vmatpush1.msra.mxu0 0.0
      %2208 = vmatprep.subr.mxu0 0.0
      %2209 = vmatpush1.msra.mxu0 0.0
      %2210 = vmatprep.subr.mxu0 0.0
      %2211 = vmatpush1.msra.mxu0 0.0
      %2212 = vmatprep.subr.mxu0 0.0
      %2213 = vmatpush1.msra.mxu0 0.0
      %2214 = vmatprep.subr.mxu0 0.0
      %2215 = vmatpush1.msra.mxu0 0.0
      %2216 = vmatprep.subr.mxu0 0.0
      %2217 = vmatpush1.msra.mxu0 0.0
      %2218 = vmatprep.subr.mxu0 0.0
      %2219 = vmatpush1.msra.mxu0 0.0
      %2220 = vmatprep.subr.mxu0 0.0
      %2221 = vmatpush1.msra.mxu0 0.0
      %2222 = vmatprep.subr.mxu0 0.0
      %2223 = vmatpush1.msra.mxu0 0.0
      %2224 = vmatprep.mubr.f32.mxu0 0.0
      %2225 = vmatmul.mubr.f32.gmra.mrb[0].mxu0 %v2158
      %v2226 = vpop.f32.mrb[0].mxu0
      %v2227 = vadd.f32 %v2153, %v2226
      %v2228 = vpop.f32.mrb[0].mxu0
      %v2229 = vadd.f32 %v2155, %v2228
      %2230 = vdwg.mxu0
      %2231 = vrot.lane.b32.xlu0 %v1977, 113
      %v2232 = vpop.permute.xlu0 %2231
      %2233 = vrot.lane.b32.xlu0 %v1978, 113
      %v2234 = vpop.permute.xlu0 %2233
      %v2235 = vsel %vm932, %v2232, %v2234
      %v2236 = vsel %vm932, %v2234, %v2232
      %v2237 = vld [vmem:[%s935] sm:$0x3]
      %v2239 = vlaneseq
      %v2240 = vshrl.u32 %v2239, 7
      %v2241 = vsub.s32 0, %v2240
      %v2242 = vrot.slane %v2237, %v2241
      %v2243 = vlaneseq
      %v2244 = vshrl.u32 %v2243, 7
      %v2245 = vsub.s32 1, %v2244
      %v2246 = vrot.slane %v2237, %v2245
      %v2249 = vmul.f32 %v2235, %v2242
      %v2250 = vmul.f32 %v2236, %v2246
      %2251 = vrot.lane.b32.xlu0 %v1977, 112
      %v2252 = vpop.permute.xlu0 %2251
      %2253 = vrot.lane.b32.xlu0 %v1978, 112
      %v2254 = vpop.permute.xlu0 %2253
      %v2255 = vsel %vm954, %v2252, %v2254
      %v2256 = vsel %vm954, %v2254, %v2252
      %v2257 = vld [vmem:[%s957] sm:$0x3]
      %v2259 = vlaneseq
      %v2260 = vshrl.u32 %v2259, 7
      %v2261 = vsub.s32 0, %v2260
      %v2262 = vrot.slane %v2257, %v2261
      %v2263 = vlaneseq
      %v2264 = vshrl.u32 %v2263, 7
      %v2265 = vsub.s32 1, %v2264
      %v2266 = vrot.slane %v2257, %v2265
      %v2269 = vmul.f32 %v2255, %v2262
      %v2270 = vmul.f32 %v2256, %v2266
      %2271 = vrot.lane.b32.xlu0 %v1977, 111
      %v2272 = vpop.permute.xlu0 %2271
      %2273 = vrot.lane.b32.xlu0 %v1978, 111
      %v2274 = vpop.permute.xlu0 %2273
      %v2275 = vsel %vm976, %v2272, %v2274
      %v2276 = vsel %vm976, %v2274, %v2272
      %v2277 = vld [vmem:[%s979] sm:$0x3]
      %v2279 = vlaneseq
      %v2280 = vshrl.u32 %v2279, 7
      %v2281 = vsub.s32 0, %v2280
      %v2282 = vrot.slane %v2277, %v2281
      %v2283 = vlaneseq
      %v2284 = vshrl.u32 %v2283, 7
      %v2285 = vsub.s32 1, %v2284
      %v2286 = vrot.slane %v2277, %v2285
      %v2289 = vmul.f32 %v2275, %v2282
      %v2290 = vmul.f32 %v2276, %v2286
      %v2291 = vld [vmem:[%s994] sm:$0xff]
      %v2293 = vsel %vm779, %v2291, 0
      %2295 = vmatprep.subr.mxu0 %v2250
      %2296 = vmatpush1.msra.mxu0 %v2249
      %2297 = vmatprep.subr.mxu0 %v2270
      %2298 = vmatpush1.msra.mxu0 %v2269
      %2299 = vmatprep.subr.mxu0 %v2290
      %2300 = vmatpush1.msra.mxu0 %v2289
      %2301 = vmatprep.subr.mxu0 0.0
      %2302 = vmatpush1.msra.mxu0 0.0
      %2303 = vmatprep.subr.mxu0 0.0
      %2304 = vmatpush1.msra.mxu0 0.0
      %2305 = vmatprep.subr.mxu0 0.0
      %2306 = vmatpush1.msra.mxu0 0.0
      %2307 = vmatprep.subr.mxu0 0.0
      %2308 = vmatpush1.msra.mxu0 0.0
      %2309 = vmatprep.subr.mxu0 0.0
      %2310 = vmatpush1.msra.mxu0 0.0
      %2311 = vmatprep.subr.mxu0 0.0
      %2312 = vmatpush1.msra.mxu0 0.0
      %2313 = vmatprep.subr.mxu0 0.0
      %2314 = vmatpush1.msra.mxu0 0.0
      %2315 = vmatprep.subr.mxu0 0.0
      %2316 = vmatpush1.msra.mxu0 0.0
      %2317 = vmatprep.subr.mxu0 0.0
      %2318 = vmatpush1.msra.mxu0 0.0
      %2319 = vmatprep.subr.mxu0 0.0
      %2320 = vmatpush1.msra.mxu0 0.0
      %2321 = vmatprep.subr.mxu0 0.0
      %2322 = vmatpush1.msra.mxu0 0.0
      %2323 = vmatprep.subr.mxu0 0.0
      %2324 = vmatpush1.msra.mxu0 0.0
      %2325 = vmatprep.subr.mxu0 0.0
      %2326 = vmatpush1.msra.mxu0 0.0
      %2327 = vmatprep.subr.mxu0 0.0
      %2328 = vmatpush1.msra.mxu0 0.0
      %2329 = vmatprep.subr.mxu0 0.0
      %2330 = vmatpush1.msra.mxu0 0.0
      %2331 = vmatprep.subr.mxu0 0.0
      %2332 = vmatpush1.msra.mxu0 0.0
      %2333 = vmatprep.subr.mxu0 0.0
      %2334 = vmatpush1.msra.mxu0 0.0
      %2335 = vmatprep.subr.mxu0 0.0
      %2336 = vmatpush1.msra.mxu0 0.0
      %2337 = vmatprep.subr.mxu0 0.0
      %2338 = vmatpush1.msra.mxu0 0.0
      %2339 = vmatprep.subr.mxu0 0.0
      %2340 = vmatpush1.msra.mxu0 0.0
      %2341 = vmatprep.subr.mxu0 0.0
      %2342 = vmatpush1.msra.mxu0 0.0
      %2343 = vmatprep.subr.mxu0 0.0
      %2344 = vmatpush1.msra.mxu0 0.0
      %2345 = vmatprep.subr.mxu0 0.0
      %2346 = vmatpush1.msra.mxu0 0.0
      %2347 = vmatprep.subr.mxu0 0.0
      %2348 = vmatpush1.msra.mxu0 0.0
      %2349 = vmatprep.subr.mxu0 0.0
      %2350 = vmatpush1.msra.mxu0 0.0
      %2351 = vmatprep.subr.mxu0 0.0
      %2352 = vmatpush1.msra.mxu0 0.0
      %2353 = vmatprep.subr.mxu0 0.0
      %2354 = vmatpush1.msra.mxu0 0.0
      %2355 = vmatprep.subr.mxu0 0.0
      %2356 = vmatpush1.msra.mxu0 0.0
      %2357 = vmatprep.subr.mxu0 0.0
      %2358 = vmatpush1.msra.mxu0 0.0
      %2359 = vmatprep.mubr.f32.mxu0 0.0
      %2360 = vmatmul.mubr.f32.gmra.mrb[0].mxu0 %v2293
      %v2361 = vpop.f32.mrb[0].mxu0
      %v2362 = vadd.f32 0.0, %v2361
      %v2363 = vpop.f32.mrb[0].mxu0
      %v2364 = vadd.f32 0.0, %v2363
      %2365 = vdwg.mxu0
      %v2366 = vadd.f32 %v2227, %v2362
      %v2367 = vadd.f32 %v2229, %v2364
      %v2368 = vld [vmem:[%s5] sm:$0xff]
      %2370 = vset.pattern.permute.xlu0 0
      %2371 = vperm.xlu0 %2370, %v2368
      %v2372 = vpop.permute.xlu0 %2371
      %v2374 = vadd.f32 %v2366, %v2372
      %v2375 = vadd.f32 %v2367, %v2372
      %v2376 = vmax.f32 %v2374, 0.0
      %v2377 = vmax.f32 %v2375, 0.0
      %v2378 = vmin.f32 %v2376, 20.0
      %v2379 = vmin.f32 %v2377, 20.0
      %v2380 = vld [vmem:[%s8] sm:$0x3]
      %v2381 = vld [vmem:[%s9] sm:$0x3]
      %v2383 = vsel %vm573, %v2381, 0
      %2385 = vmatprep.subr.mxu0 %v1980
      %2386 = vmatpush1.msra.mxu0 %v1979
      %2387 = vmatprep.subr.mxu0 0.0
      %2388 = vmatpush1.msra.mxu0 0.0
      %2389 = vmatprep.subr.mxu0 0.0
      %2390 = vmatpush1.msra.mxu0 0.0
      %2391 = vmatprep.subr.mxu0 0.0
      %2392 = vmatpush1.msra.mxu0 0.0
      %2393 = vmatprep.subr.mxu0 0.0
      %2394 = vmatpush1.msra.mxu0 0.0
      %2395 = vmatprep.subr.mxu0 0.0
      %2396 = vmatpush1.msra.mxu0 0.0
      %2397 = vmatprep.subr.mxu0 0.0
      %2398 = vmatpush1.msra.mxu0 0.0
      %2399 = vmatprep.subr.mxu0 0.0
      %2400 = vmatpush1.msra.mxu0 0.0
      %2401 = vmatprep.subr.mxu0 0.0
      %2402 = vmatpush1.msra.mxu0 0.0
      %2403 = vmatprep.subr.mxu0 0.0
      %2404 = vmatpush1.msra.mxu0 0.0
      %2405 = vmatprep.subr.mxu0 0.0
      %2406 = vmatpush1.msra.mxu0 0.0
      %2407 = vmatprep.subr.mxu0 0.0
      %2408 = vmatpush1.msra.mxu0 0.0
      %2409 = vmatprep.subr.mxu0 0.0
      %2410 = vmatpush1.msra.mxu0 0.0
      %2411 = vmatprep.subr.mxu0 0.0
      %2412 = vmatpush1.msra.mxu0 0.0
      %2413 = vmatprep.subr.mxu0 0.0
      %2414 = vmatpush1.msra.mxu0 0.0
      %2415 = vmatprep.subr.mxu0 0.0
      %2416 = vmatpush1.msra.mxu0 0.0
      %2417 = vmatprep.subr.mxu0 0.0
      %2418 = vmatpush1.msra.mxu0 0.0
      %2419 = vmatprep.subr.mxu0 0.0
      %2420 = vmatpush1.msra.mxu0 0.0
      %2421 = vmatprep.subr.mxu0 0.0
      %2422 = vmatpush1.msra.mxu0 0.0
      %2423 = vmatprep.subr.mxu0 0.0
      %2424 = vmatpush1.msra.mxu0 0.0
      %2425 = vmatprep.subr.mxu0 0.0
      %2426 = vmatpush1.msra.mxu0 0.0
      %2427 = vmatprep.subr.mxu0 0.0
      %2428 = vmatpush1.msra.mxu0 0.0
      %2429 = vmatprep.subr.mxu0 0.0
      %2430 = vmatpush1.msra.mxu0 0.0
      %2431 = vmatprep.subr.mxu0 0.0
      %2432 = vmatpush1.msra.mxu0 0.0
      %2433 = vmatprep.subr.mxu0 0.0
      %2434 = vmatpush1.msra.mxu0 0.0
      %2435 = vmatprep.subr.mxu0 0.0
      %2436 = vmatpush1.msra.mxu0 0.0
      %2437 = vmatprep.subr.mxu0 0.0
      %2438 = vmatpush1.msra.mxu0 0.0
      %2439 = vmatprep.subr.mxu0 0.0
      %2440 = vmatpush1.msra.mxu0 0.0
      %2441 = vmatprep.subr.mxu0 0.0
      %2442 = vmatpush1.msra.mxu0 0.0
      %2443 = vmatprep.subr.mxu0 0.0
      %2444 = vmatpush1.msra.mxu0 0.0
      %2445 = vmatprep.subr.mxu0 0.0
      %2446 = vmatpush1.msra.mxu0 0.0
      %2447 = vmatprep.subr.mxu0 0.0
      %2448 = vmatpush1.msra.mxu0 0.0
      %2449 = vmatprep.mubr.f32.mxu0 0.0
      %2450 = vmatmul.mubr.f32.gmra.mrb[0].mxu0 %v2383
      %v2451 = vpop.f32.mrb[0].mxu0
      %v2452 = vadd.f32 0.0, %v2451
      %v2453 = vpop.f32.mrb[0].mxu0
      %v2454 = vadd.f32 0.0, %v2453
      %2455 = vdwg.mxu0
      %v2457 = vsel %vm573, %v2380, 0
      %2459 = vmatprep.subr.mxu0 %v2379
      %2460 = vmatpush1.msra.mxu0 %v2378
      %2461 = vmatprep.subr.mxu0 0.0
      %2462 = vmatpush1.msra.mxu0 0.0
      %2463 = vmatprep.subr.mxu0 0.0
      %2464 = vmatpush1.msra.mxu0 0.0
      %2465 = vmatprep.subr.mxu0 0.0
      %2466 = vmatpush1.msra.mxu0 0.0
      %2467 = vmatprep.subr.mxu0 0.0
      %2468 = vmatpush1.msra.mxu0 0.0
      %2469 = vmatprep.subr.mxu0 0.0
      %2470 = vmatpush1.msra.mxu0 0.0
      %2471 = vmatprep.subr.mxu0 0.0
      %2472 = vmatpush1.msra.mxu0 0.0
      %2473 = vmatprep.subr.mxu0 0.0
      %2474 = vmatpush1.msra.mxu0 0.0
      %2475 = vmatprep.subr.mxu0 0.0
      %2476 = vmatpush1.msra.mxu0 0.0
      %2477 = vmatprep.subr.mxu0 0.0
      %2478 = vmatpush1.msra.mxu0 0.0
      %2479 = vmatprep.subr.mxu0 0.0
      %2480 = vmatpush1.msra.mxu0 0.0
      %2481 = vmatprep.subr.mxu0 0.0
      %2482 = vmatpush1.msra.mxu0 0.0
      %2483 = vmatprep.subr.mxu0 0.0
      %2484 = vmatpush1.msra.mxu0 0.0
      %2485 = vmatprep.subr.mxu0 0.0
      %2486 = vmatpush1.msra.mxu0 0.0
      %2487 = vmatprep.subr.mxu0 0.0
      %2488 = vmatpush1.msra.mxu0 0.0
      %2489 = vmatprep.subr.mxu0 0.0
      %2490 = vmatpush1.msra.mxu0 0.0
      %2491 = vmatprep.subr.mxu0 0.0
      %2492 = vmatpush1.msra.mxu0 0.0
      %2493 = vmatprep.subr.mxu0 0.0
      %2494 = vmatpush1.msra.mxu0 0.0
      %2495 = vmatprep.subr.mxu0 0.0
      %2496 = vmatpush1.msra.mxu0 0.0
      %2497 = vmatprep.subr.mxu0 0.0
      %2498 = vmatpush1.msra.mxu0 0.0
      %2499 = vmatprep.subr.mxu0 0.0
      %2500 = vmatpush1.msra.mxu0 0.0
      %2501 = vmatprep.subr.mxu0 0.0
      %2502 = vmatpush1.msra.mxu0 0.0
      %2503 = vmatprep.subr.mxu0 0.0
      %2504 = vmatpush1.msra.mxu0 0.0
      %2505 = vmatprep.subr.mxu0 0.0
      %2506 = vmatpush1.msra.mxu0 0.0
      %2507 = vmatprep.subr.mxu0 0.0
      %2508 = vmatpush1.msra.mxu0 0.0
      %2509 = vmatprep.subr.mxu0 0.0
      %2510 = vmatpush1.msra.mxu0 0.0
      %2511 = vmatprep.subr.mxu0 0.0
      %2512 = vmatpush1.msra.mxu0 0.0
      %2513 = vmatprep.subr.mxu0 0.0
      %2514 = vmatpush1.msra.mxu0 0.0
      %2515 = vmatprep.subr.mxu0 0.0
      %2516 = vmatpush1.msra.mxu0 0.0
      %2517 = vmatprep.subr.mxu0 0.0
      %2518 = vmatpush1.msra.mxu0 0.0
      %2519 = vmatprep.subr.mxu0 0.0
      %2520 = vmatpush1.msra.mxu0 0.0
      %2521 = vmatprep.subr.mxu0 0.0
      %2522 = vmatpush1.msra.mxu0 0.0
      %2523 = vmatprep.mubr.f32.mxu0 0.0
      %2524 = vmatmul.mubr.f32.gmra.mrb[0].mxu0 %v2457
      %v2525 = vpop.f32.mrb[0].mxu0
      %v2526 = vadd.f32 %v2452, %v2525
      %v2527 = vpop.f32.mrb[0].mxu0
      %v2528 = vadd.f32 %v2454, %v2527
      %2529 = vdwg.mxu0
      %v2530 = vld [vmem:[%s10] sm:$0x3]
      %2532 = vset.pattern.permute.xlu0 0
      %2533 = vperm.xlu0 %2532, %v2530
      %v2534 = vpop.permute.xlu0 %2533
      %v2536 = vadd.f32 %v2526, %v2534
      %v2537 = vadd.f32 %v2528, %v2534
      %v2538 = vxor.u32 %v2536, 2147483648
      %v2539 = vxor.u32 %v2537, 2147483648
      %v2540 = vmul.f32 %v2538, 1.442695
      %v2541 = vpow.pop %v2540
      %v2542 = vmul.f32 %v2539, 1.442695
      %v2543 = vpow.pop %v2542
      %v2544 = vadd.f32 %v2541, 1.0
      %v2545 = vadd.f32 %v2543, 1.0
      %v2546 = vrcp.pop %v2544
      %v2547 = vmul.f32 1.0, %v2546
      %v2548 = vrcp.pop %v2545
      %v2549 = vmul.f32 1.0, %v2548
      %v2550 = vmul.f32 %v2536, %v2547
      %v2551 = vmul.f32 %v2537, %v2549
      %v2552 = vld [vmem:[%s11] sm:$0xff]
      %v2553 = vld [vmem:[%s12] sm:$0xff]
      %2555 = vset.pattern.permute.xlu0 0
      %2556 = vperm.xlu0 %2555, %v2553
      %v2557 = vpop.permute.xlu0 %2556
      %v2560 = vsel %vm1263, %v2552, 0
      %v2563 = vsel %vm1267, %v2550, 0
      %v2566 = vsel %vm1267, %v2551, 0
      %2568 = vmatprep.subr.mxu0 %v2566
      %2569 = vmatpush1.msra.mxu0 %v2563
      %2570 = vmatprep.subr.mxu0 0.0
      %2571 = vmatpush1.msra.mxu0 0.0
      %2572 = vmatprep.subr.mxu0 0.0
      %2573 = vmatpush1.msra.mxu0 0.0
      %2574 = vmatprep.subr.mxu0 0.0
      %2575 = vmatpush1.msra.mxu0 0.0
      %2576 = vmatprep.subr.mxu0 0.0
      %2577 = vmatpush1.msra.mxu0 0.0
      %2578 = vmatprep.subr.mxu0 0.0
      %2579 = vmatpush1.msra.mxu0 0.0
      %2580 = vmatprep.subr.mxu0 0.0
      %2581 = vmatpush1.msra.mxu0 0.0
      %2582 = vmatprep.subr.mxu0 0.0
      %2583 = vmatpush1.msra.mxu0 0.0
      %2584 = vmatprep.subr.mxu0 0.0
      %2585 = vmatpush1.msra.mxu0 0.0
      %2586 = vmatprep.subr.mxu0 0.0
      %2587 = vmatpush1.msra.mxu0 0.0
      %2588 = vmatprep.subr.mxu0 0.0
      %2589 = vmatpush1.msra.mxu0 0.0
      %2590 = vmatprep.subr.mxu0 0.0
      %2591 = vmatpush1.msra.mxu0 0.0
      %2592 = vmatprep.subr.mxu0 0.0
      %2593 = vmatpush1.msra.mxu0 0.0
      %2594 = vmatprep.subr.mxu0 0.0
      %2595 = vmatpush1.msra.mxu0 0.0
      %2596 = vmatprep.subr.mxu0 0.0
      %2597 = vmatpush1.msra.mxu0 0.0
      %2598 = vmatprep.subr.mxu0 0.0
      %2599 = vmatpush1.msra.mxu0 0.0
      %2600 = vmatprep.subr.mxu0 0.0
      %2601 = vmatpush1.msra.mxu0 0.0
      %2602 = vmatprep.subr.mxu0 0.0
      %2603 = vmatpush1.msra.mxu0 0.0
      %2604 = vmatprep.subr.mxu0 0.0
      %2605 = vmatpush1.msra.mxu0 0.0
      %2606 = vmatprep.subr.mxu0 0.0
      %2607 = vmatpush1.msra.mxu0 0.0
      %2608 = vmatprep.subr.mxu0 0.0
      %2609 = vmatpush1.msra.mxu0 0.0
      %2610 = vmatprep.subr.mxu0 0.0
      %2611 = vmatpush1.msra.mxu0 0.0
      %2612 = vmatprep.subr.mxu0 0.0
      %2613 = vmatpush1.msra.mxu0 0.0
      %2614 = vmatprep.subr.mxu0 0.0
      %2615 = vmatpush1.msra.mxu0 0.0
      %2616 = vmatprep.subr.mxu0 0.0
      %2617 = vmatpush1.msra.mxu0 0.0
      %2618 = vmatprep.subr.mxu0 0.0
      %2619 = vmatpush1.msra.mxu0 0.0
      %2620 = vmatprep.subr.mxu0 0.0
      %2621 = vmatpush1.msra.mxu0 0.0
      %2622 = vmatprep.subr.mxu0 0.0
      %2623 = vmatpush1.msra.mxu0 0.0
      %2624 = vmatprep.subr.mxu0 0.0
      %2625 = vmatpush1.msra.mxu0 0.0
      %2626 = vmatprep.subr.mxu0 0.0
      %2627 = vmatpush1.msra.mxu0 0.0
      %2628 = vmatprep.subr.mxu0 0.0
      %2629 = vmatpush1.msra.mxu0 0.0
      %2630 = vmatprep.subr.mxu0 0.0
      %2631 = vmatpush1.msra.mxu0 0.0
      %2632 = vmatprep.mubr.f32.mxu0 0.0
      %2633 = vmatmul.mubr.f32.gmra.mrb[0].mxu0 %v2560
      %v2634 = vpop.f32.mrb[0].mxu0
      %v2635 = vadd.f32 %v2557, %v2634
      %v2636 = vpop.f32.mrb[0].mxu0
      %v2637 = vadd.f32 %v2557, %v2636
      %2638 = vdwg.mxu0
      %v2639 = vtanh.pop %v2635
      %v2640 = vtanh.pop %v2637
      %v2641 = vadd.f32 %v2639, 1.0
      %v2642 = vadd.f32 %v2640, 1.0
      %v2643 = vmul.f32 %v2378, %v2641
      %v2644 = vmul.f32 %v2379, %v2642
      %v2645 = vsub.f32 2.0, %v2641
      %v2646 = vsub.f32 2.0, %v2642
      %v2647 = vmul.f32 %v1979, %v2645
      %v2648 = vmul.f32 %v1980, %v2646
      %v2649 = vadd.f32 %v2643, %v2647
      %v2650 = vadd.f32 %v2644, %v2648
      %2651 = vrot.lane.b32.xlu0 %v2649, 17
      %v2652 = vpop.permute.xlu0 %2651
      %2653 = vrot.lane.b32.xlu0 %v2650, 17
      %v2654 = vpop.permute.xlu0 %2653
      %v2655 = vsel %vm671, %v2652, %v2654
      %v2656 = vsel %vm671, %v2654, %v2652
      %v2657 = vmul.f32 %v2656, %v1992
      %v2658 = vmul.f32 %v2655, %v1996
      %2659 = vrot.lane.b32.xlu0 %v2649, 16
      %v2660 = vpop.permute.xlu0 %2659
      %2661 = vrot.lane.b32.xlu0 %v2650, 16
      %v2662 = vpop.permute.xlu0 %2661
      %v2663 = vsel %vm692, %v2660, %v2662
      %v2664 = vsel %vm692, %v2662, %v2660
      %v2665 = vmul.f32 %v2664, %v2012
      %v2666 = vmul.f32 %v2663, %v2016
      %2667 = vrot.lane.b32.xlu0 %v2649, 15
      %v2668 = vpop.permute.xlu0 %2667
      %2669 = vrot.lane.b32.xlu0 %v2650, 15
      %v2670 = vpop.permute.xlu0 %2669
      %v2671 = vsel %vm714, %v2668, %v2670
      %v2672 = vsel %vm714, %v2670, %v2668
      %v2673 = vmul.f32 %v2672, %v2032
      %v2674 = vmul.f32 %v2671, %v2036
      %v2675 = vld [vmem:[%s6] sm:$0xff]
      %2676 = vrot.lane.b32.xlu0 %v2649, 1
      %v2677 = vpop.permute.xlu0 %2676
      %2678 = vrot.lane.b32.xlu0 %v2650, 1
      %v2679 = vpop.permute.xlu0 %2678
      %v2680 = vsel %vm737, %v2677, %v2679
      %v2681 = vsel %vm737, %v2679, %v2677
      %v2682 = vmul.f32 %v2681, %v2053
      %v2683 = vmul.f32 %v2680, %v2057
      %2684 = vrot.lane.b32.xlu0 %v2649, 127
      %v2685 = vpop.permute.xlu0 %2684
      %2686 = vrot.lane.b32.xlu0 %v2650, 127
      %v2687 = vpop.permute.xlu0 %2686
      %v2688 = vsel %vm759, %v2685, %v2687
      %v2689 = vsel %vm759, %v2687, %v2685
      %v2690 = vmul.f32 %v2688, %v2073
      %v2691 = vmul.f32 %v2689, %v2077
      %v2692 = vld [vmem:[%s1398] sm:$0xff]
      %v2694 = vsel %vm779, %v2692, 0
      %2696 = vmatprep.subr.mxu0 %v2683
      %2697 = vmatpush1.msra.mxu0 %v2682
      %2698 = vmatprep.subr.mxu0 %v2650
      %2699 = vmatpush1.msra.mxu0 %v2649
      %2700 = vmatprep.subr.mxu0 %v2691
      %2701 = vmatpush1.msra.mxu0 %v2690
      %2702 = vmatprep.subr.mxu0 0.0
      %2703 = vmatpush1.msra.mxu0 0.0
      %2704 = vmatprep.subr.mxu0 0.0
      %2705 = vmatpush1.msra.mxu0 0.0
      %2706 = vmatprep.subr.mxu0 0.0
      %2707 = vmatpush1.msra.mxu0 0.0
      %2708 = vmatprep.subr.mxu0 0.0
      %2709 = vmatpush1.msra.mxu0 0.0
      %2710 = vmatprep.subr.mxu0 0.0
      %2711 = vmatpush1.msra.mxu0 0.0
      %2712 = vmatprep.subr.mxu0 0.0
      %2713 = vmatpush1.msra.mxu0 0.0
      %2714 = vmatprep.subr.mxu0 0.0
      %2715 = vmatpush1.msra.mxu0 0.0
      %2716 = vmatprep.subr.mxu0 0.0
      %2717 = vmatpush1.msra.mxu0 0.0
      %2718 = vmatprep.subr.mxu0 0.0
      %2719 = vmatpush1.msra.mxu0 0.0
      %2720 = vmatprep.subr.mxu0 0.0
      %2721 = vmatpush1.msra.mxu0 0.0
      %2722 = vmatprep.subr.mxu0 0.0
      %2723 = vmatpush1.msra.mxu0 0.0
      %2724 = vmatprep.subr.mxu0 0.0
      %2725 = vmatpush1.msra.mxu0 0.0
      %2726 = vmatprep.subr.mxu0 0.0
      %2727 = vmatpush1.msra.mxu0 0.0
      %2728 = vmatprep.subr.mxu0 0.0
      %2729 = vmatpush1.msra.mxu0 0.0
      %2730 = vmatprep.subr.mxu0 0.0
      %2731 = vmatpush1.msra.mxu0 0.0
      %2732 = vmatprep.subr.mxu0 0.0
      %2733 = vmatpush1.msra.mxu0 0.0
      %2734 = vmatprep.subr.mxu0 0.0
      %2735 = vmatpush1.msra.mxu0 0.0
      %2736 = vmatprep.subr.mxu0 0.0
      %2737 = vmatpush1.msra.mxu0 0.0
      %2738 = vmatprep.subr.mxu0 0.0
      %2739 = vmatpush1.msra.mxu0 0.0
      %2740 = vmatprep.subr.mxu0 0.0
      %2741 = vmatpush1.msra.mxu0 0.0
      %2742 = vmatprep.subr.mxu0 0.0
      %2743 = vmatpush1.msra.mxu0 0.0
      %2744 = vmatprep.subr.mxu0 0.0
      %2745 = vmatpush1.msra.mxu0 0.0
      %2746 = vmatprep.subr.mxu0 0.0
      %2747 = vmatpush1.msra.mxu0 0.0
      %2748 = vmatprep.subr.mxu0 0.0
      %2749 = vmatpush1.msra.mxu0 0.0
      %2750 = vmatprep.subr.mxu0 0.0
      %2751 = vmatpush1.msra.mxu0 0.0
      %2752 = vmatprep.subr.mxu0 0.0
      %2753 = vmatpush1.msra.mxu0 0.0
      %2754 = vmatprep.subr.mxu0 0.0
      %2755 = vmatpush1.msra.mxu0 0.0
      %2756 = vmatprep.subr.mxu0 0.0
      %2757 = vmatpush1.msra.mxu0 0.0
      %2758 = vmatprep.subr.mxu0 0.0
      %2759 = vmatpush1.msra.mxu0 0.0
      %2760 = vmatprep.mubr.f32.mxu0 0.0
      %2761 = vmatmul.mubr.f32.gmra.mrb[0].mxu0 %v2694
      %v2762 = vpop.f32.mrb[0].mxu0
      %v2763 = vadd.f32 0.0, %v2762
      %v2764 = vpop.f32.mrb[0].mxu0
      %v2765 = vadd.f32 0.0, %v2764
      %2766 = vdwg.mxu0
      %v2768 = vsel %vm779, %v2675, 0
      %2770 = vmatprep.subr.mxu0 %v2658
      %2771 = vmatpush1.msra.mxu0 %v2657
      %2772 = vmatprep.subr.mxu0 %v2666
      %2773 = vmatpush1.msra.mxu0 %v2665
      %2774 = vmatprep.subr.mxu0 %v2674
      %2775 = vmatpush1.msra.mxu0 %v2673
      %2776 = vmatprep.subr.mxu0 0.0
      %2777 = vmatpush1.msra.mxu0 0.0
      %2778 = vmatprep.subr.mxu0 0.0
      %2779 = vmatpush1.msra.mxu0 0.0
      %2780 = vmatprep.subr.mxu0 0.0
      %2781 = vmatpush1.msra.mxu0 0.0
      %2782 = vmatprep.subr.mxu0 0.0
      %2783 = vmatpush1.msra.mxu0 0.0
      %2784 = vmatprep.subr.mxu0 0.0
      %2785 = vmatpush1.msra.mxu0 0.0
      %2786 = vmatprep.subr.mxu0 0.0
      %2787 = vmatpush1.msra.mxu0 0.0
      %2788 = vmatprep.subr.mxu0 0.0
      %2789 = vmatpush1.msra.mxu0 0.0
      %2790 = vmatprep.subr.mxu0 0.0
      %2791 = vmatpush1.msra.mxu0 0.0
      %2792 = vmatprep.subr.mxu0 0.0
      %2793 = vmatpush1.msra.mxu0 0.0
      %2794 = vmatprep.subr.mxu0 0.0
      %2795 = vmatpush1.msra.mxu0 0.0
      %2796 = vmatprep.subr.mxu0 0.0
      %2797 = vmatpush1.msra.mxu0 0.0
      %2798 = vmatprep.subr.mxu0 0.0
      %2799 = vmatpush1.msra.mxu0 0.0
      %2800 = vmatprep.subr.mxu0 0.0
      %2801 = vmatpush1.msra.mxu0 0.0
      %2802 = vmatprep.subr.mxu0 0.0
      %2803 = vmatpush1.msra.mxu0 0.0
      %2804 = vmatprep.subr.mxu0 0.0
      %2805 = vmatpush1.msra.mxu0 0.0
      %2806 = vmatprep.subr.mxu0 0.0
      %2807 = vmatpush1.msra.mxu0 0.0
      %2808 = vmatprep.subr.mxu0 0.0
      %2809 = vmatpush1.msra.mxu0 0.0
      %2810 = vmatprep.subr.mxu0 0.0
      %2811 = vmatpush1.msra.mxu0 0.0
      %2812 = vmatprep.subr.mxu0 0.0
      %2813 = vmatpush1.msra.mxu0 0.0
      %2814 = vmatprep.subr.mxu0 0.0
      %2815 = vmatpush1.msra.mxu0 0.0
      %2816 = vmatprep.subr.mxu0 0.0
      %2817 = vmatpush1.msra.mxu0 0.0
      %2818 = vmatprep.subr.mxu0 0.0
      %2819 = vmatpush1.msra.mxu0 0.0
      %2820 = vmatprep.subr.mxu0 0.0
      %2821 = vmatpush1.msra.mxu0 0.0
      %2822 = vmatprep.subr.mxu0 0.0
      %2823 = vmatpush1.msra.mxu0 0.0
      %2824 = vmatprep.subr.mxu0 0.0
      %2825 = vmatpush1.msra.mxu0 0.0
      %2826 = vmatprep.subr.mxu0 0.0
      %2827 = vmatpush1.msra.mxu0 0.0
      %2828 = vmatprep.subr.mxu0 0.0
      %2829 = vmatpush1.msra.mxu0 0.0
      %2830 = vmatprep.subr.mxu0 0.0
      %2831 = vmatpush1.msra.mxu0 0.0
      %2832 = vmatprep.subr.mxu0 0.0
      %2833 = vmatpush1.msra.mxu0 0.0
      %2834 = vmatprep.mubr.f32.mxu0 0.0
      %2835 = vmatmul.mubr.f32.gmra.mrb[0].mxu0 %v2768
      %v2836 = vpop.f32.mrb[0].mxu0
      %v2837 = vadd.f32 %v2763, %v2836
      %v2838 = vpop.f32.mrb[0].mxu0
      %v2839 = vadd.f32 %v2765, %v2838
      %2840 = vdwg.mxu0
      %2841 = vrot.lane.b32.xlu0 %v2649, 113
      %v2842 = vpop.permute.xlu0 %2841
      %2843 = vrot.lane.b32.xlu0 %v2650, 113
      %v2844 = vpop.permute.xlu0 %2843
      %v2845 = vsel %vm932, %v2842, %v2844
      %v2846 = vsel %vm932, %v2844, %v2842
      %v2847 = vmul.f32 %v2845, %v2242
      %v2848 = vmul.f32 %v2846, %v2246
      %2849 = vrot.lane.b32.xlu0 %v2649, 112
      %v2850 = vpop.permute.xlu0 %2849
      %2851 = vrot.lane.b32.xlu0 %v2650, 112
      %v2852 = vpop.permute.xlu0 %2851
      %v2853 = vsel %vm954, %v2850, %v2852
      %v2854 = vsel %vm954, %v2852, %v2850
      %v2855 = vmul.f32 %v2853, %v2262
      %v2856 = vmul.f32 %v2854, %v2266
      %2857 = vrot.lane.b32.xlu0 %v2649, 111
      %v2858 = vpop.permute.xlu0 %2857
      %2859 = vrot.lane.b32.xlu0 %v2650, 111
      %v2860 = vpop.permute.xlu0 %2859
      %v2861 = vsel %vm976, %v2858, %v2860
      %v2862 = vsel %vm976, %v2860, %v2858
      %v2863 = vmul.f32 %v2861, %v2282
      %v2864 = vmul.f32 %v2862, %v2286
      %v2865 = vld [vmem:[%s1572] sm:$0xff]
      %v2867 = vsel %vm779, %v2865, 0
      %2869 = vmatprep.subr.mxu0 %v2848
      %2870 = vmatpush1.msra.mxu0 %v2847
      %2871 = vmatprep.subr.mxu0 %v2856
      %2872 = vmatpush1.msra.mxu0 %v2855
      %2873 = vmatprep.subr.mxu0 %v2864
      %2874 = vmatpush1.msra.mxu0 %v2863
      %2875 = vmatprep.subr.mxu0 0.0
      %2876 = vmatpush1.msra.mxu0 0.0
      %2877 = vmatprep.subr.mxu0 0.0
      %2878 = vmatpush1.msra.mxu0 0.0
      %2879 = vmatprep.subr.mxu0 0.0
      %2880 = vmatpush1.msra.mxu0 0.0
      %2881 = vmatprep.subr.mxu0 0.0
      %2882 = vmatpush1.msra.mxu0 0.0
      %2883 = vmatprep.subr.mxu0 0.0
      %2884 = vmatpush1.msra.mxu0 0.0
      %2885 = vmatprep.subr.mxu0 0.0
      %2886 = vmatpush1.msra.mxu0 0.0
      %2887 = vmatprep.subr.mxu0 0.0
      %2888 = vmatpush1.msra.mxu0 0.0
      %2889 = vmatprep.subr.mxu0 0.0
      %2890 = vmatpush1.msra.mxu0 0.0
      %2891 = vmatprep.subr.mxu0 0.0
      %2892 = vmatpush1.msra.mxu0 0.0
      %2893 = vmatprep.subr.mxu0 0.0
      %2894 = vmatpush1.msra.mxu0 0.0
      %2895 = vmatprep.subr.mxu0 0.0
      %2896 = vmatpush1.msra.mxu0 0.0
      %2897 = vmatprep.subr.mxu0 0.0
      %2898 = vmatpush1.msra.mxu0 0.0
      %2899 = vmatprep.subr.mxu0 0.0
      %2900 = vmatpush1.msra.mxu0 0.0
      %2901 = vmatprep.subr.mxu0 0.0
      %2902 = vmatpush1.msra.mxu0 0.0
      %2903 = vmatprep.subr.mxu0 0.0
      %2904 = vmatpush1.msra.mxu0 0.0
      %2905 = vmatprep.subr.mxu0 0.0
      %2906 = vmatpush1.msra.mxu0 0.0
      %2907 = vmatprep.subr.mxu0 0.0
      %2908 = vmatpush1.msra.mxu0 0.0
      %2909 = vmatprep.subr.mxu0 0.0
      %2910 = vmatpush1.msra.mxu0 0.0
      %2911 = vmatprep.subr.mxu0 0.0
      %2912 = vmatpush1.msra.mxu0 0.0
      %2913 = vmatprep.subr.mxu0 0.0
      %2914 = vmatpush1.msra.mxu0 0.0
      %2915 = vmatprep.subr.mxu0 0.0
      %2916 = vmatpush1.msra.mxu0 0.0
      %2917 = vmatprep.subr.mxu0 0.0
      %2918 = vmatpush1.msra.mxu0 0.0
      %2919 = vmatprep.subr.mxu0 0.0
      %2920 = vmatpush1.msra.mxu0 0.0
      %2921 = vmatprep.subr.mxu0 0.0
      %2922 = vmatpush1.msra.mxu0 0.0
      %2923 = vmatprep.subr.mxu0 0.0
      %2924 = vmatpush1.msra.mxu0 0.0
      %2925 = vmatprep.subr.mxu0 0.0
      %2926 = vmatpush1.msra.mxu0 0.0
      %2927 = vmatprep.subr.mxu0 0.0
      %2928 = vmatpush1.msra.mxu0 0.0
      %2929 = vmatprep.subr.mxu0 0.0
      %2930 = vmatpush1.msra.mxu0 0.0
      %2931 = vmatprep.subr.mxu0 0.0
      %2932 = vmatpush1.msra.mxu0 0.0
      %2933 = vmatprep.mubr.f32.mxu0 0.0
      %2934 = vmatmul.mubr.f32.gmra.mrb[0].mxu0 %v2867
      %v2935 = vpop.f32.mrb[0].mxu0
      %v2936 = vadd.f32 0.0, %v2935
      %v2937 = vpop.f32.mrb[0].mxu0
      %v2938 = vadd.f32 0.0, %v2937
      %2939 = vdwg.mxu0
      %v2940 = vadd.f32 %v2837, %v2936
      %v2941 = vadd.f32 %v2839, %v2938
      %v2942 = vld [vmem:[%s7] sm:$0xff]
      %2944 = vset.pattern.permute.xlu0 0
      %2945 = vperm.xlu0 %2944, %v2942
      %v2946 = vpop.permute.xlu0 %2945
      %v2948 = vadd.f32 %v2940, %v2946
      %v2949 = vadd.f32 %v2941, %v2946
      %v2950 = vmax.f32 %v2948, 0.0
      %v2951 = vmax.f32 %v2949, 0.0
      %v2952 = vmin.f32 %v2950, 20.0
      %v2953 = vmin.f32 %v2951, 20.0
      %v2954 = vld [vmem:[%s13] sm:$0xff]
      %v2955 = vld [vmem:[%s13 + $0x8] sm:$0xff]
      %v2956 = vld [vmem:[%s14] sm:$0xff]
      %v2957 = vld [vmem:[%s14 + $0x8] sm:$0xff]
      %2959 = vset.pattern.permute.xlu0 0
      %2960 = vperm.xlu0 %2959, %v2956
      %v2961 = vpop.permute.xlu0 %2960
      %2964 = vset.pattern.permute.xlu0 0
      %2965 = vperm.xlu0 %2964, %v2957
      %v2966 = vpop.permute.xlu0 %2965
      %v2969 = vsel %vm1676, %v2954, 0
      %v2972 = vsel %vm1676, %v2955, 0
      %2974 = vmatprep.subr.mxu0 %v2379
      %2975 = vmatpush1.msra.mxu0 %v2378
      %2976 = vmatprep.subr.mxu0 %v2953
      %2977 = vmatpush1.msra.mxu0 %v2952
      %2978 = vmatprep.subr.mxu0 0.0
      %2979 = vmatpush1.msra.mxu0 0.0
      %2980 = vmatprep.subr.mxu0 0.0
      %2981 = vmatpush1.msra.mxu0 0.0
      %2982 = vmatprep.subr.mxu0 0.0
      %2983 = vmatpush1.msra.mxu0 0.0
      %2984 = vmatprep.subr.mxu0 0.0
      %2985 = vmatpush1.msra.mxu0 0.0
      %2986 = vmatprep.subr.mxu0 0.0
      %2987 = vmatpush1.msra.mxu0 0.0
      %2988 = vmatprep.subr.mxu0 0.0
      %2989 = vmatpush1.msra.mxu0 0.0
      %2990 = vmatprep.subr.mxu0 0.0
      %2991 = vmatpush1.msra.mxu0 0.0
      %2992 = vmatprep.subr.mxu0 0.0
      %2993 = vmatpush1.msra.mxu0 0.0
      %2994 = vmatprep.subr.mxu0 0.0
      %2995 = vmatpush1.msra.mxu0 0.0
      %2996 = vmatprep.subr.mxu0 0.0
      %2997 = vmatpush1.msra.mxu0 0.0
      %2998 = vmatprep.subr.mxu0 0.0
      %2999 = vmatpush1.msra.mxu0 0.0
      %3000 = vmatprep.subr.mxu0 0.0
      %3001 = vmatpush1.msra.mxu0 0.0
      %3002 = vmatprep.subr.mxu0 0.0
      %3003 = vmatpush1.msra.mxu0 0.0
      %3004 = vmatprep.subr.mxu0 0.0
      %3005 = vmatpush1.msra.mxu0 0.0
      %3006 = vmatprep.subr.mxu0 0.0
      %3007 = vmatpush1.msra.mxu0 0.0
      %3008 = vmatprep.subr.mxu0 0.0
      %3009 = vmatpush1.msra.mxu0 0.0
      %3010 = vmatprep.subr.mxu0 0.0
      %3011 = vmatpush1.msra.mxu0 0.0
      %3012 = vmatprep.subr.mxu0 0.0
      %3013 = vmatpush1.msra.mxu0 0.0
      %3014 = vmatprep.subr.mxu0 0.0
      %3015 = vmatpush1.msra.mxu0 0.0
      %3016 = vmatprep.subr.mxu0 0.0
      %3017 = vmatpush1.msra.mxu0 0.0
      %3018 = vmatprep.subr.mxu0 0.0
      %3019 = vmatpush1.msra.mxu0 0.0
      %3020 = vmatprep.subr.mxu0 0.0
      %3021 = vmatpush1.msra.mxu0 0.0
      %3022 = vmatprep.subr.mxu0 0.0
      %3023 = vmatpush1.msra.mxu0 0.0
      %3024 = vmatprep.subr.mxu0 0.0
      %3025 = vmatpush1.msra.mxu0 0.0
      %3026 = vmatprep.subr.mxu0 0.0
      %3027 = vmatpush1.msra.mxu0 0.0
      %3028 = vmatprep.subr.mxu0 0.0
      %3029 = vmatpush1.msra.mxu0 0.0
      %3030 = vmatprep.subr.mxu0 0.0
      %3031 = vmatpush1.msra.mxu0 0.0
      %3032 = vmatprep.subr.mxu0 0.0
      %3033 = vmatpush1.msra.mxu0 0.0
      %3034 = vmatprep.subr.mxu0 0.0
      %3035 = vmatpush1.msra.mxu0 0.0
      %3036 = vmatprep.subr.mxu0 0.0
      %3037 = vmatpush1.msra.mxu0 0.0
      %3038 = vmatprep.mubr.f32.mxu0 0.0
      %3039 = vmatmul.mubr.f32.gmra.mrb[0].mxu0 %v2969
      %v3040 = vpop.f32.mrb[0].mxu0
      %v3041 = vadd.f32 %v2961, %v3040
      %v3042 = vpop.f32.mrb[0].mxu0
      %v3043 = vadd.f32 %v2961, %v3042
      %3044 = vmatprep.mubr.f32.mxu0 0.0
      %3045 = vmatmul.mubr.f32.gmra.mrb[0].mxu0 %v2972
      %v3046 = vpop.f32.mrb[0].mxu0
      %v3047 = vadd.f32 %v2966, %v3046
      %v3048 = vpop.f32.mrb[0].mxu0
      %v3049 = vadd.f32 %v2966, %v3048
      %3050 = vdwg.mxu0
      %v3051 = vld [vmem:[%s15] sm:$0xff]
      %v3052 = vld [vmem:[%s15 + $0x8] sm:$0xff]
      %v3053 = vld [vmem:[%s16] sm:$0xff]
      %v3054 = vld [vmem:[%s16 + $0x8] sm:$0xff]
      %3056 = vset.pattern.permute.xlu0 0
      %3057 = vperm.xlu0 %3056, %v3053
      %v3058 = vpop.permute.xlu0 %3057
      %3061 = vset.pattern.permute.xlu0 0
      %3062 = vperm.xlu0 %3061, %v3054
      %v3063 = vpop.permute.xlu0 %3062
      %v3066 = vsel %vm573, %v3051, 0
      %v3069 = vsel %vm573, %v3052, 0
      %3071 = vmatprep.subr.mxu0 %v1875
      %3072 = vmatpush1.msra.mxu0 %v1874
      %3073 = vmatprep.subr.mxu0 0.0
      %3074 = vmatpush1.msra.mxu0 0.0
      %3075 = vmatprep.subr.mxu0 0.0
      %3076 = vmatpush1.msra.mxu0 0.0
      %3077 = vmatprep.subr.mxu0 0.0
      %3078 = vmatpush1.msra.mxu0 0.0
      %3079 = vmatprep.subr.mxu0 0.0
      %3080 = vmatpush1.msra.mxu0 0.0
      %3081 = vmatprep.subr.mxu0 0.0
      %3082 = vmatpush1.msra.mxu0 0.0
      %3083 = vmatprep.subr.mxu0 0.0
      %3084 = vmatpush1.msra.mxu0 0.0
      %3085 = vmatprep.subr.mxu0 0.0
      %3086 = vmatpush1.msra.mxu0 0.0
      %3087 = vmatprep.subr.mxu0 0.0
      %3088 = vmatpush1.msra.mxu0 0.0
      %3089 = vmatprep.subr.mxu0 0.0
      %3090 = vmatpush1.msra.mxu0 0.0
      %3091 = vmatprep.subr.mxu0 0.0
      %3092 = vmatpush1.msra.mxu0 0.0
      %3093 = vmatprep.subr.mxu0 0.0
      %3094 = vmatpush1.msra.mxu0 0.0
      %3095 = vmatprep.subr.mxu0 0.0
      %3096 = vmatpush1.msra.mxu0 0.0
      %3097 = vmatprep.subr.mxu0 0.0
      %3098 = vmatpush1.msra.mxu0 0.0
      %3099 = vmatprep.subr.mxu0 0.0
      %3100 = vmatpush1.msra.mxu0 0.0
      %3101 = vmatprep.subr.mxu0 0.0
      %3102 = vmatpush1.msra.mxu0 0.0
      %3103 = vmatprep.subr.mxu0 0.0
      %3104 = vmatpush1.msra.mxu0 0.0
      %3105 = vmatprep.subr.mxu0 0.0
      %3106 = vmatpush1.msra.mxu0 0.0
      %3107 = vmatprep.subr.mxu0 0.0
      %3108 = vmatpush1.msra.mxu0 0.0
      %3109 = vmatprep.subr.mxu0 0.0
      %3110 = vmatpush1.msra.mxu0 0.0
      %3111 = vmatprep.subr.mxu0 0.0
      %3112 = vmatpush1.msra.mxu0 0.0
      %3113 = vmatprep.subr.mxu0 0.0
      %3114 = vmatpush1.msra.mxu0 0.0
      %3115 = vmatprep.subr.mxu0 0.0
      %3116 = vmatpush1.msra.mxu0 0.0
      %3117 = vmatprep.subr.mxu0 0.0
      %3118 = vmatpush1.msra.mxu0 0.0
      %3119 = vmatprep.subr.mxu0 0.0
      %3120 = vmatpush1.msra.mxu0 0.0
      %3121 = vmatprep.subr.mxu0 0.0
      %3122 = vmatpush1.msra.mxu0 0.0
      %3123 = vmatprep.subr.mxu0 0.0
      %3124 = vmatpush1.msra.mxu0 0.0
      %3125 = vmatprep.subr.mxu0 0.0
      %3126 = vmatpush1.msra.mxu0 0.0
      %3127 = vmatprep.subr.mxu0 0.0
      %3128 = vmatpush1.msra.mxu0 0.0
      %3129 = vmatprep.subr.mxu0 0.0
      %3130 = vmatpush1.msra.mxu0 0.0
      %3131 = vmatprep.subr.mxu0 0.0
      %3132 = vmatpush1.msra.mxu0 0.0
      %3133 = vmatprep.subr.mxu0 0.0
      %3134 = vmatpush1.msra.mxu0 0.0
      %3135 = vmatprep.mubr.f32.mxu0 0.0
      %3136 = vmatmul.mubr.f32.gmra.mrb[0].mxu0 %v3066
      %v3137 = vpop.f32.mrb[0].mxu0
      %v3138 = vadd.f32 %v3058, %v3137
      %v3139 = vpop.f32.mrb[0].mxu0
      %v3140 = vadd.f32 %v3058, %v3139
      %3141 = vmatprep.mubr.f32.mxu0 0.0
      %3142 = vmatmul.mubr.f32.gmra.mrb[0].mxu0 %v3069
      %v3143 = vpop.f32.mrb[0].mxu0
      %v3144 = vadd.f32 %v3063, %v3143
      %v3145 = vpop.f32.mrb[0].mxu0
      %v3146 = vadd.f32 %v3063, %v3145
      %3147 = vdwg.mxu0
      %v3148 = vadd.f32 %v3041, %v3138
      %v3149 = vadd.f32 %v3043, %v3140
      %v3150 = vadd.f32 %v3047, %v3144
      %v3151 = vadd.f32 %v3049, %v3146
      %v3152 = vmax.f32 %v3148, 0.0
      %v3153 = vmax.f32 %v3149, 0.0
      %v3154 = vmax.f32 %v3150, 0.0
      %v3155 = vmax.f32 %v3151, 0.0
      %v3156 = vmin.f32 %v3152, 20.0
      %v3157 = vmin.f32 %v3153, 20.0
      %v3158 = vmin.f32 %v3154, 20.0
      %v3159 = vmin.f32 %v3155, 20.0
      %s3160 = scalar_lea.vmem %s555, 32
      %3161 = vst [vmem:[%s3160] sm:$0xff] %v3156
      %3162 = vst [vmem:[%s3160 + $0x8] sm:$0xff] %v3157
      %3163 = vst [vmem:[%s3160 + $0x10] sm:$0xff] %v3158
      %3164 = vst [vmem:[%s3160 + $0x18] sm:$0xff] %v3159
      %s3165 = smul.u32 2, %s28
      %p3166 = scmp.lt.s32.totalorder %s3165, 3
      %s3167 = scalar_select %p3166, %s3165, 3
      %s3168 = smul.addr %s3167, 4
      %s3169 = smul.addr %s3168, 8
      %s3170 = scalar_lea.vmem %s17, %s3169
      // Predicated region
      $region89: #{eres2net_block_forward.1} parent=87 // pred_check
        %p3171 = pneg %p408
      $region90: #{eres2net_block_forward.1} parent=87 // pred_check_branch
        %3173 = sbr.rel (%p3171) target = $region92
      $region91: #{eres2net_block_forward.1} parent=87 // pred_region
        %s3174 = smul.u32 2, %s28
      $region92: #{eres2net_block_forward.1} parent=87 // pred_fallthru
        _
    $region88: #{eres2net_block_forward.1} parent=5 // pred_fallthru
      _
    %p3175 = scmp.le.s32.totalorder 2, %s23
    // Predicated region
    $region93: #{eres2net_block_forward.1} parent=5 // pred_check
      %p3176 = pneg %p3175
    $region94: #{eres2net_block_forward.1} parent=5 // pred_check_branch
      %3178 = sbr.rel (%p3176) target = $region96
    $region95: #{eres2net_block_forward.1} parent=5 // pred_region
      %s3179 = ssub.s32 %s23, 2
      // Predicated region
      $region97: #{eres2net_block_forward.1} parent=95 // pred_check
        %p3180 = pneg %p414
      $region98: #{eres2net_block_forward.1} parent=95 // pred_check_branch
        %3182 = sbr.rel (%p3180) target = $region100
      $region99: #{eres2net_block_forward.1} parent=95 // pred_region
        %s3183 = smul.u32 2, %s29
        %p3184 = scmp.lt.s32.totalorder %s3183, 3
        %s3185 = scalar_select %p3184, %s3183, 3
        %s3186 = smul.addr %s3185, 4
        %s3187 = smul.addr %s3186, 8
        %s3188 = scalar_lea.vmem %s17, %s3187
      $region100: #{eres2net_block_forward.1} parent=95 // pred_fallthru
        _
    $region96: #{eres2net_block_forward.1} parent=5 // pred_fallthru
      _
  $region6: #{eres2net_block_forward.1} parent=0 // loop_footer
    %s27 = sadd.s32 1, %s23
  $region7: #{eres2net_block_forward.1} parent=0 // loop_footer_branch
    %22 = sbr.rel target = $region3
  $region8: #{eres2net_block_forward.1} parent=0 // loop_exit
    _

</llo_original>
